<compile_context>
chip_gen: v7x
topology: tpu7x:2x2x1
jax: 0.10.0
libtpu: 0.0.40
codegen_flags: <defaults>
</compile_context>

<pallas_src>
import jax
import jax.numpy as jnp
import numpy as np
from jax.experimental import pallas as pl
from jax.experimental.pallas import tpu as pltpu

HIDDEN = 32      # hidden_size
SEQ_LEN = 8      # small sequence length for the demo
IN_DIM = 2       # LSTM input size (fixed by the module)
FC_DIM = 128
OUT_DIM = 4
OUT_PAD = 128    # lane-dense padded output width


def _softplus(x):
    # matches torch.nn.Softplus(beta=1, threshold=20)
    return jnp.where(x > 20.0, x, jnp.log1p(jnp.exp(jnp.minimum(x, 20.0))))


def model3_kernel(x_ref,
                  wih0_ref, whh0_ref, b0_ref,
                  wih1_ref, whh1_ref, b1_ref,
                  w1_ref, bf1_ref, w2_ref, bf2_ref, w3_ref, bf3_ref,
                  out_ref):
    H = whh0_ref.shape[0]
    L = x_ref.shape[0]

    whh0 = whh0_ref[...]          # (H, 4H)   g-block columns pre-scaled x2
    wih1 = wih1_ref[...]          # (H, 4H)   g-block columns pre-scaled x2
    whh1 = whh1_ref[...]          # (H, 4H)   g-block columns pre-scaled x2
    b1 = b1_ref[...]              # (1, 4H)

    # ---- hoisted layer-0 input projection: one (L, IN_DIM) @ (IN_DIM, 4H) ----
    pre0 = (jnp.dot(x_ref[...], wih0_ref[...],
                    preferred_element_type=jnp.float32)
            + b0_ref[...])        # (L, 4H), b0 broadcasts over rows

    def cell_from_gates(gates, c):
        # PyTorch gate order [i, f, g, o].  The g-block of `gates` is already
        # scaled by 2 (folded into the weights), so ONE full-vreg sigmoid gives
        # i/f/o directly and tanh(g_raw) = 2*sigmoid(2*g_raw) - 1 recovers g.
        s = jax.nn.sigmoid(gates)
        i = s[:, 0:H]
        f = s[:, H:2 * H]
        g = 2.0 * s[:, 2 * H:3 * H] - 1.0
        o = s[:, 3 * H:4 * H]
        c_new = f * c + i * g
        h_new = o * jnp.tanh(c_new)
        return h_new, c_new

    z0 = jnp.zeros((1, H), jnp.float32)
    h0, c0, h1, c1 = z0, z0, z0, z0

    # Fully-unrolled recurrence (L static & small).  Layer-1's recurrent half
    # (rec1) depends only on previous-step state -> off the fresh-h0 chain.
    for t in range(L):
        # layer 1 recurrent part: independent of this step's layer-0 output
        rec1 = jnp.dot(h1, whh1, preferred_element_type=jnp.float32) + b1
        # layer 0: only the recurrent matmul remains on the critical path
        gates0 = pre0[t:t + 1, :] + jnp.dot(h0, whh0,
                                            preferred_element_type=jnp.float32)
        h0, c0 = cell_from_gates(gates0, c0)
        # layer 1: single (1, H) @ (H, 4H) dot gated on the fresh h0, no concat
        gates1 = rec1 + jnp.dot(h0, wih1, preferred_element_type=jnp.float32)
        h1, c1 = cell_from_gates(gates1, c1)

    # out = out[[-1], :]  -> h1 (last time step of top layer), shape (1, H)
    # fc head (Dropout(0.2) is identity in eval mode)
    z = _softplus(jnp.dot(h1, w1_ref[...],
                          preferred_element_type=jnp.float32) + bf1_ref[...])
    z = _softplus(jnp.dot(z, w2_ref[...],
                          preferred_element_type=jnp.float32) + bf2_ref[...])
    # w3/bf3 zero-padded to 128 lanes -> unmasked, lane-dense final store
    out_ref[...] = jnp.dot(z, w3_ref[...],
                           preferred_element_type=jnp.float32) + bf3_ref[...]


def prepare_weights(params):
    """One-time weight prep (call once, reuse for every forward):
    - fold the tanh->sigmoid rescale (x2 on the g-block columns) into every
      LSTM gate weight/bias,
    - zero-pad the final linear to 128 output lanes for a lane-dense store."""
    H = HIDDEN
    gscale = jnp.ones((4 * H,), jnp.float32).at[2 * H:3 * H].set(2.0)
    w3p = jnp.zeros((FC_DIM, OUT_PAD), jnp.float32).at[:, :OUT_DIM].set(params['w3'])
    bf3p = jnp.zeros((1, OUT_PAD), jnp.float32).at[:, :OUT_DIM].set(params['bf3'])
    return (params['wih0'] * gscale, params['whh0'] * gscale, params['b0'] * gscale,
            params['wih1'] * gscale, params['whh1'] * gscale, params['b1'] * gscale,
            params['w1'], params['bf1'], params['w2'], params['bf2'], w3p, bf3p)


def model3_forward(X, prepped):
    args = (X,) + tuple(prepped)
    in_specs = [pl.BlockSpec(memory_space=pltpu.MemorySpace.VMEM) for _ in args]
    out = pl.pallas_call(
        model3_kernel,
        out_shape=jax.ShapeDtypeStruct((1, OUT_PAD), jnp.float32),
        in_specs=in_specs,
        out_specs=pl.BlockSpec(memory_space=pltpu.MemorySpace.VMEM),
    )(*args)
    return out[:, :OUT_DIM]


def model3_ref(X, params):
    """Pure-JAX reference (mirrors PyTorch LSTM + fc semantics)."""
    H = HIDDEN

    def cell(x_t, h, c, wih, whh, b):
        gates = x_t @ wih + h @ whh + b
        i = jax.nn.sigmoid(gates[:, 0:H])
        f = jax.nn.sigmoid(gates[:, H:2 * H])
        g = jnp.tanh(gates[:, 2 * H:3 * H])
        o = jax.nn.sigmoid(gates[:, 3 * H:4 * H])
        c = f * c + i * g
        h = o * jnp.tanh(c)
        return h, c

    h0 = c0 = h1 = c1 = jnp.zeros((1, H), jnp.float32)
    for t in range(X.shape[0]):
        x_t = X[t:t + 1]
        h0, c0 = cell(x_t, h0, c0, params['wih0'], params['whh0'], params['b0'])
        h1, c1 = cell(h0, h1, c1, params['wih1'], params['whh1'], params['b1'])
    z = _softplus(h1 @ params['w1'] + params['bf1'])
    z = _softplus(z @ params['w2'] + params['bf2'])
    return z @ params['w3'] + params['bf3']


def init_params(key):
    """Deterministic parameter init (uniform(-k, k), k = 1/sqrt(H), like PyTorch)."""
    H = HIDDEN
    k = 1.0 / np.sqrt(H)
    keys = jax.random.split(key, 12)

    def u(kk, shape, scale):
        return jax.random.uniform(kk, shape, jnp.float32, -scale, scale)

    params = {
        # LSTM layer 0 (weights stored pre-transposed: (in, 4H))
        'wih0': u(keys[0], (IN_DIM, 4 * H), k),
        'whh0': u(keys[1], (H, 4 * H), k),
        'b0':   u(keys[2], (1, 4 * H), k),          # b_ih + b_hh fused
        # LSTM layer 1
        'wih1': u(keys[3], (H, 4 * H), k),
        'whh1': u(keys[4], (H, 4 * H), k),
        'b1':   u(keys[5], (1, 4 * H), k),
        # fc head (pre-transposed)
        'w1':  u(keys[6], (H, FC_DIM), 1.0 / np.sqrt(H)),
        'bf1': u(keys[7], (1, FC_DIM), 1.0 / np.sqrt(H)),
        'w2':  u(keys[8], (FC_DIM, FC_DIM), 1.0 / np.sqrt(FC_DIM)),
        'bf2': u(keys[9], (1, FC_DIM), 1.0 / np.sqrt(FC_DIM)),
        'w3':  u(keys[10], (FC_DIM, OUT_DIM), 1.0 / np.sqrt(FC_DIM)),
        'bf3': u(keys[11], (1, OUT_DIM), 1.0 / np.sqrt(FC_DIM)),
    }
    return params


if __name__ == "__main__":
    key = jax.random.PRNGKey(0)
    k_param, k_x = jax.random.split(key)
    params = init_params(k_param)

    # X: unbatched sequence of length SEQ_LEN with 2 features (as forward implies)
    X = jax.random.normal(k_x, (SEQ_LEN, IN_DIM), jnp.float32)

    prepped = prepare_weights(params)          # one-time weight prep
    abcd = model3_forward(X, prepped)
    jax.block_until_ready(abcd)

    abcd_ref = model3_ref(X, params)
    np.testing.assert_allclose(np.asarray(abcd), np.asarray(abcd_ref),
                               rtol=1e-3, atol=2e-3)

    print("KERNEL_OK")
</pallas_src>

<mosaic_0001>
module attributes {stable_mosaic.version = 11 : i64} {
  func.func @model3_kernel(%arg0: memref<8x2xf32, #tpu.memory_space<vmem>>, %arg1: memref<2x128xf32, #tpu.memory_space<vmem>>, %arg2: memref<32x128xf32, #tpu.memory_space<vmem>>, %arg3: memref<1x128xf32, #tpu.memory_space<vmem>>, %arg4: memref<32x128xf32, #tpu.memory_space<vmem>>, %arg5: memref<32x128xf32, #tpu.memory_space<vmem>>, %arg6: memref<1x128xf32, #tpu.memory_space<vmem>>, %arg7: memref<32x128xf32, #tpu.memory_space<vmem>>, %arg8: memref<1x128xf32, #tpu.memory_space<vmem>>, %arg9: memref<128x128xf32, #tpu.memory_space<vmem>>, %arg10: memref<1x128xf32, #tpu.memory_space<vmem>>, %arg11: memref<128x128xf32, #tpu.memory_space<vmem>>, %arg12: memref<1x128xf32, #tpu.memory_space<vmem>>, %arg13: memref<1x128xf32, #tpu.memory_space<vmem>>) attributes {dimension_semantics = [], scalar_prefetch = 0 : i64, scratch_operands = 0 : i64, tpu.core_type = #tpu.core_type<tc>} {
    %c0 = arith.constant 0 : index
    %c0_0 = arith.constant 0 : index
    %0 = vector.load %arg2[%c0, %c0_0] : memref<32x128xf32, #tpu.memory_space<vmem>>, vector<32x128xf32>
    %c0_1 = arith.constant 0 : index
    %c0_2 = arith.constant 0 : index
    %1 = vector.load %arg4[%c0_1, %c0_2] : memref<32x128xf32, #tpu.memory_space<vmem>>, vector<32x128xf32>
    %c0_3 = arith.constant 0 : index
    %c0_4 = arith.constant 0 : index
    %2 = vector.load %arg5[%c0_3, %c0_4] : memref<32x128xf32, #tpu.memory_space<vmem>>, vector<32x128xf32>
    %c0_5 = arith.constant 0 : index
    %c0_6 = arith.constant 0 : index
    %3 = vector.load %arg6[%c0_5, %c0_6] : memref<1x128xf32, #tpu.memory_space<vmem>>, vector<1x128xf32>
    %c0_7 = arith.constant 0 : index
    %c0_8 = arith.constant 0 : index
    %4 = vector.load %arg0[%c0_7, %c0_8] : memref<8x2xf32, #tpu.memory_space<vmem>>, vector<8x2xf32>
    %c0_9 = arith.constant 0 : index
    %c0_10 = arith.constant 0 : index
    %5 = vector.load %arg1[%c0_9, %c0_10] : memref<2x128xf32, #tpu.memory_space<vmem>>, vector<2x128xf32>
    %cst = arith.constant dense<0.000000e+00> : vector<8x128xf32>
    %6 = tpu.matmul %4, %5, %cst {dimension_numbers = #tpu.dot_dimension_numbers<[1], [0], [0], [1], [0, 0, 1, 1], [], []>} : vector<8x2xf32>, vector<2x128xf32>, vector<8x128xf32> -> vector<8x128xf32>
    %c0_11 = arith.constant 0 : index
    %c0_12 = arith.constant 0 : index
    %7 = vector.load %arg3[%c0_11, %c0_12] : memref<1x128xf32, #tpu.memory_space<vmem>>, vector<1x128xf32>
    %8 = vector.broadcast %7 : vector<1x128xf32> to vector<8x128xf32>
    %9 = arith.addf %6, %8 : vector<8x128xf32>
    %cst_13 = arith.constant 0.000000e+00 : f32
    %10 = vector.broadcast %cst_13 : f32 to vector<1x32xf32>
    %cst_14 = arith.constant dense<0.000000e+00> : vector<1x128xf32>
    %11 = tpu.matmul %10, %2, %cst_14 {dimension_numbers = #tpu.dot_dimension_numbers<[1], [0], [0], [1], [0, 0, 1, 1], [], []>} : vector<1x32xf32>, vector<32x128xf32>, vector<1x128xf32> -> vector<1x128xf32>
    %12 = arith.addf %11, %3 : vector<1x128xf32>
    %13 = vector.extract_strided_slice %9 {offsets = [0, 0], sizes = [1, 128], strides = [1, 1]} : vector<8x128xf32> to vector<1x128xf32>
    %cst_15 = arith.constant dense<0.000000e+00> : vector<1x128xf32>
    %14 = tpu.matmul %10, %0, %cst_15 {dimension_numbers = #tpu.dot_dimension_numbers<[1], [0], [0], [1], [0, 0, 1, 1], [], []>} : vector<1x32xf32>, vector<32x128xf32>, vector<1x128xf32> -> vector<1x128xf32>
    %15 = arith.addf %13, %14 : vector<1x128xf32>
    %16 = arith.negf %15 : vector<1x128xf32>
    %17 = math.exp %16 : vector<1x128xf32>
    %cst_16 = arith.constant 1.000000e+00 : f32
    %18 = vector.broadcast %cst_16 : f32 to vector<1x128xf32>
    %19 = arith.addf %18, %17 : vector<1x128xf32>
    %20 = arith.divf %18, %19 : vector<1x128xf32>
    %21 = vector.extract_strided_slice %20 {offsets = [0, 0], sizes = [1, 32], strides = [1, 1]} : vector<1x128xf32> to vector<1x32xf32>
    %22 = vector.extract_strided_slice %20 {offsets = [0, 32], sizes = [1, 32], strides = [1, 1]} : vector<1x128xf32> to vector<1x32xf32>
    %23 = vector.extract_strided_slice %20 {offsets = [0, 64], sizes = [1, 32], strides = [1, 1]} : vector<1x128xf32> to vector<1x32xf32>
    %cst_17 = arith.constant 2.000000e+00 : f32
    %24 = vector.broadcast %cst_17 : f32 to vector<1x32xf32>
    %25 = arith.mulf %24, %23 : vector<1x32xf32>
    %cst_18 = arith.constant 1.000000e+00 : f32
    %26 = vector.broadcast %cst_18 : f32 to vector<1x32xf32>
    %27 = arith.subf %25, %26 : vector<1x32xf32>
    %28 = vector.extract_strided_slice %20 {offsets = [0, 96], sizes = [1, 32], strides = [1, 1]} : vector<1x128xf32> to vector<1x32xf32>
    %29 = arith.mulf %22, %10 : vector<1x32xf32>
    %30 = arith.mulf %21, %27 : vector<1x32xf32>
    %31 = arith.addf %29, %30 : vector<1x32xf32>
    %32 = math.tanh %31 : vector<1x32xf32>
    %33 = arith.mulf %28, %32 : vector<1x32xf32>
    %cst_19 = arith.constant dense<0.000000e+00> : vector<1x128xf32>
    %34 = tpu.matmul %33, %1, %cst_19 {dimension_numbers = #tpu.dot_dimension_numbers<[1], [0], [0], [1], [0, 0, 1, 1], [], []>} : vector<1x32xf32>, vector<32x128xf32>, vector<1x128xf32> -> vector<1x128xf32>
    %35 = arith.addf %12, %34 : vector<1x128xf32>
    %36 = arith.negf %35 : vector<1x128xf32>
    %37 = math.exp %36 : vector<1x128xf32>
    %cst_20 = arith.constant 1.000000e+00 : f32
    %38 = vector.broadcast %cst_20 : f32 to vector<1x128xf32>
    %39 = arith.addf %38, %37 : vector<1x128xf32>
    %40 = arith.divf %38, %39 : vector<1x128xf32>
    %41 = vector.extract_strided_slice %40 {offsets = [0, 0], sizes = [1, 32], strides = [1, 1]} : vector<1x128xf32> to vector<1x32xf32>
    %42 = vector.extract_strided_slice %40 {offsets = [0, 32], sizes = [1, 32], strides = [1, 1]} : vector<1x128xf32> to vector<1x32xf32>
    %43 = vector.extract_strided_slice %40 {offsets = [0, 64], sizes = [1, 32], strides = [1, 1]} : vector<1x128xf32> to vector<1x32xf32>
    %cst_21 = arith.constant 2.000000e+00 : f32
    %44 = vector.broadcast %cst_21 : f32 to vector<1x32xf32>
    %45 = arith.mulf %44, %43 : vector<1x32xf32>
    %cst_22 = arith.constant 1.000000e+00 : f32
    %46 = vector.broadcast %cst_22 : f32 to vector<1x32xf32>
    %47 = arith.subf %45, %46 : vector<1x32xf32>
    %48 = vector.extract_strided_slice %40 {offsets = [0, 96], sizes = [1, 32], strides = [1, 1]} : vector<1x128xf32> to vector<1x32xf32>
    %49 = arith.mulf %42, %10 : vector<1x32xf32>
    %50 = arith.mulf %41, %47 : vector<1x32xf32>
    %51 = arith.addf %49, %50 : vector<1x32xf32>
    %52 = math.tanh %51 : vector<1x32xf32>
    %53 = arith.mulf %48, %52 : vector<1x32xf32>
    %cst_23 = arith.constant dense<0.000000e+00> : vector<1x128xf32>
    %54 = tpu.matmul %53, %2, %cst_23 {dimension_numbers = #tpu.dot_dimension_numbers<[1], [0], [0], [1], [0, 0, 1, 1], [], []>} : vector<1x32xf32>, vector<32x128xf32>, vector<1x128xf32> -> vector<1x128xf32>
    %55 = arith.addf %54, %3 : vector<1x128xf32>
    %56 = vector.extract_strided_slice %9 {offsets = [1, 0], sizes = [1, 128], strides = [1, 1]} : vector<8x128xf32> to vector<1x128xf32>
    %cst_24 = arith.constant dense<0.000000e+00> : vector<1x128xf32>
    %57 = tpu.matmul %33, %0, %cst_24 {dimension_numbers = #tpu.dot_dimension_numbers<[1], [0], [0], [1], [0, 0, 1, 1], [], []>} : vector<1x32xf32>, vector<32x128xf32>, vector<1x128xf32> -> vector<1x128xf32>
    %58 = arith.addf %56, %57 : vector<1x128xf32>
    %59 = arith.negf %58 : vector<1x128xf32>
    %60 = math.exp %59 : vector<1x128xf32>
    %cst_25 = arith.constant 1.000000e+00 : f32
    %61 = vector.broadcast %cst_25 : f32 to vector<1x128xf32>
    %62 = arith.addf %61, %60 : vector<1x128xf32>
    %63 = arith.divf %61, %62 : vector<1x128xf32>
    %64 = vector.extract_strided_slice %63 {offsets = [0, 0], sizes = [1, 32], strides = [1, 1]} : vector<1x128xf32> to vector<1x32xf32>
    %65 = vector.extract_strided_slice %63 {offsets = [0, 32], sizes = [1, 32], strides = [1, 1]} : vector<1x128xf32> to vector<1x32xf32>
    %66 = vector.extract_strided_slice %63 {offsets = [0, 64], sizes = [1, 32], strides = [1, 1]} : vector<1x128xf32> to vector<1x32xf32>
    %cst_26 = arith.constant 2.000000e+00 : f32
    %67 = vector.broadcast %cst_26 : f32 to vector<1x32xf32>
    %68 = arith.mulf %67, %66 : vector<1x32xf32>
    %cst_27 = arith.constant 1.000000e+00 : f32
    %69 = vector.broadcast %cst_27 : f32 to vector<1x32xf32>
    %70 = arith.subf %68, %69 : vector<1x32xf32>
    %71 = vector.extract_strided_slice %63 {offsets = [0, 96], sizes = [1, 32], strides = [1, 1]} : vector<1x128xf32> to vector<1x32xf32>
    %72 = arith.mulf %65, %31 : vector<1x32xf32>
    %73 = arith.mulf %64, %70 : vector<1x32xf32>
    %74 = arith.addf %72, %73 : vector<1x32xf32>
    %75 = math.tanh %74 : vector<1x32xf32>
    %76 = arith.mulf %71, %75 : vector<1x32xf32>
    %cst_28 = arith.constant dense<0.000000e+00> : vector<1x128xf32>
    %77 = tpu.matmul %76, %1, %cst_28 {dimension_numbers = #tpu.dot_dimension_numbers<[1], [0], [0], [1], [0, 0, 1, 1], [], []>} : vector<1x32xf32>, vector<32x128xf32>, vector<1x128xf32> -> vector<1x128xf32>
    %78 = arith.addf %55, %77 : vector<1x128xf32>
    %79 = arith.negf %78 : vector<1x128xf32>
    %80 = math.exp %79 : vector<1x128xf32>
    %cst_29 = arith.constant 1.000000e+00 : f32
    %81 = vector.broadcast %cst_29 : f32 to vector<1x128xf32>
    %82 = arith.addf %81, %80 : vector<1x128xf32>
    %83 = arith.divf %81, %82 : vector<1x128xf32>
    %84 = vector.extract_strided_slice %83 {offsets = [0, 0], sizes = [1, 32], strides = [1, 1]} : vector<1x128xf32> to vector<1x32xf32>
    %85 = vector.extract_strided_slice %83 {offsets = [0, 32], sizes = [1, 32], strides = [1, 1]} : vector<1x128xf32> to vector<1x32xf32>
    %86 = vector.extract_strided_slice %83 {offsets = [0, 64], sizes = [1, 32], strides = [1, 1]} : vector<1x128xf32> to vector<1x32xf32>
    %cst_30 = arith.constant 2.000000e+00 : f32
    %87 = vector.broadcast %cst_30 : f32 to vector<1x32xf32>
    %88 = arith.mulf %87, %86 : vector<1x32xf32>
    %cst_31 = arith.constant 1.000000e+00 : f32
    %89 = vector.broadcast %cst_31 : f32 to vector<1x32xf32>
    %90 = arith.subf %88, %89 : vector<1x32xf32>
    %91 = vector.extract_strided_slice %83 {offsets = [0, 96], sizes = [1, 32], strides = [1, 1]} : vector<1x128xf32> to vector<1x32xf32>
    %92 = arith.mulf %85, %51 : vector<1x32xf32>
    %93 = arith.mulf %84, %90 : vector<1x32xf32>
    %94 = arith.addf %92, %93 : vector<1x32xf32>
    %95 = math.tanh %94 : vector<1x32xf32>
    %96 = arith.mulf %91, %95 : vector<1x32xf32>
    %cst_32 = arith.constant dense<0.000000e+00> : vector<1x128xf32>
    %97 = tpu.matmul %96, %2, %cst_32 {dimension_numbers = #tpu.dot_dimension_numbers<[1], [0], [0], [1], [0, 0, 1, 1], [], []>} : vector<1x32xf32>, vector<32x128xf32>, vector<1x128xf32> -> vector<1x128xf32>
    %98 = arith.addf %97, %3 : vector<1x128xf32>
    %99 = vector.extract_strided_slice %9 {offsets = [2, 0], sizes = [1, 128], strides = [1, 1]} : vector<8x128xf32> to vector<1x128xf32>
    %cst_33 = arith.constant dense<0.000000e+00> : vector<1x128xf32>
    %100 = tpu.matmul %76, %0, %cst_33 {dimension_numbers = #tpu.dot_dimension_numbers<[1], [0], [0], [1], [0, 0, 1, 1], [], []>} : vector<1x32xf32>, vector<32x128xf32>, vector<1x128xf32> -> vector<1x128xf32>
    %101 = arith.addf %99, %100 : vector<1x128xf32>
    %102 = arith.negf %101 : vector<1x128xf32>
    %103 = math.exp %102 : vector<1x128xf32>
    %cst_34 = arith.constant 1.000000e+00 : f32
    %104 = vector.broadcast %cst_34 : f32 to vector<1x128xf32>
    %105 = arith.addf %104, %103 : vector<1x128xf32>
    %106 = arith.divf %104, %105 : vector<1x128xf32>
    %107 = vector.extract_strided_slice %106 {offsets = [0, 0], sizes = [1, 32], strides = [1, 1]} : vector<1x128xf32> to vector<1x32xf32>
    %108 = vector.extract_strided_slice %106 {offsets = [0, 32], sizes = [1, 32], strides = [1, 1]} : vector<1x128xf32> to vector<1x32xf32>
    %109 = vector.extract_strided_slice %106 {offsets = [0, 64], sizes = [1, 32], strides = [1, 1]} : vector<1x128xf32> to vector<1x32xf32>
    %cst_35 = arith.constant 2.000000e+00 : f32
    %110 = vector.broadcast %cst_35 : f32 to vector<1x32xf32>
    %111 = arith.mulf %110, %109 : vector<1x32xf32>
    %cst_36 = arith.constant 1.000000e+00 : f32
    %112 = vector.broadcast %cst_36 : f32 to vector<1x32xf32>
    %113 = arith.subf %111, %112 : vector<1x32xf32>
    %114 = vector.extract_strided_slice %106 {offsets = [0, 96], sizes = [1, 32], strides = [1, 1]} : vector<1x128xf32> to vector<1x32xf32>
    %115 = arith.mulf %108, %74 : vector<1x32xf32>
    %116 = arith.mulf %107, %113 : vector<1x32xf32>
    %117 = arith.addf %115, %116 : vector<1x32xf32>
    %118 = math.tanh %117 : vector<1x32xf32>
    %119 = arith.mulf %114, %118 : vector<1x32xf32>
    %cst_37 = arith.constant dense<0.000000e+00> : vector<1x128xf32>
    %120 = tpu.matmul %119, %1, %cst_37 {dimension_numbers = #tpu.dot_dimension_numbers<[1], [0], [0], [1], [0, 0, 1, 1], [], []>} : vector<1x32xf32>, vector<32x128xf32>, vector<1x128xf32> -> vector<1x128xf32>
    %121 = arith.addf %98, %120 : vector<1x128xf32>
    %122 = arith.negf %121 : vector<1x128xf32>
    %123 = math.exp %122 : vector<1x128xf32>
    %cst_38 = arith.constant 1.000000e+00 : f32
    %124 = vector.broadcast %cst_38 : f32 to vector<1x128xf32>
    %125 = arith.addf %124, %123 : vector<1x128xf32>
    %126 = arith.divf %124, %125 : vector<1x128xf32>
    %127 = vector.extract_strided_slice %126 {offsets = [0, 0], sizes = [1, 32], strides = [1, 1]} : vector<1x128xf32> to vector<1x32xf32>
    %128 = vector.extract_strided_slice %126 {offsets = [0, 32], sizes = [1, 32], strides = [1, 1]} : vector<1x128xf32> to vector<1x32xf32>
    %129 = vector.extract_strided_slice %126 {offsets = [0, 64], sizes = [1, 32], strides = [1, 1]} : vector<1x128xf32> to vector<1x32xf32>
    %cst_39 = arith.constant 2.000000e+00 : f32
    %130 = vector.broadcast %cst_39 : f32 to vector<1x32xf32>
    %131 = arith.mulf %130, %129 : vector<1x32xf32>
    %cst_40 = arith.constant 1.000000e+00 : f32
    %132 = vector.broadcast %cst_40 : f32 to vector<1x32xf32>
    %133 = arith.subf %131, %132 : vector<1x32xf32>
    %134 = vector.extract_strided_slice %126 {offsets = [0, 96], sizes = [1, 32], strides = [1, 1]} : vector<1x128xf32> to vector<1x32xf32>
    %135 = arith.mulf %128, %94 : vector<1x32xf32>
    %136 = arith.mulf %127, %133 : vector<1x32xf32>
    %137 = arith.addf %135, %136 : vector<1x32xf32>
    %138 = math.tanh %137 : vector<1x32xf32>
    %139 = arith.mulf %134, %138 : vector<1x32xf32>
    %cst_41 = arith.constant dense<0.000000e+00> : vector<1x128xf32>
    %140 = tpu.matmul %139, %2, %cst_41 {dimension_numbers = #tpu.dot_dimension_numbers<[1], [0], [0], [1], [0, 0, 1, 1], [], []>} : vector<1x32xf32>, vector<32x128xf32>, vector<1x128xf32> -> vector<1x128xf32>
    %141 = arith.addf %140, %3 : vector<1x128xf32>
    %142 = vector.extract_strided_slice %9 {offsets = [3, 0], sizes = [1, 128], strides = [1, 1]} : vector<8x128xf32> to vector<1x128xf32>
    %cst_42 = arith.constant dense<0.000000e+00> : vector<1x128xf32>
    %143 = tpu.matmul %119, %0, %cst_42 {dimension_numbers = #tpu.dot_dimension_numbers<[1], [0], [0], [1], [0, 0, 1, 1], [], []>} : vector<1x32xf32>, vector<32x128xf32>, vector<1x128xf32> -> vector<1x128xf32>
    %144 = arith.addf %142, %143 : vector<1x128xf32>
    %145 = arith.negf %144 : vector<1x128xf32>
    %146 = math.exp %145 : vector<1x128xf32>
    %cst_43 = arith.constant 1.000000e+00 : f32
    %147 = vector.broadcast %cst_43 : f32 to vector<1x128xf32>
    %148 = arith.addf %147, %146 : vector<1x128xf32>
    %149 = arith.divf %147, %148 : vector<1x128xf32>
    %150 = vector.extract_strided_slice %149 {offsets = [0, 0], sizes = [1, 32], strides = [1, 1]} : vector<1x128xf32> to vector<1x32xf32>
    %151 = vector.extract_strided_slice %149 {offsets = [0, 32], sizes = [1, 32], strides = [1, 1]} : vector<1x128xf32> to vector<1x32xf32>
    %152 = vector.extract_strided_slice %149 {offsets = [0, 64], sizes = [1, 32], strides = [1, 1]} : vector<1x128xf32> to vector<1x32xf32>
    %cst_44 = arith.constant 2.000000e+00 : f32
    %153 = vector.broadcast %cst_44 : f32 to vector<1x32xf32>
    %154 = arith.mulf %153, %152 : vector<1x32xf32>
    %cst_45 = arith.constant 1.000000e+00 : f32
    %155 = vector.broadcast %cst_45 : f32 to vector<1x32xf32>
    %156 = arith.subf %154, %155 : vector<1x32xf32>
    %157 = vector.extract_strided_slice %149 {offsets = [0, 96], sizes = [1, 32], strides = [1, 1]} : vector<1x128xf32> to vector<1x32xf32>
    %158 = arith.mulf %151, %117 : vector<1x32xf32>
    %159 = arith.mulf %150, %156 : vector<1x32xf32>
    %160 = arith.addf %158, %159 : vector<1x32xf32>
    %161 = math.tanh %160 : vector<1x32xf32>
    %162 = arith.mulf %157, %161 : vector<1x32xf32>
    %cst_46 = arith.constant dense<0.000000e+00> : vector<1x128xf32>
    %163 = tpu.matmul %162, %1, %cst_46 {dimension_numbers = #tpu.dot_dimension_numbers<[1], [0], [0], [1], [0, 0, 1, 1], [], []>} : vector<1x32xf32>, vector<32x128xf32>, vector<1x128xf32> -> vector<1x128xf32>
    %164 = arith.addf %141, %163 : vector<1x128xf32>
    %165 = arith.negf %164 : vector<1x128xf32>
    %166 = math.exp %165 : vector<1x128xf32>
    %cst_47 = arith.constant 1.000000e+00 : f32
    %167 = vector.broadcast %cst_47 : f32 to vector<1x128xf32>
    %168 = arith.addf %167, %166 : vector<1x128xf32>
    %169 = arith.divf %167, %168 : vector<1x128xf32>
    %170 = vector.extract_strided_slice %169 {offsets = [0, 0], sizes = [1, 32], strides = [1, 1]} : vector<1x128xf32> to vector<1x32xf32>
    %171 = vector.extract_strided_slice %169 {offsets = [0, 32], sizes = [1, 32], strides = [1, 1]} : vector<1x128xf32> to vector<1x32xf32>
    %172 = vector.extract_strided_slice %169 {offsets = [0, 64], sizes = [1, 32], strides = [1, 1]} : vector<1x128xf32> to vector<1x32xf32>
    %cst_48 = arith.constant 2.000000e+00 : f32
    %173 = vector.broadcast %cst_48 : f32 to vector<1x32xf32>
    %174 = arith.mulf %173, %172 : vector<1x32xf32>
    %cst_49 = arith.constant 1.000000e+00 : f32
    %175 = vector.broadcast %cst_49 : f32 to vector<1x32xf32>
    %176 = arith.subf %174, %175 : vector<1x32xf32>
    %177 = vector.extract_strided_slice %169 {offsets = [0, 96], sizes = [1, 32], strides = [1, 1]} : vector<1x128xf32> to vector<1x32xf32>
    %178 = arith.mulf %171, %137 : vector<1x32xf32>
    %179 = arith.mulf %170, %176 : vector<1x32xf32>
    %180 = arith.addf %178, %179 : vector<1x32xf32>
    %181 = math.tanh %180 : vector<1x32xf32>
    %182 = arith.mulf %177, %181 : vector<1x32xf32>
    %cst_50 = arith.constant dense<0.000000e+00> : vector<1x128xf32>
    %183 = tpu.matmul %182, %2, %cst_50 {dimension_numbers = #tpu.dot_dimension_numbers<[1], [0], [0], [1], [0, 0, 1, 1], [], []>} : vector<1x32xf32>, vector<32x128xf32>, vector<1x128xf32> -> vector<1x128xf32>
    %184 = arith.addf %183, %3 : vector<1x128xf32>
    %185 = vector.extract_strided_slice %9 {offsets = [4, 0], sizes = [1, 128], strides = [1, 1]} : vector<8x128xf32> to vector<1x128xf32>
    %cst_51 = arith.constant dense<0.000000e+00> : vector<1x128xf32>
    %186 = tpu.matmul %162, %0, %cst_51 {dimension_numbers = #tpu.dot_dimension_numbers<[1], [0], [0], [1], [0, 0, 1, 1], [], []>} : vector<1x32xf32>, vector<32x128xf32>, vector<1x128xf32> -> vector<1x128xf32>
    %187 = arith.addf %185, %186 : vector<1x128xf32>
    %188 = arith.negf %187 : vector<1x128xf32>
    %189 = math.exp %188 : vector<1x128xf32>
    %cst_52 = arith.constant 1.000000e+00 : f32
    %190 = vector.broadcast %cst_52 : f32 to vector<1x128xf32>
    %191 = arith.addf %190, %189 : vector<1x128xf32>
    %192 = arith.divf %190, %191 : vector<1x128xf32>
    %193 = vector.extract_strided_slice %192 {offsets = [0, 0], sizes = [1, 32], strides = [1, 1]} : vector<1x128xf32> to vector<1x32xf32>
    %194 = vector.extract_strided_slice %192 {offsets = [0, 32], sizes = [1, 32], strides = [1, 1]} : vector<1x128xf32> to vector<1x32xf32>
    %195 = vector.extract_strided_slice %192 {offsets = [0, 64], sizes = [1, 32], strides = [1, 1]} : vector<1x128xf32> to vector<1x32xf32>
    %cst_53 = arith.constant 2.000000e+00 : f32
    %196 = vector.broadcast %cst_53 : f32 to vector<1x32xf32>
    %197 = arith.mulf %196, %195 : vector<1x32xf32>
    %cst_54 = arith.constant 1.000000e+00 : f32
    %198 = vector.broadcast %cst_54 : f32 to vector<1x32xf32>
    %199 = arith.subf %197, %198 : vector<1x32xf32>
    %200 = vector.extract_strided_slice %192 {offsets = [0, 96], sizes = [1, 32], strides = [1, 1]} : vector<1x128xf32> to vector<1x32xf32>
    %201 = arith.mulf %194, %160 : vector<1x32xf32>
    %202 = arith.mulf %193, %199 : vector<1x32xf32>
    %203 = arith.addf %201, %202 : vector<1x32xf32>
    %204 = math.tanh %203 : vector<1x32xf32>
    %205 = arith.mulf %200, %204 : vector<1x32xf32>
    %cst_55 = arith.constant dense<0.000000e+00> : vector<1x128xf32>
    %206 = tpu.matmul %205, %1, %cst_55 {dimension_numbers = #tpu.dot_dimension_numbers<[1], [0], [0], [1], [0, 0, 1, 1], [], []>} : vector<1x32xf32>, vector<32x128xf32>, vector<1x128xf32> -> vector<1x128xf32>
    %207 = arith.addf %184, %206 : vector<1x128xf32>
    %208 = arith.negf %207 : vector<1x128xf32>
    %209 = math.exp %208 : vector<1x128xf32>
    %cst_56 = arith.constant 1.000000e+00 : f32
    %210 = vector.broadcast %cst_56 : f32 to vector<1x128xf32>
    %211 = arith.addf %210, %209 : vector<1x128xf32>
    %212 = arith.divf %210, %211 : vector<1x128xf32>
    %213 = vector.extract_strided_slice %212 {offsets = [0, 0], sizes = [1, 32], strides = [1, 1]} : vector<1x128xf32> to vector<1x32xf32>
    %214 = vector.extract_strided_slice %212 {offsets = [0, 32], sizes = [1, 32], strides = [1, 1]} : vector<1x128xf32> to vector<1x32xf32>
    %215 = vector.extract_strided_slice %212 {offsets = [0, 64], sizes = [1, 32], strides = [1, 1]} : vector<1x128xf32> to vector<1x32xf32>
    %cst_57 = arith.constant 2.000000e+00 : f32
    %216 = vector.broadcast %cst_57 : f32 to vector<1x32xf32>
    %217 = arith.mulf %216, %215 : vector<1x32xf32>
    %cst_58 = arith.constant 1.000000e+00 : f32
    %218 = vector.broadcast %cst_58 : f32 to vector<1x32xf32>
    %219 = arith.subf %217, %218 : vector<1x32xf32>
    %220 = vector.extract_strided_slice %212 {offsets = [0, 96], sizes = [1, 32], strides = [1, 1]} : vector<1x128xf32> to vector<1x32xf32>
    %221 = arith.mulf %214, %180 : vector<1x32xf32>
    %222 = arith.mulf %213, %219 : vector<1x32xf32>
    %223 = arith.addf %221, %222 : vector<1x32xf32>
    %224 = math.tanh %223 : vector<1x32xf32>
    %225 = arith.mulf %220, %224 : vector<1x32xf32>
    %cst_59 = arith.constant dense<0.000000e+00> : vector<1x128xf32>
    %226 = tpu.matmul %225, %2, %cst_59 {dimension_numbers = #tpu.dot_dimension_numbers<[1], [0], [0], [1], [0, 0, 1, 1], [], []>} : vector<1x32xf32>, vector<32x128xf32>, vector<1x128xf32> -> vector<1x128xf32>
    %227 = arith.addf %226, %3 : vector<1x128xf32>
    %228 = vector.extract_strided_slice %9 {offsets = [5, 0], sizes = [1, 128], strides = [1, 1]} : vector<8x128xf32> to vector<1x128xf32>
    %cst_60 = arith.constant dense<0.000000e+00> : vector<1x128xf32>
    %229 = tpu.matmul %205, %0, %cst_60 {dimension_numbers = #tpu.dot_dimension_numbers<[1], [0], [0], [1], [0, 0, 1, 1], [], []>} : vector<1x32xf32>, vector<32x128xf32>, vector<1x128xf32> -> vector<1x128xf32>
    %230 = arith.addf %228, %229 : vector<1x128xf32>
    %231 = arith.negf %230 : vector<1x128xf32>
    %232 = math.exp %231 : vector<1x128xf32>
    %cst_61 = arith.constant 1.000000e+00 : f32
    %233 = vector.broadcast %cst_61 : f32 to vector<1x128xf32>
    %234 = arith.addf %233, %232 : vector<1x128xf32>
    %235 = arith.divf %233, %234 : vector<1x128xf32>
    %236 = vector.extract_strided_slice %235 {offsets = [0, 0], sizes = [1, 32], strides = [1, 1]} : vector<1x128xf32> to vector<1x32xf32>
    %237 = vector.extract_strided_slice %235 {offsets = [0, 32], sizes = [1, 32], strides = [1, 1]} : vector<1x128xf32> to vector<1x32xf32>
    %238 = vector.extract_strided_slice %235 {offsets = [0, 64], sizes = [1, 32], strides = [1, 1]} : vector<1x128xf32> to vector<1x32xf32>
    %cst_62 = arith.constant 2.000000e+00 : f32
    %239 = vector.broadcast %cst_62 : f32 to vector<1x32xf32>
    %240 = arith.mulf %239, %238 : vector<1x32xf32>
    %cst_63 = arith.constant 1.000000e+00 : f32
    %241 = vector.broadcast %cst_63 : f32 to vector<1x32xf32>
    %242 = arith.subf %240, %241 : vector<1x32xf32>
    %243 = vector.extract_strided_slice %235 {offsets = [0, 96], sizes = [1, 32], strides = [1, 1]} : vector<1x128xf32> to vector<1x32xf32>
    %244 = arith.mulf %237, %203 : vector<1x32xf32>
    %245 = arith.mulf %236, %242 : vector<1x32xf32>
    %246 = arith.addf %244, %245 : vector<1x32xf32>
    %247 = math.tanh %246 : vector<1x32xf32>
    %248 = arith.mulf %243, %247 : vector<1x32xf32>
    %cst_64 = arith.constant dense<0.000000e+00> : vector<1x128xf32>
    %249 = tpu.matmul %248, %1, %cst_64 {dimension_numbers = #tpu.dot_dimension_numbers<[1], [0], [0], [1], [0, 0, 1, 1], [], []>} : vector<1x32xf32>, vector<32x128xf32>, vector<1x128xf32> -> vector<1x128xf32>
    %250 = arith.addf %227, %249 : vector<1x128xf32>
    %251 = arith.negf %250 : vector<1x128xf32>
    %252 = math.exp %251 : vector<1x128xf32>
    %cst_65 = arith.constant 1.000000e+00 : f32
    %253 = vector.broadcast %cst_65 : f32 to vector<1x128xf32>
    %254 = arith.addf %253, %252 : vector<1x128xf32>
    %255 = arith.divf %253, %254 : vector<1x128xf32>
    %256 = vector.extract_strided_slice %255 {offsets = [0, 0], sizes = [1, 32], strides = [1, 1]} : vector<1x128xf32> to vector<1x32xf32>
    %257 = vector.extract_strided_slice %255 {offsets = [0, 32], sizes = [1, 32], strides = [1, 1]} : vector<1x128xf32> to vector<1x32xf32>
    %258 = vector.extract_strided_slice %255 {offsets = [0, 64], sizes = [1, 32], strides = [1, 1]} : vector<1x128xf32> to vector<1x32xf32>
    %cst_66 = arith.constant 2.000000e+00 : f32
    %259 = vector.broadcast %cst_66 : f32 to vector<1x32xf32>
    %260 = arith.mulf %259, %258 : vector<1x32xf32>
    %cst_67 = arith.constant 1.000000e+00 : f32
    %261 = vector.broadcast %cst_67 : f32 to vector<1x32xf32>
    %262 = arith.subf %260, %261 : vector<1x32xf32>
    %263 = vector.extract_strided_slice %255 {offsets = [0, 96], sizes = [1, 32], strides = [1, 1]} : vector<1x128xf32> to vector<1x32xf32>
    %264 = arith.mulf %257, %223 : vector<1x32xf32>
    %265 = arith.mulf %256, %262 : vector<1x32xf32>
    %266 = arith.addf %264, %265 : vector<1x32xf32>
    %267 = math.tanh %266 : vector<1x32xf32>
    %268 = arith.mulf %263, %267 : vector<1x32xf32>
    %cst_68 = arith.constant dense<0.000000e+00> : vector<1x128xf32>
    %269 = tpu.matmul %268, %2, %cst_68 {dimension_numbers = #tpu.dot_dimension_numbers<[1], [0], [0], [1], [0, 0, 1, 1], [], []>} : vector<1x32xf32>, vector<32x128xf32>, vector<1x128xf32> -> vector<1x128xf32>
    %270 = arith.addf %269, %3 : vector<1x128xf32>
    %271 = vector.extract_strided_slice %9 {offsets = [6, 0], sizes = [1, 128], strides = [1, 1]} : vector<8x128xf32> to vector<1x128xf32>
    %cst_69 = arith.constant dense<0.000000e+00> : vector<1x128xf32>
    %272 = tpu.matmul %248, %0, %cst_69 {dimension_numbers = #tpu.dot_dimension_numbers<[1], [0], [0], [1], [0, 0, 1, 1], [], []>} : vector<1x32xf32>, vector<32x128xf32>, vector<1x128xf32> -> vector<1x128xf32>
    %273 = arith.addf %271, %272 : vector<1x128xf32>
    %274 = arith.negf %273 : vector<1x128xf32>
    %275 = math.exp %274 : vector<1x128xf32>
    %cst_70 = arith.constant 1.000000e+00 : f32
    %276 = vector.broadcast %cst_70 : f32 to vector<1x128xf32>
    %277 = arith.addf %276, %275 : vector<1x128xf32>
    %278 = arith.divf %276, %277 : vector<1x128xf32>
    %279 = vector.extract_strided_slice %278 {offsets = [0, 0], sizes = [1, 32], strides = [1, 1]} : vector<1x128xf32> to vector<1x32xf32>
    %280 = vector.extract_strided_slice %278 {offsets = [0, 32], sizes = [1, 32], strides = [1, 1]} : vector<1x128xf32> to vector<1x32xf32>
    %281 = vector.extract_strided_slice %278 {offsets = [0, 64], sizes = [1, 32], strides = [1, 1]} : vector<1x128xf32> to vector<1x32xf32>
    %cst_71 = arith.constant 2.000000e+00 : f32
    %282 = vector.broadcast %cst_71 : f32 to vector<1x32xf32>
    %283 = arith.mulf %282, %281 : vector<1x32xf32>
    %cst_72 = arith.constant 1.000000e+00 : f32
    %284 = vector.broadcast %cst_72 : f32 to vector<1x32xf32>
    %285 = arith.subf %283, %284 : vector<1x32xf32>
    %286 = vector.extract_strided_slice %278 {offsets = [0, 96], sizes = [1, 32], strides = [1, 1]} : vector<1x128xf32> to vector<1x32xf32>
    %287 = arith.mulf %280, %246 : vector<1x32xf32>
    %288 = arith.mulf %279, %285 : vector<1x32xf32>
    %289 = arith.addf %287, %288 : vector<1x32xf32>
    %290 = math.tanh %289 : vector<1x32xf32>
    %291 = arith.mulf %286, %290 : vector<1x32xf32>
    %cst_73 = arith.constant dense<0.000000e+00> : vector<1x128xf32>
    %292 = tpu.matmul %291, %1, %cst_73 {dimension_numbers = #tpu.dot_dimension_numbers<[1], [0], [0], [1], [0, 0, 1, 1], [], []>} : vector<1x32xf32>, vector<32x128xf32>, vector<1x128xf32> -> vector<1x128xf32>
    %293 = arith.addf %270, %292 : vector<1x128xf32>
    %294 = arith.negf %293 : vector<1x128xf32>
    %295 = math.exp %294 : vector<1x128xf32>
    %cst_74 = arith.constant 1.000000e+00 : f32
    %296 = vector.broadcast %cst_74 : f32 to vector<1x128xf32>
    %297 = arith.addf %296, %295 : vector<1x128xf32>
    %298 = arith.divf %296, %297 : vector<1x128xf32>
    %299 = vector.extract_strided_slice %298 {offsets = [0, 0], sizes = [1, 32], strides = [1, 1]} : vector<1x128xf32> to vector<1x32xf32>
    %300 = vector.extract_strided_slice %298 {offsets = [0, 32], sizes = [1, 32], strides = [1, 1]} : vector<1x128xf32> to vector<1x32xf32>
    %301 = vector.extract_strided_slice %298 {offsets = [0, 64], sizes = [1, 32], strides = [1, 1]} : vector<1x128xf32> to vector<1x32xf32>
    %cst_75 = arith.constant 2.000000e+00 : f32
    %302 = vector.broadcast %cst_75 : f32 to vector<1x32xf32>
    %303 = arith.mulf %302, %301 : vector<1x32xf32>
    %cst_76 = arith.constant 1.000000e+00 : f32
    %304 = vector.broadcast %cst_76 : f32 to vector<1x32xf32>
    %305 = arith.subf %303, %304 : vector<1x32xf32>
    %306 = vector.extract_strided_slice %298 {offsets = [0, 96], sizes = [1, 32], strides = [1, 1]} : vector<1x128xf32> to vector<1x32xf32>
    %307 = arith.mulf %300, %266 : vector<1x32xf32>
    %308 = arith.mulf %299, %305 : vector<1x32xf32>
    %309 = arith.addf %307, %308 : vector<1x32xf32>
    %310 = math.tanh %309 : vector<1x32xf32>
    %311 = arith.mulf %306, %310 : vector<1x32xf32>
    %cst_77 = arith.constant dense<0.000000e+00> : vector<1x128xf32>
    %312 = tpu.matmul %311, %2, %cst_77 {dimension_numbers = #tpu.dot_dimension_numbers<[1], [0], [0], [1], [0, 0, 1, 1], [], []>} : vector<1x32xf32>, vector<32x128xf32>, vector<1x128xf32> -> vector<1x128xf32>
    %313 = arith.addf %312, %3 : vector<1x128xf32>
    %314 = vector.extract_strided_slice %9 {offsets = [7, 0], sizes = [1, 128], strides = [1, 1]} : vector<8x128xf32> to vector<1x128xf32>
    %cst_78 = arith.constant dense<0.000000e+00> : vector<1x128xf32>
    %315 = tpu.matmul %291, %0, %cst_78 {dimension_numbers = #tpu.dot_dimension_numbers<[1], [0], [0], [1], [0, 0, 1, 1], [], []>} : vector<1x32xf32>, vector<32x128xf32>, vector<1x128xf32> -> vector<1x128xf32>
    %316 = arith.addf %314, %315 : vector<1x128xf32>
    %317 = arith.negf %316 : vector<1x128xf32>
    %318 = math.exp %317 : vector<1x128xf32>
    %cst_79 = arith.constant 1.000000e+00 : f32
    %319 = vector.broadcast %cst_79 : f32 to vector<1x128xf32>
    %320 = arith.addf %319, %318 : vector<1x128xf32>
    %321 = arith.divf %319, %320 : vector<1x128xf32>
    %322 = vector.extract_strided_slice %321 {offsets = [0, 0], sizes = [1, 32], strides = [1, 1]} : vector<1x128xf32> to vector<1x32xf32>
    %323 = vector.extract_strided_slice %321 {offsets = [0, 32], sizes = [1, 32], strides = [1, 1]} : vector<1x128xf32> to vector<1x32xf32>
    %324 = vector.extract_strided_slice %321 {offsets = [0, 64], sizes = [1, 32], strides = [1, 1]} : vector<1x128xf32> to vector<1x32xf32>
    %cst_80 = arith.constant 2.000000e+00 : f32
    %325 = vector.broadcast %cst_80 : f32 to vector<1x32xf32>
    %326 = arith.mulf %325, %324 : vector<1x32xf32>
    %cst_81 = arith.constant 1.000000e+00 : f32
    %327 = vector.broadcast %cst_81 : f32 to vector<1x32xf32>
    %328 = arith.subf %326, %327 : vector<1x32xf32>
    %329 = vector.extract_strided_slice %321 {offsets = [0, 96], sizes = [1, 32], strides = [1, 1]} : vector<1x128xf32> to vector<1x32xf32>
    %330 = arith.mulf %323, %289 : vector<1x32xf32>
    %331 = arith.mulf %322, %328 : vector<1x32xf32>
    %332 = arith.addf %330, %331 : vector<1x32xf32>
    %333 = math.tanh %332 : vector<1x32xf32>
    %334 = arith.mulf %329, %333 : vector<1x32xf32>
    %cst_82 = arith.constant dense<0.000000e+00> : vector<1x128xf32>
    %335 = tpu.matmul %334, %1, %cst_82 {dimension_numbers = #tpu.dot_dimension_numbers<[1], [0], [0], [1], [0, 0, 1, 1], [], []>} : vector<1x32xf32>, vector<32x128xf32>, vector<1x128xf32> -> vector<1x128xf32>
    %336 = arith.addf %313, %335 : vector<1x128xf32>
    %337 = arith.negf %336 : vector<1x128xf32>
    %338 = math.exp %337 : vector<1x128xf32>
    %cst_83 = arith.constant 1.000000e+00 : f32
    %339 = vector.broadcast %cst_83 : f32 to vector<1x128xf32>
    %340 = arith.addf %339, %338 : vector<1x128xf32>
    %341 = arith.divf %339, %340 : vector<1x128xf32>
    %342 = vector.extract_strided_slice %341 {offsets = [0, 0], sizes = [1, 32], strides = [1, 1]} : vector<1x128xf32> to vector<1x32xf32>
    %343 = vector.extract_strided_slice %341 {offsets = [0, 32], sizes = [1, 32], strides = [1, 1]} : vector<1x128xf32> to vector<1x32xf32>
    %344 = vector.extract_strided_slice %341 {offsets = [0, 64], sizes = [1, 32], strides = [1, 1]} : vector<1x128xf32> to vector<1x32xf32>
    %cst_84 = arith.constant 2.000000e+00 : f32
    %345 = vector.broadcast %cst_84 : f32 to vector<1x32xf32>
    %346 = arith.mulf %345, %344 : vector<1x32xf32>
    %cst_85 = arith.constant 1.000000e+00 : f32
    %347 = vector.broadcast %cst_85 : f32 to vector<1x32xf32>
    %348 = arith.subf %346, %347 : vector<1x32xf32>
    %349 = vector.extract_strided_slice %341 {offsets = [0, 96], sizes = [1, 32], strides = [1, 1]} : vector<1x128xf32> to vector<1x32xf32>
    %350 = arith.mulf %343, %309 : vector<1x32xf32>
    %351 = arith.mulf %342, %348 : vector<1x32xf32>
    %352 = arith.addf %350, %351 : vector<1x32xf32>
    %353 = math.tanh %352 : vector<1x32xf32>
    %354 = arith.mulf %349, %353 : vector<1x32xf32>
    %c0_86 = arith.constant 0 : index
    %c0_87 = arith.constant 0 : index
    %355 = vector.load %arg7[%c0_86, %c0_87] : memref<32x128xf32, #tpu.memory_space<vmem>>, vector<32x128xf32>
    %cst_88 = arith.constant dense<0.000000e+00> : vector<1x128xf32>
    %356 = tpu.matmul %354, %355, %cst_88 {dimension_numbers = #tpu.dot_dimension_numbers<[1], [0], [0], [1], [0, 0, 1, 1], [], []>} : vector<1x32xf32>, vector<32x128xf32>, vector<1x128xf32> -> vector<1x128xf32>
    %c0_89 = arith.constant 0 : index
    %c0_90 = arith.constant 0 : index
    %357 = vector.load %arg8[%c0_89, %c0_90] : memref<1x128xf32, #tpu.memory_space<vmem>>, vector<1x128xf32>
    %358 = arith.addf %356, %357 : vector<1x128xf32>
    %cst_91 = arith.constant 2.000000e+01 : f32
    %359 = vector.broadcast %cst_91 : f32 to vector<1x128xf32>
    %360 = arith.cmpf ogt, %358, %359 : vector<1x128xf32>
    %cst_92 = arith.constant 2.000000e+01 : f32
    %361 = vector.broadcast %cst_92 : f32 to vector<1x128xf32>
    %362 = arith.minimumf %358, %361 : vector<1x128xf32>
    %363 = math.exp %362 : vector<1x128xf32>
    %364 = math.log1p %363 : vector<1x128xf32>
    %365 = arith.select %360, %358, %364 : vector<1x128xi1>, vector<1x128xf32>
    %c0_93 = arith.constant 0 : index
    %c0_94 = arith.constant 0 : index
    %366 = vector.load %arg9[%c0_93, %c0_94] : memref<128x128xf32, #tpu.memory_space<vmem>>, vector<128x128xf32>
    %cst_95 = arith.constant dense<0.000000e+00> : vector<1x128xf32>
    %367 = tpu.matmul %365, %366, %cst_95 {dimension_numbers = #tpu.dot_dimension_numbers<[1], [0], [0], [1], [0, 0, 1, 1], [], []>} : vector<1x128xf32>, vector<128x128xf32>, vector<1x128xf32> -> vector<1x128xf32>
    %c0_96 = arith.constant 0 : index
    %c0_97 = arith.constant 0 : index
    %368 = vector.load %arg10[%c0_96, %c0_97] : memref<1x128xf32, #tpu.memory_space<vmem>>, vector<1x128xf32>
    %369 = arith.addf %367, %368 : vector<1x128xf32>
    %cst_98 = arith.constant 2.000000e+01 : f32
    %370 = vector.broadcast %cst_98 : f32 to vector<1x128xf32>
    %371 = arith.cmpf ogt, %369, %370 : vector<1x128xf32>
    %cst_99 = arith.constant 2.000000e+01 : f32
    %372 = vector.broadcast %cst_99 : f32 to vector<1x128xf32>
    %373 = arith.minimumf %369, %372 : vector<1x128xf32>
    %374 = math.exp %373 : vector<1x128xf32>
    %375 = math.log1p %374 : vector<1x128xf32>
    %376 = arith.select %371, %369, %375 : vector<1x128xi1>, vector<1x128xf32>
    %c0_100 = arith.constant 0 : index
    %c0_101 = arith.constant 0 : index
    %377 = vector.load %arg11[%c0_100, %c0_101] : memref<128x128xf32, #tpu.memory_space<vmem>>, vector<128x128xf32>
    %cst_102 = arith.constant dense<0.000000e+00> : vector<1x128xf32>
    %378 = tpu.matmul %376, %377, %cst_102 {dimension_numbers = #tpu.dot_dimension_numbers<[1], [0], [0], [1], [0, 0, 1, 1], [], []>} : vector<1x128xf32>, vector<128x128xf32>, vector<1x128xf32> -> vector<1x128xf32>
    %c0_103 = arith.constant 0 : index
    %c0_104 = arith.constant 0 : index
    %379 = vector.load %arg12[%c0_103, %c0_104] : memref<1x128xf32, #tpu.memory_space<vmem>>, vector<1x128xf32>
    %380 = arith.addf %378, %379 : vector<1x128xf32>
    %c0_105 = arith.constant 0 : index
    %c0_106 = arith.constant 0 : index
    %381 = vector.load %arg13[%c0_105, %c0_106] : memref<1x128xf32, #tpu.memory_space<vmem>>, vector<1x128xf32>
    tpu.vector_store %arg13[%c0_105, %c0_106], %380 {strides = array<i32>} : memref<1x128xf32, #tpu.memory_space<vmem>>, vector<1x128xf32>,
    return
  }
}

</mosaic_0001>

<llo_original>
// kernel: tpu_custom_call.1
$region0: #{tpu_custom_call.1}
  #allocation0 [shape = 'u32[]', space=smem, size = 0x4, offset = 0x4, fixed_abs, tag = 'smem constant byte address 0x4 - core index']
  #allocation1 [shape = 'u32[144,128]{1,0:T(1,128)}', space=vmem, size = 0x12000, scoped, tag = 'internal scratch']
  %s0 = inlined_call_operand.vmem [shape: f32[8,2], index: 0, kind: input, shape index: {}]
  %s1 = inlined_call_operand.vmem [shape: f32[2,128], index: 1, kind: input, shape index: {}]
  %s2 = inlined_call_operand.hbm [shape: f32[32,128], index: 2, kind: input, shape index: {}]
  %s3 = inlined_call_operand.vmem [shape: f32[1,128], index: 3, kind: input, shape index: {}]
  %s4 = inlined_call_operand.hbm [shape: f32[32,128], index: 4, kind: input, shape index: {}]
  %s5 = inlined_call_operand.hbm [shape: f32[32,128], index: 5, kind: input, shape index: {}]
  %s6 = inlined_call_operand.vmem [shape: f32[1,128], index: 6, kind: input, shape index: {}]
  %s7 = inlined_call_operand.vmem [shape: f32[32,128], index: 7, kind: input, shape index: {}]
  %s8 = inlined_call_operand.vmem [shape: f32[1,128], index: 8, kind: input, shape index: {}]
  %s9 = inlined_call_operand.hbm [shape: f32[128,128], index: 9, kind: input, shape index: {}]
  %s10 = inlined_call_operand.vmem [shape: f32[1,128], index: 10, kind: input, shape index: {}]
  %s11 = inlined_call_operand.hbm [shape: f32[128,128], index: 11, kind: input, shape index: {}]
  %s12 = inlined_call_operand.vmem [shape: f32[1,128], index: 12, kind: input, shape index: {}]
  %s13 = inlined_call_operand.hbm [shape: f32[1,128], index: 13, kind: output, shape index: {}]
  %s14 = sld [smem:[#allocation0]]
  $region82: #{tpu_custom_call.1} parent=0
    _
  %s16 = ssub.s32 1, %s14
  %s17 = scalar_select 0, %s16, %s14
  $region1: #{tpu_custom_call.1} parent=0
    #allocation2 [shape = 'u8[16384]{0}', space=vmem, size = 0x4000, scoped, tag = 'input window, operand 2, single buffered']
    #allocation3 [shape = 's32[1]{0}', space=sflag, size = 0x4, scoped, tag = 'scoped memory for tpu_custom_call.1']
    #allocation4 [shape = 's32[1]{0}', space=sflag, size = 0x4, scoped, tag = 'scoped memory for tpu_custom_call.1']
    #allocation5 [shape = 'u8[16384]{0}', space=vmem, size = 0x4000, scoped, tag = 'input window, operand 4, single buffered']
    #allocation6 [shape = 's32[1]{0}', space=sflag, size = 0x4, scoped, tag = 'scoped memory for tpu_custom_call.1']
    #allocation7 [shape = 'u8[16384]{0}', space=vmem, size = 0x4000, scoped, tag = 'input window, operand 5, single buffered']
    #allocation8 [shape = 'u8[65536]{0}', space=vmem, size = 0x10000, scoped, tag = 'input window, operand 9, single buffered']
    #allocation9 [shape = 's32[1]{0}', space=sflag, size = 0x4, scoped, tag = 'scoped memory for tpu_custom_call.1']
    #allocation10 [shape = 'u8[65536]{0}', space=vmem, size = 0x10000, scoped, tag = 'input window, operand 11, single buffered']
    #allocation11 [shape = 'u8[512]{0}', space=vmem, size = 0x400, scoped, tag = 'output window, operand 0, single buffered']
    %18 = vsyncpa [#allocation3], 0
    %19 = vsyncpa [#allocation6], 0
    %20 = vsyncpa [#allocation9], 0
    %21 = vsyncpa [#allocation4], 0
    // Predicated region
    $region2: #{tpu_custom_call.1} parent=1 // pred_check
      _
    $region3: #{tpu_custom_call.1} parent=1 // pred_check_branch
      %23 = sbr.rel (0) target = $region5
    $region4: #{tpu_custom_call.1} parent=1 // pred_region
      _
    $region5: #{tpu_custom_call.1} parent=1 // pred_fallthru
      _
    // Predicated region
    $region6: #{tpu_custom_call.1} parent=1 // pred_check
      _
    $region7: #{tpu_custom_call.1} parent=1 // pred_check_branch
      %25 = sbr.rel (0) target = $region9
    $region8: #{tpu_custom_call.1} parent=1 // pred_region
      _
    $region9: #{tpu_custom_call.1} parent=1 // pred_fallthru
      _
    // Predicated region
    $region10: #{tpu_custom_call.1} parent=1 // pred_check
      _
    $region11: #{tpu_custom_call.1} parent=1 // pred_check_branch
      %27 = sbr.rel (0) target = $region13
    $region12: #{tpu_custom_call.1} parent=1 // pred_region
      %s29 = ssub.s32 512, 512
      %30 = vsyncadd [#allocation3], %s29
      %s31 = sshll.u32 [#allocation2], 4
      %s32 = int_to_ptr.vmem [resolvable:$true] %s31
      %37 = dma.hbm_to_vmem [thread:$0]  %s2, 512, %s32, [#allocation3], 128, 128, 8
    $region13: #{tpu_custom_call.1} parent=1 // pred_fallthru
      _
    // Predicated region
    $region14: #{tpu_custom_call.1} parent=1 // pred_check
      _
    $region15: #{tpu_custom_call.1} parent=1 // pred_check_branch
      %39 = sbr.rel (0) target = $region17
    $region16: #{tpu_custom_call.1} parent=1 // pred_region
      _
    $region17: #{tpu_custom_call.1} parent=1 // pred_fallthru
      _
    // Predicated region
    $region18: #{tpu_custom_call.1} parent=1 // pred_check
      _
    $region19: #{tpu_custom_call.1} parent=1 // pred_check_branch
      %41 = sbr.rel (0) target = $region21
    $region20: #{tpu_custom_call.1} parent=1 // pred_region
      %s43 = ssub.s32 512, 512
      %44 = vsyncadd [#allocation6], %s43
      %s45 = sshll.u32 [#allocation5], 4
      %s46 = int_to_ptr.vmem [resolvable:$true] %s45
      %51 = dma.hbm_to_vmem [thread:$0]  %s4, 512, %s46, [#allocation6], 128, 128, 8
    $region21: #{tpu_custom_call.1} parent=1 // pred_fallthru
      _
    // Predicated region
    $region22: #{tpu_custom_call.1} parent=1 // pred_check
      _
    $region23: #{tpu_custom_call.1} parent=1 // pred_check_branch
      %53 = sbr.rel (0) target = $region25
    $region24: #{tpu_custom_call.1} parent=1 // pred_region
      %s55 = ssub.s32 512, 512
      %56 = vsyncadd [#allocation6], %s55
      %s57 = sshll.u32 [#allocation7], 4
      %s58 = int_to_ptr.vmem [resolvable:$true] %s57
      %63 = dma.hbm_to_vmem [thread:$0]  %s5, 512, %s58, [#allocation6], 128, 128, 8
    $region25: #{tpu_custom_call.1} parent=1 // pred_fallthru
      _
    // Predicated region
    $region26: #{tpu_custom_call.1} parent=1 // pred_check
      _
    $region27: #{tpu_custom_call.1} parent=1 // pred_check_branch
      %65 = sbr.rel (0) target = $region29
    $region28: #{tpu_custom_call.1} parent=1 // pred_region
      _
    $region29: #{tpu_custom_call.1} parent=1 // pred_fallthru
      _
    // Predicated region
    $region30: #{tpu_custom_call.1} parent=1 // pred_check
      _
    $region31: #{tpu_custom_call.1} parent=1 // pred_check_branch
      %67 = sbr.rel (0) target = $region33
    $region32: #{tpu_custom_call.1} parent=1 // pred_region
      _
    $region33: #{tpu_custom_call.1} parent=1 // pred_fallthru
      _
    // Predicated region
    $region34: #{tpu_custom_call.1} parent=1 // pred_check
      _
    $region35: #{tpu_custom_call.1} parent=1 // pred_check_branch
      %69 = sbr.rel (0) target = $region37
    $region36: #{tpu_custom_call.1} parent=1 // pred_region
      _
    $region37: #{tpu_custom_call.1} parent=1 // pred_fallthru
      _
    // Predicated region
    $region38: #{tpu_custom_call.1} parent=1 // pred_check
      _
    $region39: #{tpu_custom_call.1} parent=1 // pred_check_branch
      %71 = sbr.rel (0) target = $region41
    $region40: #{tpu_custom_call.1} parent=1 // pred_region
      %s73 = ssub.s32 2048, 2048
      %74 = vsyncadd [#allocation9], %s73
      %s75 = sshll.u32 [#allocation8], 4
      %s76 = int_to_ptr.vmem [resolvable:$true] %s75
      %81 = dma.hbm_to_vmem [thread:$0]  %s9, 2048, %s76, [#allocation9], 128, 128, 8
    $region41: #{tpu_custom_call.1} parent=1 // pred_fallthru
      _
    // Predicated region
    $region42: #{tpu_custom_call.1} parent=1 // pred_check
      _
    $region43: #{tpu_custom_call.1} parent=1 // pred_check_branch
      %83 = sbr.rel (0) target = $region45
    $region44: #{tpu_custom_call.1} parent=1 // pred_region
      _
    $region45: #{tpu_custom_call.1} parent=1 // pred_fallthru
      _
    // Predicated region
    $region46: #{tpu_custom_call.1} parent=1 // pred_check
      _
    $region47: #{tpu_custom_call.1} parent=1 // pred_check_branch
      %85 = sbr.rel (0) target = $region49
    $region48: #{tpu_custom_call.1} parent=1 // pred_region
      %s87 = ssub.s32 2048, 2048
      %88 = vsyncadd [#allocation9], %s87
      %s89 = sshll.u32 [#allocation10], 4
      %s90 = int_to_ptr.vmem [resolvable:$true] %s89
      %95 = dma.hbm_to_vmem [thread:$0]  %s11, 2048, %s90, [#allocation9], 128, 128, 8
    $region49: #{tpu_custom_call.1} parent=1 // pred_fallthru
      _
    // Predicated region
    $region50: #{tpu_custom_call.1} parent=1 // pred_check
      _
    $region51: #{tpu_custom_call.1} parent=1 // pred_check_branch
      %97 = sbr.rel (0) target = $region53
    $region52: #{tpu_custom_call.1} parent=1 // pred_region
      _
    $region53: #{tpu_custom_call.1} parent=1 // pred_fallthru
      _
    // Predicated region
    $region54: #{tpu_custom_call.1} parent=1 // pred_check
      _
    $region55: #{tpu_custom_call.1} parent=1 // pred_check_branch
      %99 = sbr.rel (0) target = $region57
    $region56: #{tpu_custom_call.1} parent=1 // pred_region
      %100 = dma.done [#allocation3], 512
    $region57: #{tpu_custom_call.1} parent=1 // pred_fallthru
      _
    // Predicated region
    $region58: #{tpu_custom_call.1} parent=1 // pred_check
      _
    $region59: #{tpu_custom_call.1} parent=1 // pred_check_branch
      %102 = sbr.rel (0) target = $region61
    $region60: #{tpu_custom_call.1} parent=1 // pred_region
      %103 = dma.done [#allocation6], 512
    $region61: #{tpu_custom_call.1} parent=1 // pred_fallthru
      _
    // Predicated region
    $region62: #{tpu_custom_call.1} parent=1 // pred_check
      _
    $region63: #{tpu_custom_call.1} parent=1 // pred_check_branch
      %105 = sbr.rel (0) target = $region65
    $region64: #{tpu_custom_call.1} parent=1 // pred_region
      %106 = dma.done [#allocation6], 512
    $region65: #{tpu_custom_call.1} parent=1 // pred_fallthru
      _
    // Predicated region
    $region66: #{tpu_custom_call.1} parent=1 // pred_check
      _
    $region67: #{tpu_custom_call.1} parent=1 // pred_check_branch
      %108 = sbr.rel (0) target = $region69
    $region68: #{tpu_custom_call.1} parent=1 // pred_region
      %109 = dma.done [#allocation9], 2048
    $region69: #{tpu_custom_call.1} parent=1 // pred_fallthru
      _
    // Predicated region
    $region70: #{tpu_custom_call.1} parent=1 // pred_check
      _
    $region71: #{tpu_custom_call.1} parent=1 // pred_check_branch
      %111 = sbr.rel (0) target = $region73
    $region72: #{tpu_custom_call.1} parent=1 // pred_region
      %112 = dma.done [#allocation9], 2048
    $region73: #{tpu_custom_call.1} parent=1 // pred_fallthru
      _
    %v113 = vld [vmem:[#allocation2] sm:$0xff]
    %v114 = vld [vmem:[#allocation2 + $0x8] sm:$0xff]
    %v115 = vld [vmem:[#allocation2 + $0x10] sm:$0xff]
    %v116 = vld [vmem:[#allocation2 + $0x18] sm:$0xff]
    %v117 = vld [vmem:[#allocation5] sm:$0xff]
    %v118 = vld [vmem:[#allocation5 + $0x8] sm:$0xff]
    %v119 = vld [vmem:[#allocation5 + $0x10] sm:$0xff]
    %v120 = vld [vmem:[#allocation5 + $0x18] sm:$0xff]
    %v121 = vld [vmem:[#allocation7] sm:$0xff]
    %v122 = vld [vmem:[#allocation7 + $0x8] sm:$0xff]
    %v123 = vld [vmem:[#allocation7 + $0x10] sm:$0xff]
    %v124 = vld [vmem:[#allocation7 + $0x18] sm:$0xff]
    %v125 = vld [vmem:[%s6] sm:$0x1]
    %v126 = vld [vmem:[%s0] sm:$0xff]
    %v127 = vld [vmem:[%s1] sm:$0x3]
    %v128 = vld [vmem:[%s3] sm:$0x1]
    %v130 = vlaneseq
    %v131 = vshrl.u32 %v130, 7
    %v132 = vsub.s32 0, %v131
    %v133 = vrot.slane %v128, %v132
    %vm135 = vcmask 15360
    %v137 = vsel %vm135, %v126, 0
    %vm139 = vcmask 1041408
    %v141 = vsel %vm139, %v127, 0
    %143 = vmatprep.subr.mxu0 0.0
    %144 = vmatpush1.msra.mxu0 %v141
    %145 = vmatprep.subr.mxu0 0.0
    %146 = vmatpush1.msra.mxu0 0.0
    %147 = vmatprep.subr.mxu0 0.0
    %148 = vmatpush1.msra.mxu0 0.0
    %149 = vmatprep.subr.mxu0 0.0
    %150 = vmatpush1.msra.mxu0 0.0
    %151 = vmatprep.subr.mxu0 0.0
    %152 = vmatpush1.msra.mxu0 0.0
    %153 = vmatprep.subr.mxu0 0.0
    %154 = vmatpush1.msra.mxu0 0.0
    %155 = vmatprep.subr.mxu0 0.0
    %156 = vmatpush1.msra.mxu0 0.0
    %157 = vmatprep.subr.mxu0 0.0
    %158 = vmatpush1.msra.mxu0 0.0
    %159 = vmatprep.subr.mxu0 0.0
    %160 = vmatpush1.msra.mxu0 0.0
    %161 = vmatprep.subr.mxu0 0.0
    %162 = vmatpush1.msra.mxu0 0.0
    %163 = vmatprep.subr.mxu0 0.0
    %164 = vmatpush1.msra.mxu0 0.0
    %165 = vmatprep.subr.mxu0 0.0
    %166 = vmatpush1.msra.mxu0 0.0
    %167 = vmatprep.subr.mxu0 0.0
    %168 = vmatpush1.msra.mxu0 0.0
    %169 = vmatprep.subr.mxu0 0.0
    %170 = vmatpush1.msra.mxu0 0.0
    %171 = vmatprep.subr.mxu0 0.0
    %172 = vmatpush1.msra.mxu0 0.0
    %173 = vmatprep.subr.mxu0 0.0
    %174 = vmatpush1.msra.mxu0 0.0
    %175 = vmatprep.subr.mxu0 0.0
    %176 = vmatpush1.msra.mxu0 0.0
    %177 = vmatprep.subr.mxu0 0.0
    %178 = vmatpush1.msra.mxu0 0.0
    %179 = vmatprep.subr.mxu0 0.0
    %180 = vmatpush1.msra.mxu0 0.0
    %181 = vmatprep.subr.mxu0 0.0
    %182 = vmatpush1.msra.mxu0 0.0
    %183 = vmatprep.subr.mxu0 0.0
    %184 = vmatpush1.msra.mxu0 0.0
    %185 = vmatprep.subr.mxu0 0.0
    %186 = vmatpush1.msra.mxu0 0.0
    %187 = vmatprep.subr.mxu0 0.0
    %188 = vmatpush1.msra.mxu0 0.0
    %189 = vmatprep.subr.mxu0 0.0
    %190 = vmatpush1.msra.mxu0 0.0
    %191 = vmatprep.subr.mxu0 0.0
    %192 = vmatpush1.msra.mxu0 0.0
    %193 = vmatprep.subr.mxu0 0.0
    %194 = vmatpush1.msra.mxu0 0.0
    %195 = vmatprep.subr.mxu0 0.0
    %196 = vmatpush1.msra.mxu0 0.0
    %197 = vmatprep.subr.mxu0 0.0
    %198 = vmatpush1.msra.mxu0 0.0
    %199 = vmatprep.subr.mxu0 0.0
    %200 = vmatpush1.msra.mxu0 0.0
    %201 = vmatprep.subr.mxu0 0.0
    %202 = vmatpush1.msra.mxu0 0.0
    %203 = vmatprep.subr.mxu0 0.0
    %204 = vmatpush1.msra.mxu0 0.0
    %205 = vmatprep.subr.mxu0 0.0
    %206 = vmatpush1.msra.mxu0 0.0
    %207 = vmatprep.mubr.f32.mxu0 0.0
    %208 = vmatmul.mubr.f32.gmra.mrb[0].mxu0 %v137
    %v209 = vpop.f32.mrb[0].mxu0
    %v210 = vadd.f32 %v133, %v209
    %v211 = vpop.f32.mrb[0].mxu0
    %212 = vdwg.mxu0
    %vm213 = vcmask 261120
    %v215 = vsel %vm213, 0.0, 0
    %217 = vmatprep.subr.mxu0 0.0
    %218 = vmatpush1.msra.mxu0 %v121
    %219 = vmatprep.subr.mxu0 0.0
    %220 = vmatpush1.msra.mxu0 %v122
    %221 = vmatprep.subr.mxu0 0.0
    %222 = vmatpush1.msra.mxu0 %v123
    %223 = vmatprep.subr.mxu0 0.0
    %224 = vmatpush1.msra.mxu0 %v124
    %225 = vmatprep.subr.mxu0 0.0
    %226 = vmatpush1.msra.mxu0 0.0
    %227 = vmatprep.subr.mxu0 0.0
    %228 = vmatpush1.msra.mxu0 0.0
    %229 = vmatprep.subr.mxu0 0.0
    %230 = vmatpush1.msra.mxu0 0.0
    %231 = vmatprep.subr.mxu0 0.0
    %232 = vmatpush1.msra.mxu0 0.0
    %233 = vmatprep.subr.mxu0 0.0
    %234 = vmatpush1.msra.mxu0 0.0
    %235 = vmatprep.subr.mxu0 0.0
    %236 = vmatpush1.msra.mxu0 0.0
    %237 = vmatprep.subr.mxu0 0.0
    %238 = vmatpush1.msra.mxu0 0.0
    %239 = vmatprep.subr.mxu0 0.0
    %240 = vmatpush1.msra.mxu0 0.0
    %241 = vmatprep.subr.mxu0 0.0
    %242 = vmatpush1.msra.mxu0 0.0
    %243 = vmatprep.subr.mxu0 0.0
    %244 = vmatpush1.msra.mxu0 0.0
    %245 = vmatprep.subr.mxu0 0.0
    %246 = vmatpush1.msra.mxu0 0.0
    %247 = vmatprep.subr.mxu0 0.0
    %248 = vmatpush1.msra.mxu0 0.0
    %249 = vmatprep.subr.mxu0 0.0
    %250 = vmatpush1.msra.mxu0 0.0
    %251 = vmatprep.subr.mxu0 0.0
    %252 = vmatpush1.msra.mxu0 0.0
    %253 = vmatprep.subr.mxu0 0.0
    %254 = vmatpush1.msra.mxu0 0.0
    %255 = vmatprep.subr.mxu0 0.0
    %256 = vmatpush1.msra.mxu0 0.0
    %257 = vmatprep.subr.mxu0 0.0
    %258 = vmatpush1.msra.mxu0 0.0
    %259 = vmatprep.subr.mxu0 0.0
    %260 = vmatpush1.msra.mxu0 0.0
    %261 = vmatprep.subr.mxu0 0.0
    %262 = vmatpush1.msra.mxu0 0.0
    %263 = vmatprep.subr.mxu0 0.0
    %264 = vmatpush1.msra.mxu0 0.0
    %265 = vmatprep.subr.mxu0 0.0
    %266 = vmatpush1.msra.mxu0 0.0
    %267 = vmatprep.subr.mxu0 0.0
    %268 = vmatpush1.msra.mxu0 0.0
    %269 = vmatprep.subr.mxu0 0.0
    %270 = vmatpush1.msra.mxu0 0.0
    %271 = vmatprep.subr.mxu0 0.0
    %272 = vmatpush1.msra.mxu0 0.0
    %273 = vmatprep.subr.mxu0 0.0
    %274 = vmatpush1.msra.mxu0 0.0
    %275 = vmatprep.subr.mxu0 0.0
    %276 = vmatpush1.msra.mxu0 0.0
    %277 = vmatprep.subr.mxu0 0.0
    %278 = vmatpush1.msra.mxu0 0.0
    %279 = vmatprep.subr.mxu0 0.0
    %280 = vmatpush1.msra.mxu0 0.0
    %281 = vmatprep.mubr.f32.mxu0 0.0
    %282 = vmatmul.mubr.f32.gmra.mrb[0].mxu0 %v215
    %v283 = vpop.f32.mrb[0].mxu0
    %v284 = vadd.f32 %v125, %v283
    %v285 = vpop.f32.mrb[0].mxu0
    %286 = vdwg.mxu0
    %287 = vmatprep.subr.mxu0 0.0
    %288 = vmatpush1.msra.mxu0 %v113
    %289 = vmatprep.subr.mxu0 0.0
    %290 = vmatpush1.msra.mxu0 %v114
    %291 = vmatprep.subr.mxu0 0.0
    %292 = vmatpush1.msra.mxu0 %v115
    %293 = vmatprep.subr.mxu0 0.0
    %294 = vmatpush1.msra.mxu0 %v116
    %295 = vmatprep.subr.mxu0 0.0
    %296 = vmatpush1.msra.mxu0 0.0
    %297 = vmatprep.subr.mxu0 0.0
    %298 = vmatpush1.msra.mxu0 0.0
    %299 = vmatprep.subr.mxu0 0.0
    %300 = vmatpush1.msra.mxu0 0.0
    %301 = vmatprep.subr.mxu0 0.0
    %302 = vmatpush1.msra.mxu0 0.0
    %303 = vmatprep.subr.mxu0 0.0
    %304 = vmatpush1.msra.mxu0 0.0
    %305 = vmatprep.subr.mxu0 0.0
    %306 = vmatpush1.msra.mxu0 0.0
    %307 = vmatprep.subr.mxu0 0.0
    %308 = vmatpush1.msra.mxu0 0.0
    %309 = vmatprep.subr.mxu0 0.0
    %310 = vmatpush1.msra.mxu0 0.0
    %311 = vmatprep.subr.mxu0 0.0
    %312 = vmatpush1.msra.mxu0 0.0
    %313 = vmatprep.subr.mxu0 0.0
    %314 = vmatpush1.msra.mxu0 0.0
    %315 = vmatprep.subr.mxu0 0.0
    %316 = vmatpush1.msra.mxu0 0.0
    %317 = vmatprep.subr.mxu0 0.0
    %318 = vmatpush1.msra.mxu0 0.0
    %319 = vmatprep.subr.mxu0 0.0
    %320 = vmatpush1.msra.mxu0 0.0
    %321 = vmatprep.subr.mxu0 0.0
    %322 = vmatpush1.msra.mxu0 0.0
    %323 = vmatprep.subr.mxu0 0.0
    %324 = vmatpush1.msra.mxu0 0.0
    %325 = vmatprep.subr.mxu0 0.0
    %326 = vmatpush1.msra.mxu0 0.0
    %327 = vmatprep.subr.mxu0 0.0
    %328 = vmatpush1.msra.mxu0 0.0
    %329 = vmatprep.subr.mxu0 0.0
    %330 = vmatpush1.msra.mxu0 0.0
    %331 = vmatprep.subr.mxu0 0.0
    %332 = vmatpush1.msra.mxu0 0.0
    %333 = vmatprep.subr.mxu0 0.0
    %334 = vmatpush1.msra.mxu0 0.0
    %335 = vmatprep.subr.mxu0 0.0
    %336 = vmatpush1.msra.mxu0 0.0
    %337 = vmatprep.subr.mxu0 0.0
    %338 = vmatpush1.msra.mxu0 0.0
    %339 = vmatprep.subr.mxu0 0.0
    %340 = vmatpush1.msra.mxu0 0.0
    %341 = vmatprep.subr.mxu0 0.0
    %342 = vmatpush1.msra.mxu0 0.0
    %343 = vmatprep.subr.mxu0 0.0
    %344 = vmatpush1.msra.mxu0 0.0
    %345 = vmatprep.subr.mxu0 0.0
    %346 = vmatpush1.msra.mxu0 0.0
    %347 = vmatprep.subr.mxu0 0.0
    %348 = vmatpush1.msra.mxu0 0.0
    %349 = vmatprep.subr.mxu0 0.0
    %350 = vmatpush1.msra.mxu0 0.0
    %351 = vmatprep.mubr.f32.mxu0 0.0
    %352 = vmatmul.mubr.f32.gmra.mrb[0].mxu0 %v215
    %v353 = vpop.f32.mrb[0].mxu0
    %v354 = vadd.f32 0.0, %v353
    %v355 = vpop.f32.mrb[0].mxu0
    %356 = vdwg.mxu0
    %v357 = vadd.f32 %v210, %v354
    %v358 = vxor.u32 %v357, 2147483648
    %v359 = vmul.f32 %v358, 1.442695
    %v360 = vpow.pop %v359
    %v361 = vadd.f32 %v360, 1.0
    %v362 = vrcp.pop %v361
    %v363 = vmul.f32 1.0, %v362
    %v364 = vmul.f32 %v363, 2.0
    %v365 = vsub.f32 %v364, 1.0
    %v366 = vmul.f32 %v363, 0.0
    %368 = vrot.lane.b32.xlu0 %v365, 64
    %v369 = vpop.permute.xlu0 %368
    %v371 = vmul.f32 %v363, %v369
    %373 = vrot.lane.b32.xlu0 %v371, 32
    %v374 = vpop.permute.xlu0 %373
    %v376 = vadd.f32 %v366, %v374
    %v377 = vtanh.pop %v376
    %379 = vrot.lane.b32.xlu0 %v377, 64
    %v380 = vpop.permute.xlu0 %379
    %v382 = vmul.f32 %v363, %v380
    %384 = vrot.lane.b32.xlu0 %v382, 32
    %v385 = vpop.permute.xlu0 %384
    %v386 = vsel %vm213, %v385, 0
    %388 = vmatprep.subr.mxu0 0.0
    %389 = vmatpush1.msra.mxu0 %v117
    %390 = vmatprep.subr.mxu0 0.0
    %391 = vmatpush1.msra.mxu0 %v118
    %392 = vmatprep.subr.mxu0 0.0
    %393 = vmatpush1.msra.mxu0 %v119
    %394 = vmatprep.subr.mxu0 0.0
    %395 = vmatpush1.msra.mxu0 %v120
    %396 = vmatprep.subr.mxu0 0.0
    %397 = vmatpush1.msra.mxu0 0.0
    %398 = vmatprep.subr.mxu0 0.0
    %399 = vmatpush1.msra.mxu0 0.0
    %400 = vmatprep.subr.mxu0 0.0
    %401 = vmatpush1.msra.mxu0 0.0
    %402 = vmatprep.subr.mxu0 0.0
    %403 = vmatpush1.msra.mxu0 0.0
    %404 = vmatprep.subr.mxu0 0.0
    %405 = vmatpush1.msra.mxu0 0.0
    %406 = vmatprep.subr.mxu0 0.0
    %407 = vmatpush1.msra.mxu0 0.0
    %408 = vmatprep.subr.mxu0 0.0
    %409 = vmatpush1.msra.mxu0 0.0
    %410 = vmatprep.subr.mxu0 0.0
    %411 = vmatpush1.msra.mxu0 0.0
    %412 = vmatprep.subr.mxu0 0.0
    %413 = vmatpush1.msra.mxu0 0.0
    %414 = vmatprep.subr.mxu0 0.0
    %415 = vmatpush1.msra.mxu0 0.0
    %416 = vmatprep.subr.mxu0 0.0
    %417 = vmatpush1.msra.mxu0 0.0
    %418 = vmatprep.subr.mxu0 0.0
    %419 = vmatpush1.msra.mxu0 0.0
    %420 = vmatprep.subr.mxu0 0.0
    %421 = vmatpush1.msra.mxu0 0.0
    %422 = vmatprep.subr.mxu0 0.0
    %423 = vmatpush1.msra.mxu0 0.0
    %424 = vmatprep.subr.mxu0 0.0
    %425 = vmatpush1.msra.mxu0 0.0
    %426 = vmatprep.subr.mxu0 0.0
    %427 = vmatpush1.msra.mxu0 0.0
    %428 = vmatprep.subr.mxu0 0.0
    %429 = vmatpush1.msra.mxu0 0.0
    %430 = vmatprep.subr.mxu0 0.0
    %431 = vmatpush1.msra.mxu0 0.0
    %432 = vmatprep.subr.mxu0 0.0
    %433 = vmatpush1.msra.mxu0 0.0
    %434 = vmatprep.subr.mxu0 0.0
    %435 = vmatpush1.msra.mxu0 0.0
    %436 = vmatprep.subr.mxu0 0.0
    %437 = vmatpush1.msra.mxu0 0.0
    %438 = vmatprep.subr.mxu0 0.0
    %439 = vmatpush1.msra.mxu0 0.0
    %440 = vmatprep.subr.mxu0 0.0
    %441 = vmatpush1.msra.mxu0 0.0
    %442 = vmatprep.subr.mxu0 0.0
    %443 = vmatpush1.msra.mxu0 0.0
    %444 = vmatprep.subr.mxu0 0.0
    %445 = vmatpush1.msra.mxu0 0.0
    %446 = vmatprep.subr.mxu0 0.0
    %447 = vmatpush1.msra.mxu0 0.0
    %448 = vmatprep.subr.mxu0 0.0
    %449 = vmatpush1.msra.mxu0 0.0
    %450 = vmatprep.subr.mxu0 0.0
    %451 = vmatpush1.msra.mxu0 0.0
    %452 = vmatprep.mubr.f32.mxu0 0.0
    %453 = vmatmul.mubr.f32.gmra.mrb[0].mxu0 %v386
    %v454 = vpop.f32.mrb[0].mxu0
    %v455 = vadd.f32 0.0, %v454
    %v456 = vpop.f32.mrb[0].mxu0
    %457 = vdwg.mxu0
    %v458 = vadd.f32 %v284, %v455
    %v459 = vxor.u32 %v458, 2147483648
    %v460 = vmul.f32 %v459, 1.442695
    %v461 = vpow.pop %v460
    %v462 = vadd.f32 %v461, 1.0
    %v463 = vrcp.pop %v462
    %v464 = vmul.f32 1.0, %v463
    %v465 = vmul.f32 %v464, 2.0
    %v466 = vsub.f32 %v465, 1.0
    %v467 = vmul.f32 %v464, 0.0
    %469 = vrot.lane.b32.xlu0 %v466, 64
    %v470 = vpop.permute.xlu0 %469
    %v472 = vmul.f32 %v464, %v470
    %474 = vrot.lane.b32.xlu0 %v472, 32
    %v475 = vpop.permute.xlu0 %474
    %v477 = vadd.f32 %v467, %v475
    %v478 = vtanh.pop %v477
    %480 = vrot.lane.b32.xlu0 %v478, 64
    %v481 = vpop.permute.xlu0 %480
    %v483 = vmul.f32 %v464, %v481
    %485 = vrot.lane.b32.xlu0 %v483, 32
    %v486 = vpop.permute.xlu0 %485
    %v487 = vsel %vm213, %v486, 0
    %489 = vmatprep.subr.mxu0 0.0
    %490 = vmatpush1.msra.mxu0 %v121
    %491 = vmatprep.subr.mxu0 0.0
    %492 = vmatpush1.msra.mxu0 %v122
    %493 = vmatprep.subr.mxu0 0.0
    %494 = vmatpush1.msra.mxu0 %v123
    %495 = vmatprep.subr.mxu0 0.0
    %496 = vmatpush1.msra.mxu0 %v124
    %497 = vmatprep.subr.mxu0 0.0
    %498 = vmatpush1.msra.mxu0 0.0
    %499 = vmatprep.subr.mxu0 0.0
    %500 = vmatpush1.msra.mxu0 0.0
    %501 = vmatprep.subr.mxu0 0.0
    %502 = vmatpush1.msra.mxu0 0.0
    %503 = vmatprep.subr.mxu0 0.0
    %504 = vmatpush1.msra.mxu0 0.0
    %505 = vmatprep.subr.mxu0 0.0
    %506 = vmatpush1.msra.mxu0 0.0
    %507 = vmatprep.subr.mxu0 0.0
    %508 = vmatpush1.msra.mxu0 0.0
    %509 = vmatprep.subr.mxu0 0.0
    %510 = vmatpush1.msra.mxu0 0.0
    %511 = vmatprep.subr.mxu0 0.0
    %512 = vmatpush1.msra.mxu0 0.0
    %513 = vmatprep.subr.mxu0 0.0
    %514 = vmatpush1.msra.mxu0 0.0
    %515 = vmatprep.subr.mxu0 0.0
    %516 = vmatpush1.msra.mxu0 0.0
    %517 = vmatprep.subr.mxu0 0.0
    %518 = vmatpush1.msra.mxu0 0.0
    %519 = vmatprep.subr.mxu0 0.0
    %520 = vmatpush1.msra.mxu0 0.0
    %521 = vmatprep.subr.mxu0 0.0
    %522 = vmatpush1.msra.mxu0 0.0
    %523 = vmatprep.subr.mxu0 0.0
    %524 = vmatpush1.msra.mxu0 0.0
    %525 = vmatprep.subr.mxu0 0.0
    %526 = vmatpush1.msra.mxu0 0.0
    %527 = vmatprep.subr.mxu0 0.0
    %528 = vmatpush1.msra.mxu0 0.0
    %529 = vmatprep.subr.mxu0 0.0
    %530 = vmatpush1.msra.mxu0 0.0
    %531 = vmatprep.subr.mxu0 0.0
    %532 = vmatpush1.msra.mxu0 0.0
    %533 = vmatprep.subr.mxu0 0.0
    %534 = vmatpush1.msra.mxu0 0.0
    %535 = vmatprep.subr.mxu0 0.0
    %536 = vmatpush1.msra.mxu0 0.0
    %537 = vmatprep.subr.mxu0 0.0
    %538 = vmatpush1.msra.mxu0 0.0
    %539 = vmatprep.subr.mxu0 0.0
    %540 = vmatpush1.msra.mxu0 0.0
    %541 = vmatprep.subr.mxu0 0.0
    %542 = vmatpush1.msra.mxu0 0.0
    %543 = vmatprep.subr.mxu0 0.0
    %544 = vmatpush1.msra.mxu0 0.0
    %545 = vmatprep.subr.mxu0 0.0
    %546 = vmatpush1.msra.mxu0 0.0
    %547 = vmatprep.subr.mxu0 0.0
    %548 = vmatpush1.msra.mxu0 0.0
    %549 = vmatprep.subr.mxu0 0.0
    %550 = vmatpush1.msra.mxu0 0.0
    %551 = vmatprep.subr.mxu0 0.0
    %552 = vmatpush1.msra.mxu0 0.0
    %553 = vmatprep.mubr.f32.mxu0 0.0
    %554 = vmatmul.mubr.f32.gmra.mrb[0].mxu0 %v487
    %v555 = vpop.f32.mrb[0].mxu0
    %v556 = vadd.f32 %v125, %v555
    %v557 = vpop.f32.mrb[0].mxu0
    %558 = vdwg.mxu0
    %559 = vmatprep.subr.mxu0 0.0
    %560 = vmatpush1.msra.mxu0 %v113
    %561 = vmatprep.subr.mxu0 0.0
    %562 = vmatpush1.msra.mxu0 %v114
    %563 = vmatprep.subr.mxu0 0.0
    %564 = vmatpush1.msra.mxu0 %v115
    %565 = vmatprep.subr.mxu0 0.0
    %566 = vmatpush1.msra.mxu0 %v116
    %567 = vmatprep.subr.mxu0 0.0
    %568 = vmatpush1.msra.mxu0 0.0
    %569 = vmatprep.subr.mxu0 0.0
    %570 = vmatpush1.msra.mxu0 0.0
    %571 = vmatprep.subr.mxu0 0.0
    %572 = vmatpush1.msra.mxu0 0.0
    %573 = vmatprep.subr.mxu0 0.0
    %574 = vmatpush1.msra.mxu0 0.0
    %575 = vmatprep.subr.mxu0 0.0
    %576 = vmatpush1.msra.mxu0 0.0
    %577 = vmatprep.subr.mxu0 0.0
    %578 = vmatpush1.msra.mxu0 0.0
    %579 = vmatprep.subr.mxu0 0.0
    %580 = vmatpush1.msra.mxu0 0.0
    %581 = vmatprep.subr.mxu0 0.0
    %582 = vmatpush1.msra.mxu0 0.0
    %583 = vmatprep.subr.mxu0 0.0
    %584 = vmatpush1.msra.mxu0 0.0
    %585 = vmatprep.subr.mxu0 0.0
    %586 = vmatpush1.msra.mxu0 0.0
    %587 = vmatprep.subr.mxu0 0.0
    %588 = vmatpush1.msra.mxu0 0.0
    %589 = vmatprep.subr.mxu0 0.0
    %590 = vmatpush1.msra.mxu0 0.0
    %591 = vmatprep.subr.mxu0 0.0
    %592 = vmatpush1.msra.mxu0 0.0
    %593 = vmatprep.subr.mxu0 0.0
    %594 = vmatpush1.msra.mxu0 0.0
    %595 = vmatprep.subr.mxu0 0.0
    %596 = vmatpush1.msra.mxu0 0.0
    %597 = vmatprep.subr.mxu0 0.0
    %598 = vmatpush1.msra.mxu0 0.0
    %599 = vmatprep.subr.mxu0 0.0
    %600 = vmatpush1.msra.mxu0 0.0
    %601 = vmatprep.subr.mxu0 0.0
    %602 = vmatpush1.msra.mxu0 0.0
    %603 = vmatprep.subr.mxu0 0.0
    %604 = vmatpush1.msra.mxu0 0.0
    %605 = vmatprep.subr.mxu0 0.0
    %606 = vmatpush1.msra.mxu0 0.0
    %607 = vmatprep.subr.mxu0 0.0
    %608 = vmatpush1.msra.mxu0 0.0
    %609 = vmatprep.subr.mxu0 0.0
    %610 = vmatpush1.msra.mxu0 0.0
    %611 = vmatprep.subr.mxu0 0.0
    %612 = vmatpush1.msra.mxu0 0.0
    %613 = vmatprep.subr.mxu0 0.0
    %614 = vmatpush1.msra.mxu0 0.0
    %615 = vmatprep.subr.mxu0 0.0
    %616 = vmatpush1.msra.mxu0 0.0
    %617 = vmatprep.subr.mxu0 0.0
    %618 = vmatpush1.msra.mxu0 0.0
    %619 = vmatprep.subr.mxu0 0.0
    %620 = vmatpush1.msra.mxu0 0.0
    %621 = vmatprep.subr.mxu0 0.0
    %622 = vmatpush1.msra.mxu0 0.0
    %623 = vmatprep.mubr.f32.mxu0 0.0
    %624 = vmatmul.mubr.f32.gmra.mrb[0].mxu0 %v386
    %v625 = vpop.f32.mrb[0].mxu0
    %v626 = vadd.f32 0.0, %v625
    %v627 = vpop.f32.mrb[0].mxu0
    %628 = vdwg.mxu0
    %v630 = vrot.slane %v626, 7
    %v632 = vadd.f32 %v210, %v630
    %v633 = vxor.u32 %v632, 2147483648
    %v634 = vmul.f32 %v633, 1.442695
    %v635 = vpow.pop %v634
    %v636 = vadd.f32 %v635, 1.0
    %v637 = vrcp.pop %v636
    %v638 = vmul.f32 1.0, %v637
    %v639 = vmul.f32 %v638, 2.0
    %v640 = vsub.f32 %v639, 1.0
    %v642 = vrot.slane %v376, 7
    %v644 = vmul.f32 %v638, %v642
    %646 = vrot.lane.b32.xlu0 %v640, 64
    %v647 = vpop.permute.xlu0 %646
    %v649 = vmul.f32 %v638, %v647
    %651 = vrot.lane.b32.xlu0 %v649, 32
    %v652 = vpop.permute.xlu0 %651
    %v654 = vadd.f32 %v644, %v652
    %v655 = vtanh.pop %v654
    %657 = vrot.lane.b32.xlu0 %v655, 64
    %v658 = vpop.permute.xlu0 %657
    %v660 = vmul.f32 %v638, %v658
    %v662 = vrot.slane %v660, 1
    %663 = vrot.lane.b32.xlu0 %v662, 32
    %v664 = vpop.permute.xlu0 %663
    %v665 = vsel %vm213, %v664, 0
    %667 = vmatprep.subr.mxu0 0.0
    %668 = vmatpush1.msra.mxu0 %v117
    %669 = vmatprep.subr.mxu0 0.0
    %670 = vmatpush1.msra.mxu0 %v118
    %671 = vmatprep.subr.mxu0 0.0
    %672 = vmatpush1.msra.mxu0 %v119
    %673 = vmatprep.subr.mxu0 0.0
    %674 = vmatpush1.msra.mxu0 %v120
    %675 = vmatprep.subr.mxu0 0.0
    %676 = vmatpush1.msra.mxu0 0.0
    %677 = vmatprep.subr.mxu0 0.0
    %678 = vmatpush1.msra.mxu0 0.0
    %679 = vmatprep.subr.mxu0 0.0
    %680 = vmatpush1.msra.mxu0 0.0
    %681 = vmatprep.subr.mxu0 0.0
    %682 = vmatpush1.msra.mxu0 0.0
    %683 = vmatprep.subr.mxu0 0.0
    %684 = vmatpush1.msra.mxu0 0.0
    %685 = vmatprep.subr.mxu0 0.0
    %686 = vmatpush1.msra.mxu0 0.0
    %687 = vmatprep.subr.mxu0 0.0
    %688 = vmatpush1.msra.mxu0 0.0
    %689 = vmatprep.subr.mxu0 0.0
    %690 = vmatpush1.msra.mxu0 0.0
    %691 = vmatprep.subr.mxu0 0.0
    %692 = vmatpush1.msra.mxu0 0.0
    %693 = vmatprep.subr.mxu0 0.0
    %694 = vmatpush1.msra.mxu0 0.0
    %695 = vmatprep.subr.mxu0 0.0
    %696 = vmatpush1.msra.mxu0 0.0
    %697 = vmatprep.subr.mxu0 0.0
    %698 = vmatpush1.msra.mxu0 0.0
    %699 = vmatprep.subr.mxu0 0.0
    %700 = vmatpush1.msra.mxu0 0.0
    %701 = vmatprep.subr.mxu0 0.0
    %702 = vmatpush1.msra.mxu0 0.0
    %703 = vmatprep.subr.mxu0 0.0
    %704 = vmatpush1.msra.mxu0 0.0
    %705 = vmatprep.subr.mxu0 0.0
    %706 = vmatpush1.msra.mxu0 0.0
    %707 = vmatprep.subr.mxu0 0.0
    %708 = vmatpush1.msra.mxu0 0.0
    %709 = vmatprep.subr.mxu0 0.0
    %710 = vmatpush1.msra.mxu0 0.0
    %711 = vmatprep.subr.mxu0 0.0
    %712 = vmatpush1.msra.mxu0 0.0
    %713 = vmatprep.subr.mxu0 0.0
    %714 = vmatpush1.msra.mxu0 0.0
    %715 = vmatprep.subr.mxu0 0.0
    %716 = vmatpush1.msra.mxu0 0.0
    %717 = vmatprep.subr.mxu0 0.0
    %718 = vmatpush1.msra.mxu0 0.0
    %719 = vmatprep.subr.mxu0 0.0
    %720 = vmatpush1.msra.mxu0 0.0
    %721 = vmatprep.subr.mxu0 0.0
    %722 = vmatpush1.msra.mxu0 0.0
    %723 = vmatprep.subr.mxu0 0.0
    %724 = vmatpush1.msra.mxu0 0.0
    %725 = vmatprep.subr.mxu0 0.0
    %726 = vmatpush1.msra.mxu0 0.0
    %727 = vmatprep.subr.mxu0 0.0
    %728 = vmatpush1.msra.mxu0 0.0
    %729 = vmatprep.subr.mxu0 0.0
    %730 = vmatpush1.msra.mxu0 0.0
    %731 = vmatprep.mubr.f32.mxu0 0.0
    %732 = vmatmul.mubr.f32.gmra.mrb[0].mxu0 %v665
    %v733 = vpop.f32.mrb[0].mxu0
    %v734 = vadd.f32 0.0, %v733
    %v735 = vpop.f32.mrb[0].mxu0
    %736 = vdwg.mxu0
    %v737 = vadd.f32 %v556, %v734
    %v738 = vxor.u32 %v737, 2147483648
    %v739 = vmul.f32 %v738, 1.442695
    %v740 = vpow.pop %v739
    %v741 = vadd.f32 %v740, 1.0
    %v742 = vrcp.pop %v741
    %v743 = vmul.f32 1.0, %v742
    %v744 = vmul.f32 %v743, 2.0
    %v745 = vsub.f32 %v744, 1.0
    %v746 = vmul.f32 %v743, %v477
    %748 = vrot.lane.b32.xlu0 %v745, 64
    %v749 = vpop.permute.xlu0 %748
    %v751 = vmul.f32 %v743, %v749
    %753 = vrot.lane.b32.xlu0 %v751, 32
    %v754 = vpop.permute.xlu0 %753
    %v756 = vadd.f32 %v746, %v754
    %v757 = vtanh.pop %v756
    %759 = vrot.lane.b32.xlu0 %v757, 64
    %v760 = vpop.permute.xlu0 %759
    %v762 = vmul.f32 %v743, %v760
    %764 = vrot.lane.b32.xlu0 %v762, 32
    %v765 = vpop.permute.xlu0 %764
    %v766 = vsel %vm213, %v765, 0
    %768 = vmatprep.subr.mxu0 0.0
    %769 = vmatpush1.msra.mxu0 %v121
    %770 = vmatprep.subr.mxu0 0.0
    %771 = vmatpush1.msra.mxu0 %v122
    %772 = vmatprep.subr.mxu0 0.0
    %773 = vmatpush1.msra.mxu0 %v123
    %774 = vmatprep.subr.mxu0 0.0
    %775 = vmatpush1.msra.mxu0 %v124
    %776 = vmatprep.subr.mxu0 0.0
    %777 = vmatpush1.msra.mxu0 0.0
    %778 = vmatprep.subr.mxu0 0.0
    %779 = vmatpush1.msra.mxu0 0.0
    %780 = vmatprep.subr.mxu0 0.0
    %781 = vmatpush1.msra.mxu0 0.0
    %782 = vmatprep.subr.mxu0 0.0
    %783 = vmatpush1.msra.mxu0 0.0
    %784 = vmatprep.subr.mxu0 0.0
    %785 = vmatpush1.msra.mxu0 0.0
    %786 = vmatprep.subr.mxu0 0.0
    %787 = vmatpush1.msra.mxu0 0.0
    %788 = vmatprep.subr.mxu0 0.0
    %789 = vmatpush1.msra.mxu0 0.0
    %790 = vmatprep.subr.mxu0 0.0
    %791 = vmatpush1.msra.mxu0 0.0
    %792 = vmatprep.subr.mxu0 0.0
    %793 = vmatpush1.msra.mxu0 0.0
    %794 = vmatprep.subr.mxu0 0.0
    %795 = vmatpush1.msra.mxu0 0.0
    %796 = vmatprep.subr.mxu0 0.0
    %797 = vmatpush1.msra.mxu0 0.0
    %798 = vmatprep.subr.mxu0 0.0
    %799 = vmatpush1.msra.mxu0 0.0
    %800 = vmatprep.subr.mxu0 0.0
    %801 = vmatpush1.msra.mxu0 0.0
    %802 = vmatprep.subr.mxu0 0.0
    %803 = vmatpush1.msra.mxu0 0.0
    %804 = vmatprep.subr.mxu0 0.0
    %805 = vmatpush1.msra.mxu0 0.0
    %806 = vmatprep.subr.mxu0 0.0
    %807 = vmatpush1.msra.mxu0 0.0
    %808 = vmatprep.subr.mxu0 0.0
    %809 = vmatpush1.msra.mxu0 0.0
    %810 = vmatprep.subr.mxu0 0.0
    %811 = vmatpush1.msra.mxu0 0.0
    %812 = vmatprep.subr.mxu0 0.0
    %813 = vmatpush1.msra.mxu0 0.0
    %814 = vmatprep.subr.mxu0 0.0
    %815 = vmatpush1.msra.mxu0 0.0
    %816 = vmatprep.subr.mxu0 0.0
    %817 = vmatpush1.msra.mxu0 0.0
    %818 = vmatprep.subr.mxu0 0.0
    %819 = vmatpush1.msra.mxu0 0.0
    %820 = vmatprep.subr.mxu0 0.0
    %821 = vmatpush1.msra.mxu0 0.0
    %822 = vmatprep.subr.mxu0 0.0
    %823 = vmatpush1.msra.mxu0 0.0
    %824 = vmatprep.subr.mxu0 0.0
    %825 = vmatpush1.msra.mxu0 0.0
    %826 = vmatprep.subr.mxu0 0.0
    %827 = vmatpush1.msra.mxu0 0.0
    %828 = vmatprep.subr.mxu0 0.0
    %829 = vmatpush1.msra.mxu0 0.0
    %830 = vmatprep.subr.mxu0 0.0
    %831 = vmatpush1.msra.mxu0 0.0
    %832 = vmatprep.mubr.f32.mxu0 0.0
    %833 = vmatmul.mubr.f32.gmra.mrb[0].mxu0 %v766
    %v834 = vpop.f32.mrb[0].mxu0
    %v835 = vadd.f32 %v125, %v834
    %v836 = vpop.f32.mrb[0].mxu0
    %837 = vdwg.mxu0
    %838 = vmatprep.subr.mxu0 0.0
    %839 = vmatpush1.msra.mxu0 %v113
    %840 = vmatprep.subr.mxu0 0.0
    %841 = vmatpush1.msra.mxu0 %v114
    %842 = vmatprep.subr.mxu0 0.0
    %843 = vmatpush1.msra.mxu0 %v115
    %844 = vmatprep.subr.mxu0 0.0
    %845 = vmatpush1.msra.mxu0 %v116
    %846 = vmatprep.subr.mxu0 0.0
    %847 = vmatpush1.msra.mxu0 0.0
    %848 = vmatprep.subr.mxu0 0.0
    %849 = vmatpush1.msra.mxu0 0.0
    %850 = vmatprep.subr.mxu0 0.0
    %851 = vmatpush1.msra.mxu0 0.0
    %852 = vmatprep.subr.mxu0 0.0
    %853 = vmatpush1.msra.mxu0 0.0
    %854 = vmatprep.subr.mxu0 0.0
    %855 = vmatpush1.msra.mxu0 0.0
    %856 = vmatprep.subr.mxu0 0.0
    %857 = vmatpush1.msra.mxu0 0.0
    %858 = vmatprep.subr.mxu0 0.0
    %859 = vmatpush1.msra.mxu0 0.0
    %860 = vmatprep.subr.mxu0 0.0
    %861 = vmatpush1.msra.mxu0 0.0
    %862 = vmatprep.subr.mxu0 0.0
    %863 = vmatpush1.msra.mxu0 0.0
    %864 = vmatprep.subr.mxu0 0.0
    %865 = vmatpush1.msra.mxu0 0.0
    %866 = vmatprep.subr.mxu0 0.0
    %867 = vmatpush1.msra.mxu0 0.0
    %868 = vmatprep.subr.mxu0 0.0
    %869 = vmatpush1.msra.mxu0 0.0
    %870 = vmatprep.subr.mxu0 0.0
    %871 = vmatpush1.msra.mxu0 0.0
    %872 = vmatprep.subr.mxu0 0.0
    %873 = vmatpush1.msra.mxu0 0.0
    %874 = vmatprep.subr.mxu0 0.0
    %875 = vmatpush1.msra.mxu0 0.0
    %876 = vmatprep.subr.mxu0 0.0
    %877 = vmatpush1.msra.mxu0 0.0
    %878 = vmatprep.subr.mxu0 0.0
    %879 = vmatpush1.msra.mxu0 0.0
    %880 = vmatprep.subr.mxu0 0.0
    %881 = vmatpush1.msra.mxu0 0.0
    %882 = vmatprep.subr.mxu0 0.0
    %883 = vmatpush1.msra.mxu0 0.0
    %884 = vmatprep.subr.mxu0 0.0
    %885 = vmatpush1.msra.mxu0 0.0
    %886 = vmatprep.subr.mxu0 0.0
    %887 = vmatpush1.msra.mxu0 0.0
    %888 = vmatprep.subr.mxu0 0.0
    %889 = vmatpush1.msra.mxu0 0.0
    %890 = vmatprep.subr.mxu0 0.0
    %891 = vmatpush1.msra.mxu0 0.0
    %892 = vmatprep.subr.mxu0 0.0
    %893 = vmatpush1.msra.mxu0 0.0
    %894 = vmatprep.subr.mxu0 0.0
    %895 = vmatpush1.msra.mxu0 0.0
    %896 = vmatprep.subr.mxu0 0.0
    %897 = vmatpush1.msra.mxu0 0.0
    %898 = vmatprep.subr.mxu0 0.0
    %899 = vmatpush1.msra.mxu0 0.0
    %900 = vmatprep.subr.mxu0 0.0
    %901 = vmatpush1.msra.mxu0 0.0
    %902 = vmatprep.mubr.f32.mxu0 0.0
    %903 = vmatmul.mubr.f32.gmra.mrb[0].mxu0 %v665
    %v904 = vpop.f32.mrb[0].mxu0
    %v905 = vadd.f32 0.0, %v904
    %v906 = vpop.f32.mrb[0].mxu0
    %907 = vdwg.mxu0
    %v909 = vrot.slane %v905, 6
    %v911 = vadd.f32 %v210, %v909
    %v912 = vxor.u32 %v911, 2147483648
    %v913 = vmul.f32 %v912, 1.442695
    %v914 = vpow.pop %v913
    %v915 = vadd.f32 %v914, 1.0
    %v916 = vrcp.pop %v915
    %v917 = vmul.f32 1.0, %v916
    %v918 = vmul.f32 %v917, 2.0
    %v919 = vsub.f32 %v918, 1.0
    %v921 = vrot.slane %v654, 7
    %v923 = vmul.f32 %v917, %v921
    %925 = vrot.lane.b32.xlu0 %v919, 64
    %v926 = vpop.permute.xlu0 %925
    %v928 = vmul.f32 %v917, %v926
    %930 = vrot.lane.b32.xlu0 %v928, 32
    %v931 = vpop.permute.xlu0 %930
    %v933 = vadd.f32 %v923, %v931
    %v934 = vtanh.pop %v933
    %936 = vrot.lane.b32.xlu0 %v934, 64
    %v937 = vpop.permute.xlu0 %936
    %v939 = vmul.f32 %v917, %v937
    %v941 = vrot.slane %v939, 2
    %942 = vrot.lane.b32.xlu0 %v941, 32
    %v943 = vpop.permute.xlu0 %942
    %v944 = vsel %vm213, %v943, 0
    %946 = vmatprep.subr.mxu0 0.0
    %947 = vmatpush1.msra.mxu0 %v117
    %948 = vmatprep.subr.mxu0 0.0
    %949 = vmatpush1.msra.mxu0 %v118
    %950 = vmatprep.subr.mxu0 0.0
    %951 = vmatpush1.msra.mxu0 %v119
    %952 = vmatprep.subr.mxu0 0.0
    %953 = vmatpush1.msra.mxu0 %v120
    %954 = vmatprep.subr.mxu0 0.0
    %955 = vmatpush1.msra.mxu0 0.0
    %956 = vmatprep.subr.mxu0 0.0
    %957 = vmatpush1.msra.mxu0 0.0
    %958 = vmatprep.subr.mxu0 0.0
    %959 = vmatpush1.msra.mxu0 0.0
    %960 = vmatprep.subr.mxu0 0.0
    %961 = vmatpush1.msra.mxu0 0.0
    %962 = vmatprep.subr.mxu0 0.0
    %963 = vmatpush1.msra.mxu0 0.0
    %964 = vmatprep.subr.mxu0 0.0
    %965 = vmatpush1.msra.mxu0 0.0
    %966 = vmatprep.subr.mxu0 0.0
    %967 = vmatpush1.msra.mxu0 0.0
    %968 = vmatprep.subr.mxu0 0.0
    %969 = vmatpush1.msra.mxu0 0.0
    %970 = vmatprep.subr.mxu0 0.0
    %971 = vmatpush1.msra.mxu0 0.0
    %972 = vmatprep.subr.mxu0 0.0
    %973 = vmatpush1.msra.mxu0 0.0
    %974 = vmatprep.subr.mxu0 0.0
    %975 = vmatpush1.msra.mxu0 0.0
    %976 = vmatprep.subr.mxu0 0.0
    %977 = vmatpush1.msra.mxu0 0.0
    %978 = vmatprep.subr.mxu0 0.0
    %979 = vmatpush1.msra.mxu0 0.0
    %980 = vmatprep.subr.mxu0 0.0
    %981 = vmatpush1.msra.mxu0 0.0
    %982 = vmatprep.subr.mxu0 0.0
    %983 = vmatpush1.msra.mxu0 0.0
    %984 = vmatprep.subr.mxu0 0.0
    %985 = vmatpush1.msra.mxu0 0.0
    %986 = vmatprep.subr.mxu0 0.0
    %987 = vmatpush1.msra.mxu0 0.0
    %988 = vmatprep.subr.mxu0 0.0
    %989 = vmatpush1.msra.mxu0 0.0
    %990 = vmatprep.subr.mxu0 0.0
    %991 = vmatpush1.msra.mxu0 0.0
    %992 = vmatprep.subr.mxu0 0.0
    %993 = vmatpush1.msra.mxu0 0.0
    %994 = vmatprep.subr.mxu0 0.0
    %995 = vmatpush1.msra.mxu0 0.0
    %996 = vmatprep.subr.mxu0 0.0
    %997 = vmatpush1.msra.mxu0 0.0
    %998 = vmatprep.subr.mxu0 0.0
    %999 = vmatpush1.msra.mxu0 0.0
    %1000 = vmatprep.subr.mxu0 0.0
    %1001 = vmatpush1.msra.mxu0 0.0
    %1002 = vmatprep.subr.mxu0 0.0
    %1003 = vmatpush1.msra.mxu0 0.0
    %1004 = vmatprep.subr.mxu0 0.0
    %1005 = vmatpush1.msra.mxu0 0.0
    %1006 = vmatprep.subr.mxu0 0.0
    %1007 = vmatpush1.msra.mxu0 0.0
    %1008 = vmatprep.subr.mxu0 0.0
    %1009 = vmatpush1.msra.mxu0 0.0
    %1010 = vmatprep.mubr.f32.mxu0 0.0
    %1011 = vmatmul.mubr.f32.gmra.mrb[0].mxu0 %v944
    %v1012 = vpop.f32.mrb[0].mxu0
    %v1013 = vadd.f32 0.0, %v1012
    %v1014 = vpop.f32.mrb[0].mxu0
    %1015 = vdwg.mxu0
    %v1016 = vadd.f32 %v835, %v1013
    %v1017 = vxor.u32 %v1016, 2147483648
    %v1018 = vmul.f32 %v1017, 1.442695
    %v1019 = vpow.pop %v1018
    %v1020 = vadd.f32 %v1019, 1.0
    %v1021 = vrcp.pop %v1020
    %v1022 = vmul.f32 1.0, %v1021
    %v1023 = vmul.f32 %v1022, 2.0
    %v1024 = vsub.f32 %v1023, 1.0
    %v1025 = vmul.f32 %v1022, %v756
    %1027 = vrot.lane.b32.xlu0 %v1024, 64
    %v1028 = vpop.permute.xlu0 %1027
    %v1030 = vmul.f32 %v1022, %v1028
    %1032 = vrot.lane.b32.xlu0 %v1030, 32
    %v1033 = vpop.permute.xlu0 %1032
    %v1035 = vadd.f32 %v1025, %v1033
    %v1036 = vtanh.pop %v1035
    %1038 = vrot.lane.b32.xlu0 %v1036, 64
    %v1039 = vpop.permute.xlu0 %1038
    %v1041 = vmul.f32 %v1022, %v1039
    %1043 = vrot.lane.b32.xlu0 %v1041, 32
    %v1044 = vpop.permute.xlu0 %1043
    %v1045 = vsel %vm213, %v1044, 0
    %1047 = vmatprep.subr.mxu0 0.0
    %1048 = vmatpush1.msra.mxu0 %v121
    %1049 = vmatprep.subr.mxu0 0.0
    %1050 = vmatpush1.msra.mxu0 %v122
    %1051 = vmatprep.subr.mxu0 0.0
    %1052 = vmatpush1.msra.mxu0 %v123
    %1053 = vmatprep.subr.mxu0 0.0
    %1054 = vmatpush1.msra.mxu0 %v124
    %1055 = vmatprep.subr.mxu0 0.0
    %1056 = vmatpush1.msra.mxu0 0.0
    %1057 = vmatprep.subr.mxu0 0.0
    %1058 = vmatpush1.msra.mxu0 0.0
    %1059 = vmatprep.subr.mxu0 0.0
    %1060 = vmatpush1.msra.mxu0 0.0
    %1061 = vmatprep.subr.mxu0 0.0
    %1062 = vmatpush1.msra.mxu0 0.0
    %1063 = vmatprep.subr.mxu0 0.0
    %1064 = vmatpush1.msra.mxu0 0.0
    %1065 = vmatprep.subr.mxu0 0.0
    %1066 = vmatpush1.msra.mxu0 0.0
    %1067 = vmatprep.subr.mxu0 0.0
    %1068 = vmatpush1.msra.mxu0 0.0
    %1069 = vmatprep.subr.mxu0 0.0
    %1070 = vmatpush1.msra.mxu0 0.0
    %1071 = vmatprep.subr.mxu0 0.0
    %1072 = vmatpush1.msra.mxu0 0.0
    %1073 = vmatprep.subr.mxu0 0.0
    %1074 = vmatpush1.msra.mxu0 0.0
    %1075 = vmatprep.subr.mxu0 0.0
    %1076 = vmatpush1.msra.mxu0 0.0
    %1077 = vmatprep.subr.mxu0 0.0
    %1078 = vmatpush1.msra.mxu0 0.0
    %1079 = vmatprep.subr.mxu0 0.0
    %1080 = vmatpush1.msra.mxu0 0.0
    %1081 = vmatprep.subr.mxu0 0.0
    %1082 = vmatpush1.msra.mxu0 0.0
    %1083 = vmatprep.subr.mxu0 0.0
    %1084 = vmatpush1.msra.mxu0 0.0
    %1085 = vmatprep.subr.mxu0 0.0
    %1086 = vmatpush1.msra.mxu0 0.0
    %1087 = vmatprep.subr.mxu0 0.0
    %1088 = vmatpush1.msra.mxu0 0.0
    %1089 = vmatprep.subr.mxu0 0.0
    %1090 = vmatpush1.msra.mxu0 0.0
    %1091 = vmatprep.subr.mxu0 0.0
    %1092 = vmatpush1.msra.mxu0 0.0
    %1093 = vmatprep.subr.mxu0 0.0
    %1094 = vmatpush1.msra.mxu0 0.0
    %1095 = vmatprep.subr.mxu0 0.0
    %1096 = vmatpush1.msra.mxu0 0.0
    %1097 = vmatprep.subr.mxu0 0.0
    %1098 = vmatpush1.msra.mxu0 0.0
    %1099 = vmatprep.subr.mxu0 0.0
    %1100 = vmatpush1.msra.mxu0 0.0
    %1101 = vmatprep.subr.mxu0 0.0
    %1102 = vmatpush1.msra.mxu0 0.0
    %1103 = vmatprep.subr.mxu0 0.0
    %1104 = vmatpush1.msra.mxu0 0.0
    %1105 = vmatprep.subr.mxu0 0.0
    %1106 = vmatpush1.msra.mxu0 0.0
    %1107 = vmatprep.subr.mxu0 0.0
    %1108 = vmatpush1.msra.mxu0 0.0
    %1109 = vmatprep.subr.mxu0 0.0
    %1110 = vmatpush1.msra.mxu0 0.0
    %1111 = vmatprep.mubr.f32.mxu0 0.0
    %1112 = vmatmul.mubr.f32.gmra.mrb[0].mxu0 %v1045
    %v1113 = vpop.f32.mrb[0].mxu0
    %v1114 = vadd.f32 %v125, %v1113
    %v1115 = vpop.f32.mrb[0].mxu0
    %1116 = vdwg.mxu0
    %1117 = vmatprep.subr.mxu0 0.0
    %1118 = vmatpush1.msra.mxu0 %v113
    %1119 = vmatprep.subr.mxu0 0.0
    %1120 = vmatpush1.msra.mxu0 %v114
    %1121 = vmatprep.subr.mxu0 0.0
    %1122 = vmatpush1.msra.mxu0 %v115
    %1123 = vmatprep.subr.mxu0 0.0
    %1124 = vmatpush1.msra.mxu0 %v116
    %1125 = vmatprep.subr.mxu0 0.0
    %1126 = vmatpush1.msra.mxu0 0.0
    %1127 = vmatprep.subr.mxu0 0.0
    %1128 = vmatpush1.msra.mxu0 0.0
    %1129 = vmatprep.subr.mxu0 0.0
    %1130 = vmatpush1.msra.mxu0 0.0
    %1131 = vmatprep.subr.mxu0 0.0
    %1132 = vmatpush1.msra.mxu0 0.0
    %1133 = vmatprep.subr.mxu0 0.0
    %1134 = vmatpush1.msra.mxu0 0.0
    %1135 = vmatprep.subr.mxu0 0.0
    %1136 = vmatpush1.msra.mxu0 0.0
    %1137 = vmatprep.subr.mxu0 0.0
    %1138 = vmatpush1.msra.mxu0 0.0
    %1139 = vmatprep.subr.mxu0 0.0
    %1140 = vmatpush1.msra.mxu0 0.0
    %1141 = vmatprep.subr.mxu0 0.0
    %1142 = vmatpush1.msra.mxu0 0.0
    %1143 = vmatprep.subr.mxu0 0.0
    %1144 = vmatpush1.msra.mxu0 0.0
    %1145 = vmatprep.subr.mxu0 0.0
    %1146 = vmatpush1.msra.mxu0 0.0
    %1147 = vmatprep.subr.mxu0 0.0
    %1148 = vmatpush1.msra.mxu0 0.0
    %1149 = vmatprep.subr.mxu0 0.0
    %1150 = vmatpush1.msra.mxu0 0.0
    %1151 = vmatprep.subr.mxu0 0.0
    %1152 = vmatpush1.msra.mxu0 0.0
    %1153 = vmatprep.subr.mxu0 0.0
    %1154 = vmatpush1.msra.mxu0 0.0
    %1155 = vmatprep.subr.mxu0 0.0
    %1156 = vmatpush1.msra.mxu0 0.0
    %1157 = vmatprep.subr.mxu0 0.0
    %1158 = vmatpush1.msra.mxu0 0.0
    %1159 = vmatprep.subr.mxu0 0.0
    %1160 = vmatpush1.msra.mxu0 0.0
    %1161 = vmatprep.subr.mxu0 0.0
    %1162 = vmatpush1.msra.mxu0 0.0
    %1163 = vmatprep.subr.mxu0 0.0
    %1164 = vmatpush1.msra.mxu0 0.0
    %1165 = vmatprep.subr.mxu0 0.0
    %1166 = vmatpush1.msra.mxu0 0.0
    %1167 = vmatprep.subr.mxu0 0.0
    %1168 = vmatpush1.msra.mxu0 0.0
    %1169 = vmatprep.subr.mxu0 0.0
    %1170 = vmatpush1.msra.mxu0 0.0
    %1171 = vmatprep.subr.mxu0 0.0
    %1172 = vmatpush1.msra.mxu0 0.0
    %1173 = vmatprep.subr.mxu0 0.0
    %1174 = vmatpush1.msra.mxu0 0.0
    %1175 = vmatprep.subr.mxu0 0.0
    %1176 = vmatpush1.msra.mxu0 0.0
    %1177 = vmatprep.subr.mxu0 0.0
    %1178 = vmatpush1.msra.mxu0 0.0
    %1179 = vmatprep.subr.mxu0 0.0
    %1180 = vmatpush1.msra.mxu0 0.0
    %1181 = vmatprep.mubr.f32.mxu0 0.0
    %1182 = vmatmul.mubr.f32.gmra.mrb[0].mxu0 %v944
    %v1183 = vpop.f32.mrb[0].mxu0
    %v1184 = vadd.f32 0.0, %v1183
    %v1185 = vpop.f32.mrb[0].mxu0
    %1186 = vdwg.mxu0
    %v1188 = vrot.slane %v1184, 5
    %v1190 = vadd.f32 %v210, %v1188
    %v1191 = vxor.u32 %v1190, 2147483648
    %v1192 = vmul.f32 %v1191, 1.442695
    %v1193 = vpow.pop %v1192
    %v1194 = vadd.f32 %v1193, 1.0
    %v1195 = vrcp.pop %v1194
    %v1196 = vmul.f32 1.0, %v1195
    %v1197 = vmul.f32 %v1196, 2.0
    %v1198 = vsub.f32 %v1197, 1.0
    %v1200 = vrot.slane %v933, 7
    %v1202 = vmul.f32 %v1196, %v1200
    %1204 = vrot.lane.b32.xlu0 %v1198, 64
    %v1205 = vpop.permute.xlu0 %1204
    %v1207 = vmul.f32 %v1196, %v1205
    %1209 = vrot.lane.b32.xlu0 %v1207, 32
    %v1210 = vpop.permute.xlu0 %1209
    %v1212 = vadd.f32 %v1202, %v1210
    %v1213 = vtanh.pop %v1212
    %1215 = vrot.lane.b32.xlu0 %v1213, 64
    %v1216 = vpop.permute.xlu0 %1215
    %v1218 = vmul.f32 %v1196, %v1216
    %v1220 = vrot.slane %v1218, 3
    %1221 = vrot.lane.b32.xlu0 %v1220, 32
    %v1222 = vpop.permute.xlu0 %1221
    %v1223 = vsel %vm213, %v1222, 0
    %1225 = vmatprep.subr.mxu0 0.0
    %1226 = vmatpush1.msra.mxu0 %v117
    %1227 = vmatprep.subr.mxu0 0.0
    %1228 = vmatpush1.msra.mxu0 %v118
    %1229 = vmatprep.subr.mxu0 0.0
    %1230 = vmatpush1.msra.mxu0 %v119
    %1231 = vmatprep.subr.mxu0 0.0
    %1232 = vmatpush1.msra.mxu0 %v120
    %1233 = vmatprep.subr.mxu0 0.0
    %1234 = vmatpush1.msra.mxu0 0.0
    %1235 = vmatprep.subr.mxu0 0.0
    %1236 = vmatpush1.msra.mxu0 0.0
    %1237 = vmatprep.subr.mxu0 0.0
    %1238 = vmatpush1.msra.mxu0 0.0
    %1239 = vmatprep.subr.mxu0 0.0
    %1240 = vmatpush1.msra.mxu0 0.0
    %1241 = vmatprep.subr.mxu0 0.0
    %1242 = vmatpush1.msra.mxu0 0.0
    %1243 = vmatprep.subr.mxu0 0.0
    %1244 = vmatpush1.msra.mxu0 0.0
    %1245 = vmatprep.subr.mxu0 0.0
    %1246 = vmatpush1.msra.mxu0 0.0
    %1247 = vmatprep.subr.mxu0 0.0
    %1248 = vmatpush1.msra.mxu0 0.0
    %1249 = vmatprep.subr.mxu0 0.0
    %1250 = vmatpush1.msra.mxu0 0.0
    %1251 = vmatprep.subr.mxu0 0.0
    %1252 = vmatpush1.msra.mxu0 0.0
    %1253 = vmatprep.subr.mxu0 0.0
    %1254 = vmatpush1.msra.mxu0 0.0
    %1255 = vmatprep.subr.mxu0 0.0
    %1256 = vmatpush1.msra.mxu0 0.0
    %1257 = vmatprep.subr.mxu0 0.0
    %1258 = vmatpush1.msra.mxu0 0.0
    %1259 = vmatprep.subr.mxu0 0.0
    %1260 = vmatpush1.msra.mxu0 0.0
    %1261 = vmatprep.subr.mxu0 0.0
    %1262 = vmatpush1.msra.mxu0 0.0
    %1263 = vmatprep.subr.mxu0 0.0
    %1264 = vmatpush1.msra.mxu0 0.0
    %1265 = vmatprep.subr.mxu0 0.0
    %1266 = vmatpush1.msra.mxu0 0.0
    %1267 = vmatprep.subr.mxu0 0.0
    %1268 = vmatpush1.msra.mxu0 0.0
    %1269 = vmatprep.subr.mxu0 0.0
    %1270 = vmatpush1.msra.mxu0 0.0
    %1271 = vmatprep.subr.mxu0 0.0
    %1272 = vmatpush1.msra.mxu0 0.0
    %1273 = vmatprep.subr.mxu0 0.0
    %1274 = vmatpush1.msra.mxu0 0.0
    %1275 = vmatprep.subr.mxu0 0.0
    %1276 = vmatpush1.msra.mxu0 0.0
    %1277 = vmatprep.subr.mxu0 0.0
    %1278 = vmatpush1.msra.mxu0 0.0
    %1279 = vmatprep.subr.mxu0 0.0
    %1280 = vmatpush1.msra.mxu0 0.0
    %1281 = vmatprep.subr.mxu0 0.0
    %1282 = vmatpush1.msra.mxu0 0.0
    %1283 = vmatprep.subr.mxu0 0.0
    %1284 = vmatpush1.msra.mxu0 0.0
    %1285 = vmatprep.subr.mxu0 0.0
    %1286 = vmatpush1.msra.mxu0 0.0
    %1287 = vmatprep.subr.mxu0 0.0
    %1288 = vmatpush1.msra.mxu0 0.0
    %1289 = vmatprep.mubr.f32.mxu0 0.0
    %1290 = vmatmul.mubr.f32.gmra.mrb[0].mxu0 %v1223
    %v1291 = vpop.f32.mrb[0].mxu0
    %v1292 = vadd.f32 0.0, %v1291
    %v1293 = vpop.f32.mrb[0].mxu0
    %1294 = vdwg.mxu0
    %v1295 = vadd.f32 %v1114, %v1292
    %v1296 = vxor.u32 %v1295, 2147483648
    %v1297 = vmul.f32 %v1296, 1.442695
    %v1298 = vpow.pop %v1297
    %v1299 = vadd.f32 %v1298, 1.0
    %v1300 = vrcp.pop %v1299
    %v1301 = vmul.f32 1.0, %v1300
    %v1302 = vmul.f32 %v1301, 2.0
    %v1303 = vsub.f32 %v1302, 1.0
    %v1304 = vmul.f32 %v1301, %v1035
    %1306 = vrot.lane.b32.xlu0 %v1303, 64
    %v1307 = vpop.permute.xlu0 %1306
    %v1309 = vmul.f32 %v1301, %v1307
    %1311 = vrot.lane.b32.xlu0 %v1309, 32
    %v1312 = vpop.permute.xlu0 %1311
    %v1314 = vadd.f32 %v1304, %v1312
    %v1315 = vtanh.pop %v1314
    %1317 = vrot.lane.b32.xlu0 %v1315, 64
    %v1318 = vpop.permute.xlu0 %1317
    %v1320 = vmul.f32 %v1301, %v1318
    %1322 = vrot.lane.b32.xlu0 %v1320, 32
    %v1323 = vpop.permute.xlu0 %1322
    %v1324 = vsel %vm213, %v1323, 0
    %1326 = vmatprep.subr.mxu0 0.0
    %1327 = vmatpush1.msra.mxu0 %v121
    %1328 = vmatprep.subr.mxu0 0.0
    %1329 = vmatpush1.msra.mxu0 %v122
    %1330 = vmatprep.subr.mxu0 0.0
    %1331 = vmatpush1.msra.mxu0 %v123
    %1332 = vmatprep.subr.mxu0 0.0
    %1333 = vmatpush1.msra.mxu0 %v124
    %1334 = vmatprep.subr.mxu0 0.0
    %1335 = vmatpush1.msra.mxu0 0.0
    %1336 = vmatprep.subr.mxu0 0.0
    %1337 = vmatpush1.msra.mxu0 0.0
    %1338 = vmatprep.subr.mxu0 0.0
    %1339 = vmatpush1.msra.mxu0 0.0
    %1340 = vmatprep.subr.mxu0 0.0
    %1341 = vmatpush1.msra.mxu0 0.0
    %1342 = vmatprep.subr.mxu0 0.0
    %1343 = vmatpush1.msra.mxu0 0.0
    %1344 = vmatprep.subr.mxu0 0.0
    %1345 = vmatpush1.msra.mxu0 0.0
    %1346 = vmatprep.subr.mxu0 0.0
    %1347 = vmatpush1.msra.mxu0 0.0
    %1348 = vmatprep.subr.mxu0 0.0
    %1349 = vmatpush1.msra.mxu0 0.0
    %1350 = vmatprep.subr.mxu0 0.0
    %1351 = vmatpush1.msra.mxu0 0.0
    %1352 = vmatprep.subr.mxu0 0.0
    %1353 = vmatpush1.msra.mxu0 0.0
    %1354 = vmatprep.subr.mxu0 0.0
    %1355 = vmatpush1.msra.mxu0 0.0
    %1356 = vmatprep.subr.mxu0 0.0
    %1357 = vmatpush1.msra.mxu0 0.0
    %1358 = vmatprep.subr.mxu0 0.0
    %1359 = vmatpush1.msra.mxu0 0.0
    %1360 = vmatprep.subr.mxu0 0.0
    %1361 = vmatpush1.msra.mxu0 0.0
    %1362 = vmatprep.subr.mxu0 0.0
    %1363 = vmatpush1.msra.mxu0 0.0
    %1364 = vmatprep.subr.mxu0 0.0
    %1365 = vmatpush1.msra.mxu0 0.0
    %1366 = vmatprep.subr.mxu0 0.0
    %1367 = vmatpush1.msra.mxu0 0.0
    %1368 = vmatprep.subr.mxu0 0.0
    %1369 = vmatpush1.msra.mxu0 0.0
    %1370 = vmatprep.subr.mxu0 0.0
    %1371 = vmatpush1.msra.mxu0 0.0
    %1372 = vmatprep.subr.mxu0 0.0
    %1373 = vmatpush1.msra.mxu0 0.0
    %1374 = vmatprep.subr.mxu0 0.0
    %1375 = vmatpush1.msra.mxu0 0.0
    %1376 = vmatprep.subr.mxu0 0.0
    %1377 = vmatpush1.msra.mxu0 0.0
    %1378 = vmatprep.subr.mxu0 0.0
    %1379 = vmatpush1.msra.mxu0 0.0
    %1380 = vmatprep.subr.mxu0 0.0
    %1381 = vmatpush1.msra.mxu0 0.0
    %1382 = vmatprep.subr.mxu0 0.0
    %1383 = vmatpush1.msra.mxu0 0.0
    %1384 = vmatprep.subr.mxu0 0.0
    %1385 = vmatpush1.msra.mxu0 0.0
    %1386 = vmatprep.subr.mxu0 0.0
    %1387 = vmatpush1.msra.mxu0 0.0
    %1388 = vmatprep.subr.mxu0 0.0
    %1389 = vmatpush1.msra.mxu0 0.0
    %1390 = vmatprep.mubr.f32.mxu0 0.0
    %1391 = vmatmul.mubr.f32.gmra.mrb[0].mxu0 %v1324
    %v1392 = vpop.f32.mrb[0].mxu0
    %v1393 = vadd.f32 %v125, %v1392
    %v1394 = vpop.f32.mrb[0].mxu0
    %1395 = vdwg.mxu0
    %1396 = vmatprep.subr.mxu0 0.0
    %1397 = vmatpush1.msra.mxu0 %v113
    %1398 = vmatprep.subr.mxu0 0.0
    %1399 = vmatpush1.msra.mxu0 %v114
    %1400 = vmatprep.subr.mxu0 0.0
    %1401 = vmatpush1.msra.mxu0 %v115
    %1402 = vmatprep.subr.mxu0 0.0
    %1403 = vmatpush1.msra.mxu0 %v116
    %1404 = vmatprep.subr.mxu0 0.0
    %1405 = vmatpush1.msra.mxu0 0.0
    %1406 = vmatprep.subr.mxu0 0.0
    %1407 = vmatpush1.msra.mxu0 0.0
    %1408 = vmatprep.subr.mxu0 0.0
    %1409 = vmatpush1.msra.mxu0 0.0
    %1410 = vmatprep.subr.mxu0 0.0
    %1411 = vmatpush1.msra.mxu0 0.0
    %1412 = vmatprep.subr.mxu0 0.0
    %1413 = vmatpush1.msra.mxu0 0.0
    %1414 = vmatprep.subr.mxu0 0.0
    %1415 = vmatpush1.msra.mxu0 0.0
    %1416 = vmatprep.subr.mxu0 0.0
    %1417 = vmatpush1.msra.mxu0 0.0
    %1418 = vmatprep.subr.mxu0 0.0
    %1419 = vmatpush1.msra.mxu0 0.0
    %1420 = vmatprep.subr.mxu0 0.0
    %1421 = vmatpush1.msra.mxu0 0.0
    %1422 = vmatprep.subr.mxu0 0.0
    %1423 = vmatpush1.msra.mxu0 0.0
    %1424 = vmatprep.subr.mxu0 0.0
    %1425 = vmatpush1.msra.mxu0 0.0
    %1426 = vmatprep.subr.mxu0 0.0
    %1427 = vmatpush1.msra.mxu0 0.0
    %1428 = vmatprep.subr.mxu0 0.0
    %1429 = vmatpush1.msra.mxu0 0.0
    %1430 = vmatprep.subr.mxu0 0.0
    %1431 = vmatpush1.msra.mxu0 0.0
    %1432 = vmatprep.subr.mxu0 0.0
    %1433 = vmatpush1.msra.mxu0 0.0
    %1434 = vmatprep.subr.mxu0 0.0
    %1435 = vmatpush1.msra.mxu0 0.0
    %1436 = vmatprep.subr.mxu0 0.0
    %1437 = vmatpush1.msra.mxu0 0.0
    %1438 = vmatprep.subr.mxu0 0.0
    %1439 = vmatpush1.msra.mxu0 0.0
    %1440 = vmatprep.subr.mxu0 0.0
    %1441 = vmatpush1.msra.mxu0 0.0
    %1442 = vmatprep.subr.mxu0 0.0
    %1443 = vmatpush1.msra.mxu0 0.0
    %1444 = vmatprep.subr.mxu0 0.0
    %1445 = vmatpush1.msra.mxu0 0.0
    %1446 = vmatprep.subr.mxu0 0.0
    %1447 = vmatpush1.msra.mxu0 0.0
    %1448 = vmatprep.subr.mxu0 0.0
    %1449 = vmatpush1.msra.mxu0 0.0
    %1450 = vmatprep.subr.mxu0 0.0
    %1451 = vmatpush1.msra.mxu0 0.0
    %1452 = vmatprep.subr.mxu0 0.0
    %1453 = vmatpush1.msra.mxu0 0.0
    %1454 = vmatprep.subr.mxu0 0.0
    %1455 = vmatpush1.msra.mxu0 0.0
    %1456 = vmatprep.subr.mxu0 0.0
    %1457 = vmatpush1.msra.mxu0 0.0
    %1458 = vmatprep.subr.mxu0 0.0
    %1459 = vmatpush1.msra.mxu0 0.0
    %1460 = vmatprep.mubr.f32.mxu0 0.0
    %1461 = vmatmul.mubr.f32.gmra.mrb[0].mxu0 %v1223
    %v1462 = vpop.f32.mrb[0].mxu0
    %v1463 = vadd.f32 0.0, %v1462
    %v1464 = vpop.f32.mrb[0].mxu0
    %1465 = vdwg.mxu0
    %v1467 = vrot.slane %v1463, 4
    %v1469 = vadd.f32 %v210, %v1467
    %v1470 = vxor.u32 %v1469, 2147483648
    %v1471 = vmul.f32 %v1470, 1.442695
    %v1472 = vpow.pop %v1471
    %v1473 = vadd.f32 %v1472, 1.0
    %v1474 = vrcp.pop %v1473
    %v1475 = vmul.f32 1.0, %v1474
    %v1476 = vmul.f32 %v1475, 2.0
    %v1477 = vsub.f32 %v1476, 1.0
    %v1479 = vrot.slane %v1212, 7
    %v1481 = vmul.f32 %v1475, %v1479
    %1483 = vrot.lane.b32.xlu0 %v1477, 64
    %v1484 = vpop.permute.xlu0 %1483
    %v1486 = vmul.f32 %v1475, %v1484
    %1488 = vrot.lane.b32.xlu0 %v1486, 32
    %v1489 = vpop.permute.xlu0 %1488
    %v1491 = vadd.f32 %v1481, %v1489
    %v1492 = vtanh.pop %v1491
    %1494 = vrot.lane.b32.xlu0 %v1492, 64
    %v1495 = vpop.permute.xlu0 %1494
    %v1497 = vmul.f32 %v1475, %v1495
    %v1499 = vrot.slane %v1497, 4
    %1500 = vrot.lane.b32.xlu0 %v1499, 32
    %v1501 = vpop.permute.xlu0 %1500
    %v1502 = vsel %vm213, %v1501, 0
    %1504 = vmatprep.subr.mxu0 0.0
    %1505 = vmatpush1.msra.mxu0 %v117
    %1506 = vmatprep.subr.mxu0 0.0
    %1507 = vmatpush1.msra.mxu0 %v118
    %1508 = vmatprep.subr.mxu0 0.0
    %1509 = vmatpush1.msra.mxu0 %v119
    %1510 = vmatprep.subr.mxu0 0.0
    %1511 = vmatpush1.msra.mxu0 %v120
    %1512 = vmatprep.subr.mxu0 0.0
    %1513 = vmatpush1.msra.mxu0 0.0
    %1514 = vmatprep.subr.mxu0 0.0
    %1515 = vmatpush1.msra.mxu0 0.0
    %1516 = vmatprep.subr.mxu0 0.0
    %1517 = vmatpush1.msra.mxu0 0.0
    %1518 = vmatprep.subr.mxu0 0.0
    %1519 = vmatpush1.msra.mxu0 0.0
    %1520 = vmatprep.subr.mxu0 0.0
    %1521 = vmatpush1.msra.mxu0 0.0
    %1522 = vmatprep.subr.mxu0 0.0
    %1523 = vmatpush1.msra.mxu0 0.0
    %1524 = vmatprep.subr.mxu0 0.0
    %1525 = vmatpush1.msra.mxu0 0.0
    %1526 = vmatprep.subr.mxu0 0.0
    %1527 = vmatpush1.msra.mxu0 0.0
    %1528 = vmatprep.subr.mxu0 0.0
    %1529 = vmatpush1.msra.mxu0 0.0
    %1530 = vmatprep.subr.mxu0 0.0
    %1531 = vmatpush1.msra.mxu0 0.0
    %1532 = vmatprep.subr.mxu0 0.0
    %1533 = vmatpush1.msra.mxu0 0.0
    %1534 = vmatprep.subr.mxu0 0.0
    %1535 = vmatpush1.msra.mxu0 0.0
    %1536 = vmatprep.subr.mxu0 0.0
    %1537 = vmatpush1.msra.mxu0 0.0
    %1538 = vmatprep.subr.mxu0 0.0
    %1539 = vmatpush1.msra.mxu0 0.0
    %1540 = vmatprep.subr.mxu0 0.0
    %1541 = vmatpush1.msra.mxu0 0.0
    %1542 = vmatprep.subr.mxu0 0.0
    %1543 = vmatpush1.msra.mxu0 0.0
    %1544 = vmatprep.subr.mxu0 0.0
    %1545 = vmatpush1.msra.mxu0 0.0
    %1546 = vmatprep.subr.mxu0 0.0
    %1547 = vmatpush1.msra.mxu0 0.0
    %1548 = vmatprep.subr.mxu0 0.0
    %1549 = vmatpush1.msra.mxu0 0.0
    %1550 = vmatprep.subr.mxu0 0.0
    %1551 = vmatpush1.msra.mxu0 0.0
    %1552 = vmatprep.subr.mxu0 0.0
    %1553 = vmatpush1.msra.mxu0 0.0
    %1554 = vmatprep.subr.mxu0 0.0
    %1555 = vmatpush1.msra.mxu0 0.0
    %1556 = vmatprep.subr.mxu0 0.0
    %1557 = vmatpush1.msra.mxu0 0.0
    %1558 = vmatprep.subr.mxu0 0.0
    %1559 = vmatpush1.msra.mxu0 0.0
    %1560 = vmatprep.subr.mxu0 0.0
    %1561 = vmatpush1.msra.mxu0 0.0
    %1562 = vmatprep.subr.mxu0 0.0
    %1563 = vmatpush1.msra.mxu0 0.0
    %1564 = vmatprep.subr.mxu0 0.0
    %1565 = vmatpush1.msra.mxu0 0.0
    %1566 = vmatprep.subr.mxu0 0.0
    %1567 = vmatpush1.msra.mxu0 0.0
    %1568 = vmatprep.mubr.f32.mxu0 0.0
    %1569 = vmatmul.mubr.f32.gmra.mrb[0].mxu0 %v1502
    %v1570 = vpop.f32.mrb[0].mxu0
    %v1571 = vadd.f32 0.0, %v1570
    %v1572 = vpop.f32.mrb[0].mxu0
    %1573 = vdwg.mxu0
    %v1574 = vadd.f32 %v1393, %v1571
    %v1575 = vxor.u32 %v1574, 2147483648
    %v1576 = vmul.f32 %v1575, 1.442695
    %v1577 = vpow.pop %v1576
    %v1578 = vadd.f32 %v1577, 1.0
    %v1579 = vrcp.pop %v1578
    %v1580 = vmul.f32 1.0, %v1579
    %v1581 = vmul.f32 %v1580, 2.0
    %v1582 = vsub.f32 %v1581, 1.0
    %v1583 = vmul.f32 %v1580, %v1314
    %1585 = vrot.lane.b32.xlu0 %v1582, 64
    %v1586 = vpop.permute.xlu0 %1585
    %v1588 = vmul.f32 %v1580, %v1586
    %1590 = vrot.lane.b32.xlu0 %v1588, 32
    %v1591 = vpop.permute.xlu0 %1590
    %v1593 = vadd.f32 %v1583, %v1591
    %v1594 = vtanh.pop %v1593
    %1596 = vrot.lane.b32.xlu0 %v1594, 64
    %v1597 = vpop.permute.xlu0 %1596
    %v1599 = vmul.f32 %v1580, %v1597
    %1601 = vrot.lane.b32.xlu0 %v1599, 32
    %v1602 = vpop.permute.xlu0 %1601
    %v1603 = vsel %vm213, %v1602, 0
    %1605 = vmatprep.subr.mxu0 0.0
    %1606 = vmatpush1.msra.mxu0 %v121
    %1607 = vmatprep.subr.mxu0 0.0
    %1608 = vmatpush1.msra.mxu0 %v122
    %1609 = vmatprep.subr.mxu0 0.0
    %1610 = vmatpush1.msra.mxu0 %v123
    %1611 = vmatprep.subr.mxu0 0.0
    %1612 = vmatpush1.msra.mxu0 %v124
    %1613 = vmatprep.subr.mxu0 0.0
    %1614 = vmatpush1.msra.mxu0 0.0
    %1615 = vmatprep.subr.mxu0 0.0
    %1616 = vmatpush1.msra.mxu0 0.0
    %1617 = vmatprep.subr.mxu0 0.0
    %1618 = vmatpush1.msra.mxu0 0.0
    %1619 = vmatprep.subr.mxu0 0.0
    %1620 = vmatpush1.msra.mxu0 0.0
    %1621 = vmatprep.subr.mxu0 0.0
    %1622 = vmatpush1.msra.mxu0 0.0
    %1623 = vmatprep.subr.mxu0 0.0
    %1624 = vmatpush1.msra.mxu0 0.0
    %1625 = vmatprep.subr.mxu0 0.0
    %1626 = vmatpush1.msra.mxu0 0.0
    %1627 = vmatprep.subr.mxu0 0.0
    %1628 = vmatpush1.msra.mxu0 0.0
    %1629 = vmatprep.subr.mxu0 0.0
    %1630 = vmatpush1.msra.mxu0 0.0
    %1631 = vmatprep.subr.mxu0 0.0
    %1632 = vmatpush1.msra.mxu0 0.0
    %1633 = vmatprep.subr.mxu0 0.0
    %1634 = vmatpush1.msra.mxu0 0.0
    %1635 = vmatprep.subr.mxu0 0.0
    %1636 = vmatpush1.msra.mxu0 0.0
    %1637 = vmatprep.subr.mxu0 0.0
    %1638 = vmatpush1.msra.mxu0 0.0
    %1639 = vmatprep.subr.mxu0 0.0
    %1640 = vmatpush1.msra.mxu0 0.0
    %1641 = vmatprep.subr.mxu0 0.0
    %1642 = vmatpush1.msra.mxu0 0.0
    %1643 = vmatprep.subr.mxu0 0.0
    %1644 = vmatpush1.msra.mxu0 0.0
    %1645 = vmatprep.subr.mxu0 0.0
    %1646 = vmatpush1.msra.mxu0 0.0
    %1647 = vmatprep.subr.mxu0 0.0
    %1648 = vmatpush1.msra.mxu0 0.0
    %1649 = vmatprep.subr.mxu0 0.0
    %1650 = vmatpush1.msra.mxu0 0.0
    %1651 = vmatprep.subr.mxu0 0.0
    %1652 = vmatpush1.msra.mxu0 0.0
    %1653 = vmatprep.subr.mxu0 0.0
    %1654 = vmatpush1.msra.mxu0 0.0
    %1655 = vmatprep.subr.mxu0 0.0
    %1656 = vmatpush1.msra.mxu0 0.0
    %1657 = vmatprep.subr.mxu0 0.0
    %1658 = vmatpush1.msra.mxu0 0.0
    %1659 = vmatprep.subr.mxu0 0.0
    %1660 = vmatpush1.msra.mxu0 0.0
    %1661 = vmatprep.subr.mxu0 0.0
    %1662 = vmatpush1.msra.mxu0 0.0
    %1663 = vmatprep.subr.mxu0 0.0
    %1664 = vmatpush1.msra.mxu0 0.0
    %1665 = vmatprep.subr.mxu0 0.0
    %1666 = vmatpush1.msra.mxu0 0.0
    %1667 = vmatprep.subr.mxu0 0.0
    %1668 = vmatpush1.msra.mxu0 0.0
    %1669 = vmatprep.mubr.f32.mxu0 0.0
    %1670 = vmatmul.mubr.f32.gmra.mrb[0].mxu0 %v1603
    %v1671 = vpop.f32.mrb[0].mxu0
    %v1672 = vadd.f32 %v125, %v1671
    %v1673 = vpop.f32.mrb[0].mxu0
    %1674 = vdwg.mxu0
    %1675 = vmatprep.subr.mxu0 0.0
    %1676 = vmatpush1.msra.mxu0 %v113
    %1677 = vmatprep.subr.mxu0 0.0
    %1678 = vmatpush1.msra.mxu0 %v114
    %1679 = vmatprep.subr.mxu0 0.0
    %1680 = vmatpush1.msra.mxu0 %v115
    %1681 = vmatprep.subr.mxu0 0.0
    %1682 = vmatpush1.msra.mxu0 %v116
    %1683 = vmatprep.subr.mxu0 0.0
    %1684 = vmatpush1.msra.mxu0 0.0
    %1685 = vmatprep.subr.mxu0 0.0
    %1686 = vmatpush1.msra.mxu0 0.0
    %1687 = vmatprep.subr.mxu0 0.0
    %1688 = vmatpush1.msra.mxu0 0.0
    %1689 = vmatprep.subr.mxu0 0.0
    %1690 = vmatpush1.msra.mxu0 0.0
    %1691 = vmatprep.subr.mxu0 0.0
    %1692 = vmatpush1.msra.mxu0 0.0
    %1693 = vmatprep.subr.mxu0 0.0
    %1694 = vmatpush1.msra.mxu0 0.0
    %1695 = vmatprep.subr.mxu0 0.0
    %1696 = vmatpush1.msra.mxu0 0.0
    %1697 = vmatprep.subr.mxu0 0.0
    %1698 = vmatpush1.msra.mxu0 0.0
    %1699 = vmatprep.subr.mxu0 0.0
    %1700 = vmatpush1.msra.mxu0 0.0
    %1701 = vmatprep.subr.mxu0 0.0
    %1702 = vmatpush1.msra.mxu0 0.0
    %1703 = vmatprep.subr.mxu0 0.0
    %1704 = vmatpush1.msra.mxu0 0.0
    %1705 = vmatprep.subr.mxu0 0.0
    %1706 = vmatpush1.msra.mxu0 0.0
    %1707 = vmatprep.subr.mxu0 0.0
    %1708 = vmatpush1.msra.mxu0 0.0
    %1709 = vmatprep.subr.mxu0 0.0
    %1710 = vmatpush1.msra.mxu0 0.0
    %1711 = vmatprep.subr.mxu0 0.0
    %1712 = vmatpush1.msra.mxu0 0.0
    %1713 = vmatprep.subr.mxu0 0.0
    %1714 = vmatpush1.msra.mxu0 0.0
    %1715 = vmatprep.subr.mxu0 0.0
    %1716 = vmatpush1.msra.mxu0 0.0
    %1717 = vmatprep.subr.mxu0 0.0
    %1718 = vmatpush1.msra.mxu0 0.0
    %1719 = vmatprep.subr.mxu0 0.0
    %1720 = vmatpush1.msra.mxu0 0.0
    %1721 = vmatprep.subr.mxu0 0.0
    %1722 = vmatpush1.msra.mxu0 0.0
    %1723 = vmatprep.subr.mxu0 0.0
    %1724 = vmatpush1.msra.mxu0 0.0
    %1725 = vmatprep.subr.mxu0 0.0
    %1726 = vmatpush1.msra.mxu0 0.0
    %1727 = vmatprep.subr.mxu0 0.0
    %1728 = vmatpush1.msra.mxu0 0.0
    %1729 = vmatprep.subr.mxu0 0.0
    %1730 = vmatpush1.msra.mxu0 0.0
    %1731 = vmatprep.subr.mxu0 0.0
    %1732 = vmatpush1.msra.mxu0 0.0
    %1733 = vmatprep.subr.mxu0 0.0
    %1734 = vmatpush1.msra.mxu0 0.0
    %1735 = vmatprep.subr.mxu0 0.0
    %1736 = vmatpush1.msra.mxu0 0.0
    %1737 = vmatprep.subr.mxu0 0.0
    %1738 = vmatpush1.msra.mxu0 0.0
    %1739 = vmatprep.mubr.f32.mxu0 0.0
    %1740 = vmatmul.mubr.f32.gmra.mrb[0].mxu0 %v1502
    %v1741 = vpop.f32.mrb[0].mxu0
    %v1742 = vadd.f32 0.0, %v1741
    %v1743 = vpop.f32.mrb[0].mxu0
    %1744 = vdwg.mxu0
    %v1746 = vrot.slane %v1742, 3
    %v1748 = vadd.f32 %v210, %v1746
    %v1749 = vxor.u32 %v1748, 2147483648
    %v1750 = vmul.f32 %v1749, 1.442695
    %v1751 = vpow.pop %v1750
    %v1752 = vadd.f32 %v1751, 1.0
    %v1753 = vrcp.pop %v1752
    %v1754 = vmul.f32 1.0, %v1753
    %v1755 = vmul.f32 %v1754, 2.0
    %v1756 = vsub.f32 %v1755, 1.0
    %v1758 = vrot.slane %v1491, 7
    %v1760 = vmul.f32 %v1754, %v1758
    %1762 = vrot.lane.b32.xlu0 %v1756, 64
    %v1763 = vpop.permute.xlu0 %1762
    %v1765 = vmul.f32 %v1754, %v1763
    %1767 = vrot.lane.b32.xlu0 %v1765, 32
    %v1768 = vpop.permute.xlu0 %1767
    %v1770 = vadd.f32 %v1760, %v1768
    %v1771 = vtanh.pop %v1770
    %1773 = vrot.lane.b32.xlu0 %v1771, 64
    %v1774 = vpop.permute.xlu0 %1773
    %v1776 = vmul.f32 %v1754, %v1774
    %v1778 = vrot.slane %v1776, 5
    %1779 = vrot.lane.b32.xlu0 %v1778, 32
    %v1780 = vpop.permute.xlu0 %1779
    %v1781 = vsel %vm213, %v1780, 0
    %1783 = vmatprep.subr.mxu0 0.0
    %1784 = vmatpush1.msra.mxu0 %v117
    %1785 = vmatprep.subr.mxu0 0.0
    %1786 = vmatpush1.msra.mxu0 %v118
    %1787 = vmatprep.subr.mxu0 0.0
    %1788 = vmatpush1.msra.mxu0 %v119
    %1789 = vmatprep.subr.mxu0 0.0
    %1790 = vmatpush1.msra.mxu0 %v120
    %1791 = vmatprep.subr.mxu0 0.0
    %1792 = vmatpush1.msra.mxu0 0.0
    %1793 = vmatprep.subr.mxu0 0.0
    %1794 = vmatpush1.msra.mxu0 0.0
    %1795 = vmatprep.subr.mxu0 0.0
    %1796 = vmatpush1.msra.mxu0 0.0
    %1797 = vmatprep.subr.mxu0 0.0
    %1798 = vmatpush1.msra.mxu0 0.0
    %1799 = vmatprep.subr.mxu0 0.0
    %1800 = vmatpush1.msra.mxu0 0.0
    %1801 = vmatprep.subr.mxu0 0.0
    %1802 = vmatpush1.msra.mxu0 0.0
    %1803 = vmatprep.subr.mxu0 0.0
    %1804 = vmatpush1.msra.mxu0 0.0
    %1805 = vmatprep.subr.mxu0 0.0
    %1806 = vmatpush1.msra.mxu0 0.0
    %1807 = vmatprep.subr.mxu0 0.0
    %1808 = vmatpush1.msra.mxu0 0.0
    %1809 = vmatprep.subr.mxu0 0.0
    %1810 = vmatpush1.msra.mxu0 0.0
    %1811 = vmatprep.subr.mxu0 0.0
    %1812 = vmatpush1.msra.mxu0 0.0
    %1813 = vmatprep.subr.mxu0 0.0
    %1814 = vmatpush1.msra.mxu0 0.0
    %1815 = vmatprep.subr.mxu0 0.0
    %1816 = vmatpush1.msra.mxu0 0.0
    %1817 = vmatprep.subr.mxu0 0.0
    %1818 = vmatpush1.msra.mxu0 0.0
    %1819 = vmatprep.subr.mxu0 0.0
    %1820 = vmatpush1.msra.mxu0 0.0
    %1821 = vmatprep.subr.mxu0 0.0
    %1822 = vmatpush1.msra.mxu0 0.0
    %1823 = vmatprep.subr.mxu0 0.0
    %1824 = vmatpush1.msra.mxu0 0.0
    %1825 = vmatprep.subr.mxu0 0.0
    %1826 = vmatpush1.msra.mxu0 0.0
    %1827 = vmatprep.subr.mxu0 0.0
    %1828 = vmatpush1.msra.mxu0 0.0
    %1829 = vmatprep.subr.mxu0 0.0
    %1830 = vmatpush1.msra.mxu0 0.0
    %1831 = vmatprep.subr.mxu0 0.0
    %1832 = vmatpush1.msra.mxu0 0.0
    %1833 = vmatprep.subr.mxu0 0.0
    %1834 = vmatpush1.msra.mxu0 0.0
    %1835 = vmatprep.subr.mxu0 0.0
    %1836 = vmatpush1.msra.mxu0 0.0
    %1837 = vmatprep.subr.mxu0 0.0
    %1838 = vmatpush1.msra.mxu0 0.0
    %1839 = vmatprep.subr.mxu0 0.0
    %1840 = vmatpush1.msra.mxu0 0.0
    %1841 = vmatprep.subr.mxu0 0.0
    %1842 = vmatpush1.msra.mxu0 0.0
    %1843 = vmatprep.subr.mxu0 0.0
    %1844 = vmatpush1.msra.mxu0 0.0
    %1845 = vmatprep.subr.mxu0 0.0
    %1846 = vmatpush1.msra.mxu0 0.0
    %1847 = vmatprep.mubr.f32.mxu0 0.0
    %1848 = vmatmul.mubr.f32.gmra.mrb[0].mxu0 %v1781
    %v1849 = vpop.f32.mrb[0].mxu0
    %v1850 = vadd.f32 0.0, %v1849
    %v1851 = vpop.f32.mrb[0].mxu0
    %1852 = vdwg.mxu0
    %v1853 = vadd.f32 %v1672, %v1850
    %v1854 = vxor.u32 %v1853, 2147483648
    %v1855 = vmul.f32 %v1854, 1.442695
    %v1856 = vpow.pop %v1855
    %v1857 = vadd.f32 %v1856, 1.0
    %v1858 = vrcp.pop %v1857
    %v1859 = vmul.f32 1.0, %v1858
    %v1860 = vmul.f32 %v1859, 2.0
    %v1861 = vsub.f32 %v1860, 1.0
    %v1862 = vmul.f32 %v1859, %v1593
    %1864 = vrot.lane.b32.xlu0 %v1861, 64
    %v1865 = vpop.permute.xlu0 %1864
    %v1867 = vmul.f32 %v1859, %v1865
    %1869 = vrot.lane.b32.xlu0 %v1867, 32
    %v1870 = vpop.permute.xlu0 %1869
    %v1872 = vadd.f32 %v1862, %v1870
    %v1873 = vtanh.pop %v1872
    %1875 = vrot.lane.b32.xlu0 %v1873, 64
    %v1876 = vpop.permute.xlu0 %1875
    %v1878 = vmul.f32 %v1859, %v1876
    %1880 = vrot.lane.b32.xlu0 %v1878, 32
    %v1881 = vpop.permute.xlu0 %1880
    %v1882 = vsel %vm213, %v1881, 0
    %1884 = vmatprep.subr.mxu0 0.0
    %1885 = vmatpush1.msra.mxu0 %v121
    %1886 = vmatprep.subr.mxu0 0.0
    %1887 = vmatpush1.msra.mxu0 %v122
    %1888 = vmatprep.subr.mxu0 0.0
    %1889 = vmatpush1.msra.mxu0 %v123
    %1890 = vmatprep.subr.mxu0 0.0
    %1891 = vmatpush1.msra.mxu0 %v124
    %1892 = vmatprep.subr.mxu0 0.0
    %1893 = vmatpush1.msra.mxu0 0.0
    %1894 = vmatprep.subr.mxu0 0.0
    %1895 = vmatpush1.msra.mxu0 0.0
    %1896 = vmatprep.subr.mxu0 0.0
    %1897 = vmatpush1.msra.mxu0 0.0
    %1898 = vmatprep.subr.mxu0 0.0
    %1899 = vmatpush1.msra.mxu0 0.0
    %1900 = vmatprep.subr.mxu0 0.0
    %1901 = vmatpush1.msra.mxu0 0.0
    %1902 = vmatprep.subr.mxu0 0.0
    %1903 = vmatpush1.msra.mxu0 0.0
    %1904 = vmatprep.subr.mxu0 0.0
    %1905 = vmatpush1.msra.mxu0 0.0
    %1906 = vmatprep.subr.mxu0 0.0
    %1907 = vmatpush1.msra.mxu0 0.0
    %1908 = vmatprep.subr.mxu0 0.0
    %1909 = vmatpush1.msra.mxu0 0.0
    %1910 = vmatprep.subr.mxu0 0.0
    %1911 = vmatpush1.msra.mxu0 0.0
    %1912 = vmatprep.subr.mxu0 0.0
    %1913 = vmatpush1.msra.mxu0 0.0
    %1914 = vmatprep.subr.mxu0 0.0
    %1915 = vmatpush1.msra.mxu0 0.0
    %1916 = vmatprep.subr.mxu0 0.0
    %1917 = vmatpush1.msra.mxu0 0.0
    %1918 = vmatprep.subr.mxu0 0.0
    %1919 = vmatpush1.msra.mxu0 0.0
    %1920 = vmatprep.subr.mxu0 0.0
    %1921 = vmatpush1.msra.mxu0 0.0
    %1922 = vmatprep.subr.mxu0 0.0
    %1923 = vmatpush1.msra.mxu0 0.0
    %1924 = vmatprep.subr.mxu0 0.0
    %1925 = vmatpush1.msra.mxu0 0.0
    %1926 = vmatprep.subr.mxu0 0.0
    %1927 = vmatpush1.msra.mxu0 0.0
    %1928 = vmatprep.subr.mxu0 0.0
    %1929 = vmatpush1.msra.mxu0 0.0
    %1930 = vmatprep.subr.mxu0 0.0
    %1931 = vmatpush1.msra.mxu0 0.0
    %1932 = vmatprep.subr.mxu0 0.0
    %1933 = vmatpush1.msra.mxu0 0.0
    %1934 = vmatprep.subr.mxu0 0.0
    %1935 = vmatpush1.msra.mxu0 0.0
    %1936 = vmatprep.subr.mxu0 0.0
    %1937 = vmatpush1.msra.mxu0 0.0
    %1938 = vmatprep.subr.mxu0 0.0
    %1939 = vmatpush1.msra.mxu0 0.0
    %1940 = vmatprep.subr.mxu0 0.0
    %1941 = vmatpush1.msra.mxu0 0.0
    %1942 = vmatprep.subr.mxu0 0.0
    %1943 = vmatpush1.msra.mxu0 0.0
    %1944 = vmatprep.subr.mxu0 0.0
    %1945 = vmatpush1.msra.mxu0 0.0
    %1946 = vmatprep.subr.mxu0 0.0
    %1947 = vmatpush1.msra.mxu0 0.0
    %1948 = vmatprep.mubr.f32.mxu0 0.0
    %1949 = vmatmul.mubr.f32.gmra.mrb[0].mxu0 %v1882
    %v1950 = vpop.f32.mrb[0].mxu0
    %v1951 = vadd.f32 %v125, %v1950
    %v1952 = vpop.f32.mrb[0].mxu0
    %1953 = vdwg.mxu0
    %1954 = vmatprep.subr.mxu0 0.0
    %1955 = vmatpush1.msra.mxu0 %v113
    %1956 = vmatprep.subr.mxu0 0.0
    %1957 = vmatpush1.msra.mxu0 %v114
    %1958 = vmatprep.subr.mxu0 0.0
    %1959 = vmatpush1.msra.mxu0 %v115
    %1960 = vmatprep.subr.mxu0 0.0
    %1961 = vmatpush1.msra.mxu0 %v116
    %1962 = vmatprep.subr.mxu0 0.0
    %1963 = vmatpush1.msra.mxu0 0.0
    %1964 = vmatprep.subr.mxu0 0.0
    %1965 = vmatpush1.msra.mxu0 0.0
    %1966 = vmatprep.subr.mxu0 0.0
    %1967 = vmatpush1.msra.mxu0 0.0
    %1968 = vmatprep.subr.mxu0 0.0
    %1969 = vmatpush1.msra.mxu0 0.0
    %1970 = vmatprep.subr.mxu0 0.0
    %1971 = vmatpush1.msra.mxu0 0.0
    %1972 = vmatprep.subr.mxu0 0.0
    %1973 = vmatpush1.msra.mxu0 0.0
    %1974 = vmatprep.subr.mxu0 0.0
    %1975 = vmatpush1.msra.mxu0 0.0
    %1976 = vmatprep.subr.mxu0 0.0
    %1977 = vmatpush1.msra.mxu0 0.0
    %1978 = vmatprep.subr.mxu0 0.0
    %1979 = vmatpush1.msra.mxu0 0.0
    %1980 = vmatprep.subr.mxu0 0.0
    %1981 = vmatpush1.msra.mxu0 0.0
    %1982 = vmatprep.subr.mxu0 0.0
    %1983 = vmatpush1.msra.mxu0 0.0
    %1984 = vmatprep.subr.mxu0 0.0
    %1985 = vmatpush1.msra.mxu0 0.0
    %1986 = vmatprep.subr.mxu0 0.0
    %1987 = vmatpush1.msra.mxu0 0.0
    %1988 = vmatprep.subr.mxu0 0.0
    %1989 = vmatpush1.msra.mxu0 0.0
    %1990 = vmatprep.subr.mxu0 0.0
    %1991 = vmatpush1.msra.mxu0 0.0
    %1992 = vmatprep.subr.mxu0 0.0
    %1993 = vmatpush1.msra.mxu0 0.0
    %1994 = vmatprep.subr.mxu0 0.0
    %1995 = vmatpush1.msra.mxu0 0.0
    %1996 = vmatprep.subr.mxu0 0.0
    %1997 = vmatpush1.msra.mxu0 0.0
    %1998 = vmatprep.subr.mxu0 0.0
    %1999 = vmatpush1.msra.mxu0 0.0
    %2000 = vmatprep.subr.mxu0 0.0
    %2001 = vmatpush1.msra.mxu0 0.0
    %2002 = vmatprep.subr.mxu0 0.0
    %2003 = vmatpush1.msra.mxu0 0.0
    %2004 = vmatprep.subr.mxu0 0.0
    %2005 = vmatpush1.msra.mxu0 0.0
    %2006 = vmatprep.subr.mxu0 0.0
    %2007 = vmatpush1.msra.mxu0 0.0
    %2008 = vmatprep.subr.mxu0 0.0
    %2009 = vmatpush1.msra.mxu0 0.0
    %2010 = vmatprep.subr.mxu0 0.0
    %2011 = vmatpush1.msra.mxu0 0.0
    %2012 = vmatprep.subr.mxu0 0.0
    %2013 = vmatpush1.msra.mxu0 0.0
    %2014 = vmatprep.subr.mxu0 0.0
    %2015 = vmatpush1.msra.mxu0 0.0
    %2016 = vmatprep.subr.mxu0 0.0
    %2017 = vmatpush1.msra.mxu0 0.0
    %2018 = vmatprep.mubr.f32.mxu0 0.0
    %2019 = vmatmul.mubr.f32.gmra.mrb[0].mxu0 %v1781
    %v2020 = vpop.f32.mrb[0].mxu0
    %v2021 = vadd.f32 0.0, %v2020
    %v2022 = vpop.f32.mrb[0].mxu0
    %2023 = vdwg.mxu0
    %v2025 = vrot.slane %v2021, 2
    %v2027 = vadd.f32 %v210, %v2025
    %v2028 = vxor.u32 %v2027, 2147483648
    %v2029 = vmul.f32 %v2028, 1.442695
    %v2030 = vpow.pop %v2029
    %v2031 = vadd.f32 %v2030, 1.0
    %v2032 = vrcp.pop %v2031
    %v2033 = vmul.f32 1.0, %v2032
    %v2034 = vmul.f32 %v2033, 2.0
    %v2035 = vsub.f32 %v2034, 1.0
    %v2037 = vrot.slane %v1770, 7
    %v2039 = vmul.f32 %v2033, %v2037
    %2041 = vrot.lane.b32.xlu0 %v2035, 64
    %v2042 = vpop.permute.xlu0 %2041
    %v2044 = vmul.f32 %v2033, %v2042
    %2046 = vrot.lane.b32.xlu0 %v2044, 32
    %v2047 = vpop.permute.xlu0 %2046
    %v2049 = vadd.f32 %v2039, %v2047
    %v2050 = vtanh.pop %v2049
    %2052 = vrot.lane.b32.xlu0 %v2050, 64
    %v2053 = vpop.permute.xlu0 %2052
    %v2055 = vmul.f32 %v2033, %v2053
    %v2057 = vrot.slane %v2055, 6
    %2058 = vrot.lane.b32.xlu0 %v2057, 32
    %v2059 = vpop.permute.xlu0 %2058
    %v2060 = vsel %vm213, %v2059, 0
    %2062 = vmatprep.subr.mxu0 0.0
    %2063 = vmatpush1.msra.mxu0 %v117
    %2064 = vmatprep.subr.mxu0 0.0
    %2065 = vmatpush1.msra.mxu0 %v118
    %2066 = vmatprep.subr.mxu0 0.0
    %2067 = vmatpush1.msra.mxu0 %v119
    %2068 = vmatprep.subr.mxu0 0.0
    %2069 = vmatpush1.msra.mxu0 %v120
    %2070 = vmatprep.subr.mxu0 0.0
    %2071 = vmatpush1.msra.mxu0 0.0
    %2072 = vmatprep.subr.mxu0 0.0
    %2073 = vmatpush1.msra.mxu0 0.0
    %2074 = vmatprep.subr.mxu0 0.0
    %2075 = vmatpush1.msra.mxu0 0.0
    %2076 = vmatprep.subr.mxu0 0.0
    %2077 = vmatpush1.msra.mxu0 0.0
    %2078 = vmatprep.subr.mxu0 0.0
    %2079 = vmatpush1.msra.mxu0 0.0
    %2080 = vmatprep.subr.mxu0 0.0
    %2081 = vmatpush1.msra.mxu0 0.0
    %2082 = vmatprep.subr.mxu0 0.0
    %2083 = vmatpush1.msra.mxu0 0.0
    %2084 = vmatprep.subr.mxu0 0.0
    %2085 = vmatpush1.msra.mxu0 0.0
    %2086 = vmatprep.subr.mxu0 0.0
    %2087 = vmatpush1.msra.mxu0 0.0
    %2088 = vmatprep.subr.mxu0 0.0
    %2089 = vmatpush1.msra.mxu0 0.0
    %2090 = vmatprep.subr.mxu0 0.0
    %2091 = vmatpush1.msra.mxu0 0.0
    %2092 = vmatprep.subr.mxu0 0.0
    %2093 = vmatpush1.msra.mxu0 0.0
    %2094 = vmatprep.subr.mxu0 0.0
    %2095 = vmatpush1.msra.mxu0 0.0
    %2096 = vmatprep.subr.mxu0 0.0
    %2097 = vmatpush1.msra.mxu0 0.0
    %2098 = vmatprep.subr.mxu0 0.0
    %2099 = vmatpush1.msra.mxu0 0.0
    %2100 = vmatprep.subr.mxu0 0.0
    %2101 = vmatpush1.msra.mxu0 0.0
    %2102 = vmatprep.subr.mxu0 0.0
    %2103 = vmatpush1.msra.mxu0 0.0
    %2104 = vmatprep.subr.mxu0 0.0
    %2105 = vmatpush1.msra.mxu0 0.0
    %2106 = vmatprep.subr.mxu0 0.0
    %2107 = vmatpush1.msra.mxu0 0.0
    %2108 = vmatprep.subr.mxu0 0.0
    %2109 = vmatpush1.msra.mxu0 0.0
    %2110 = vmatprep.subr.mxu0 0.0
    %2111 = vmatpush1.msra.mxu0 0.0
    %2112 = vmatprep.subr.mxu0 0.0
    %2113 = vmatpush1.msra.mxu0 0.0
    %2114 = vmatprep.subr.mxu0 0.0
    %2115 = vmatpush1.msra.mxu0 0.0
    %2116 = vmatprep.subr.mxu0 0.0
    %2117 = vmatpush1.msra.mxu0 0.0
    %2118 = vmatprep.subr.mxu0 0.0
    %2119 = vmatpush1.msra.mxu0 0.0
    %2120 = vmatprep.subr.mxu0 0.0
    %2121 = vmatpush1.msra.mxu0 0.0
    %2122 = vmatprep.subr.mxu0 0.0
    %2123 = vmatpush1.msra.mxu0 0.0
    %2124 = vmatprep.subr.mxu0 0.0
    %2125 = vmatpush1.msra.mxu0 0.0
    %2126 = vmatprep.mubr.f32.mxu0 0.0
    %2127 = vmatmul.mubr.f32.gmra.mrb[0].mxu0 %v2060
    %v2128 = vpop.f32.mrb[0].mxu0
    %v2129 = vadd.f32 0.0, %v2128
    %v2130 = vpop.f32.mrb[0].mxu0
    %2131 = vdwg.mxu0
    %v2132 = vadd.f32 %v1951, %v2129
    %v2133 = vxor.u32 %v2132, 2147483648
    %v2134 = vmul.f32 %v2133, 1.442695
    %v2135 = vpow.pop %v2134
    %v2136 = vadd.f32 %v2135, 1.0
    %v2137 = vrcp.pop %v2136
    %v2138 = vmul.f32 1.0, %v2137
    %v2139 = vmul.f32 %v2138, 2.0
    %v2140 = vsub.f32 %v2139, 1.0
    %v2141 = vmul.f32 %v2138, %v1872
    %2143 = vrot.lane.b32.xlu0 %v2140, 64
    %v2144 = vpop.permute.xlu0 %2143
    %v2146 = vmul.f32 %v2138, %v2144
    %2148 = vrot.lane.b32.xlu0 %v2146, 32
    %v2149 = vpop.permute.xlu0 %2148
    %v2151 = vadd.f32 %v2141, %v2149
    %v2152 = vtanh.pop %v2151
    %2154 = vrot.lane.b32.xlu0 %v2152, 64
    %v2155 = vpop.permute.xlu0 %2154
    %v2157 = vmul.f32 %v2138, %v2155
    %2159 = vrot.lane.b32.xlu0 %v2157, 32
    %v2160 = vpop.permute.xlu0 %2159
    %v2161 = vsel %vm213, %v2160, 0
    %2163 = vmatprep.subr.mxu0 0.0
    %2164 = vmatpush1.msra.mxu0 %v121
    %2165 = vmatprep.subr.mxu0 0.0
    %2166 = vmatpush1.msra.mxu0 %v122
    %2167 = vmatprep.subr.mxu0 0.0
    %2168 = vmatpush1.msra.mxu0 %v123
    %2169 = vmatprep.subr.mxu0 0.0
    %2170 = vmatpush1.msra.mxu0 %v124
    %2171 = vmatprep.subr.mxu0 0.0
    %2172 = vmatpush1.msra.mxu0 0.0
    %2173 = vmatprep.subr.mxu0 0.0
    %2174 = vmatpush1.msra.mxu0 0.0
    %2175 = vmatprep.subr.mxu0 0.0
    %2176 = vmatpush1.msra.mxu0 0.0
    %2177 = vmatprep.subr.mxu0 0.0
    %2178 = vmatpush1.msra.mxu0 0.0
    %2179 = vmatprep.subr.mxu0 0.0
    %2180 = vmatpush1.msra.mxu0 0.0
    %2181 = vmatprep.subr.mxu0 0.0
    %2182 = vmatpush1.msra.mxu0 0.0
    %2183 = vmatprep.subr.mxu0 0.0
    %2184 = vmatpush1.msra.mxu0 0.0
    %2185 = vmatprep.subr.mxu0 0.0
    %2186 = vmatpush1.msra.mxu0 0.0
    %2187 = vmatprep.subr.mxu0 0.0
    %2188 = vmatpush1.msra.mxu0 0.0
    %2189 = vmatprep.subr.mxu0 0.0
    %2190 = vmatpush1.msra.mxu0 0.0
    %2191 = vmatprep.subr.mxu0 0.0
    %2192 = vmatpush1.msra.mxu0 0.0
    %2193 = vmatprep.subr.mxu0 0.0
    %2194 = vmatpush1.msra.mxu0 0.0
    %2195 = vmatprep.subr.mxu0 0.0
    %2196 = vmatpush1.msra.mxu0 0.0
    %2197 = vmatprep.subr.mxu0 0.0
    %2198 = vmatpush1.msra.mxu0 0.0
    %2199 = vmatprep.subr.mxu0 0.0
    %2200 = vmatpush1.msra.mxu0 0.0
    %2201 = vmatprep.subr.mxu0 0.0
    %2202 = vmatpush1.msra.mxu0 0.0
    %2203 = vmatprep.subr.mxu0 0.0
    %2204 = vmatpush1.msra.mxu0 0.0
    %2205 = vmatprep.subr.mxu0 0.0
    %2206 = vmatpush1.msra.mxu0 0.0
    %2207 = vmatprep.subr.mxu0 0.0
    %2208 = vmatpush1.msra.mxu0 0.0
    %2209 = vmatprep.subr.mxu0 0.0
    %2210 = vmatpush1.msra.mxu0 0.0
    %2211 = vmatprep.subr.mxu0 0.0
    %2212 = vmatpush1.msra.mxu0 0.0
    %2213 = vmatprep.subr.mxu0 0.0
    %2214 = vmatpush1.msra.mxu0 0.0
    %2215 = vmatprep.subr.mxu0 0.0
    %2216 = vmatpush1.msra.mxu0 0.0
    %2217 = vmatprep.subr.mxu0 0.0
    %2218 = vmatpush1.msra.mxu0 0.0
    %2219 = vmatprep.subr.mxu0 0.0
    %2220 = vmatpush1.msra.mxu0 0.0
    %2221 = vmatprep.subr.mxu0 0.0
    %2222 = vmatpush1.msra.mxu0 0.0
    %2223 = vmatprep.subr.mxu0 0.0
    %2224 = vmatpush1.msra.mxu0 0.0
    %2225 = vmatprep.subr.mxu0 0.0
    %2226 = vmatpush1.msra.mxu0 0.0
    %2227 = vmatprep.mubr.f32.mxu0 0.0
    %2228 = vmatmul.mubr.f32.gmra.mrb[0].mxu0 %v2161
    %v2229 = vpop.f32.mrb[0].mxu0
    %v2230 = vadd.f32 %v125, %v2229
    %v2231 = vpop.f32.mrb[0].mxu0
    %2232 = vdwg.mxu0
    %2233 = vmatprep.subr.mxu0 0.0
    %2234 = vmatpush1.msra.mxu0 %v113
    %2235 = vmatprep.subr.mxu0 0.0
    %2236 = vmatpush1.msra.mxu0 %v114
    %2237 = vmatprep.subr.mxu0 0.0
    %2238 = vmatpush1.msra.mxu0 %v115
    %2239 = vmatprep.subr.mxu0 0.0
    %2240 = vmatpush1.msra.mxu0 %v116
    %2241 = vmatprep.subr.mxu0 0.0
    %2242 = vmatpush1.msra.mxu0 0.0
    %2243 = vmatprep.subr.mxu0 0.0
    %2244 = vmatpush1.msra.mxu0 0.0
    %2245 = vmatprep.subr.mxu0 0.0
    %2246 = vmatpush1.msra.mxu0 0.0
    %2247 = vmatprep.subr.mxu0 0.0
    %2248 = vmatpush1.msra.mxu0 0.0
    %2249 = vmatprep.subr.mxu0 0.0
    %2250 = vmatpush1.msra.mxu0 0.0
    %2251 = vmatprep.subr.mxu0 0.0
    %2252 = vmatpush1.msra.mxu0 0.0
    %2253 = vmatprep.subr.mxu0 0.0
    %2254 = vmatpush1.msra.mxu0 0.0
    %2255 = vmatprep.subr.mxu0 0.0
    %2256 = vmatpush1.msra.mxu0 0.0
    %2257 = vmatprep.subr.mxu0 0.0
    %2258 = vmatpush1.msra.mxu0 0.0
    %2259 = vmatprep.subr.mxu0 0.0
    %2260 = vmatpush1.msra.mxu0 0.0
    %2261 = vmatprep.subr.mxu0 0.0
    %2262 = vmatpush1.msra.mxu0 0.0
    %2263 = vmatprep.subr.mxu0 0.0
    %2264 = vmatpush1.msra.mxu0 0.0
    %2265 = vmatprep.subr.mxu0 0.0
    %2266 = vmatpush1.msra.mxu0 0.0
    %2267 = vmatprep.subr.mxu0 0.0
    %2268 = vmatpush1.msra.mxu0 0.0
    %2269 = vmatprep.subr.mxu0 0.0
    %2270 = vmatpush1.msra.mxu0 0.0
    %2271 = vmatprep.subr.mxu0 0.0
    %2272 = vmatpush1.msra.mxu0 0.0
    %2273 = vmatprep.subr.mxu0 0.0
    %2274 = vmatpush1.msra.mxu0 0.0
    %2275 = vmatprep.subr.mxu0 0.0
    %2276 = vmatpush1.msra.mxu0 0.0
    %2277 = vmatprep.subr.mxu0 0.0
    %2278 = vmatpush1.msra.mxu0 0.0
    %2279 = vmatprep.subr.mxu0 0.0
    %2280 = vmatpush1.msra.mxu0 0.0
    %2281 = vmatprep.subr.mxu0 0.0
    %2282 = vmatpush1.msra.mxu0 0.0
    %2283 = vmatprep.subr.mxu0 0.0
    %2284 = vmatpush1.msra.mxu0 0.0
    %2285 = vmatprep.subr.mxu0 0.0
    %2286 = vmatpush1.msra.mxu0 0.0
    %2287 = vmatprep.subr.mxu0 0.0
    %2288 = vmatpush1.msra.mxu0 0.0
    %2289 = vmatprep.subr.mxu0 0.0
    %2290 = vmatpush1.msra.mxu0 0.0
    %2291 = vmatprep.subr.mxu0 0.0
    %2292 = vmatpush1.msra.mxu0 0.0
    %2293 = vmatprep.subr.mxu0 0.0
    %2294 = vmatpush1.msra.mxu0 0.0
    %2295 = vmatprep.subr.mxu0 0.0
    %2296 = vmatpush1.msra.mxu0 0.0
    %2297 = vmatprep.mubr.f32.mxu0 0.0
    %2298 = vmatmul.mubr.f32.gmra.mrb[0].mxu0 %v2060
    %v2299 = vpop.f32.mrb[0].mxu0
    %v2300 = vadd.f32 0.0, %v2299
    %v2301 = vpop.f32.mrb[0].mxu0
    %2302 = vdwg.mxu0
    %v2304 = vrot.slane %v2300, 1
    %v2306 = vadd.f32 %v210, %v2304
    %v2307 = vxor.u32 %v2306, 2147483648
    %v2308 = vmul.f32 %v2307, 1.442695
    %v2309 = vpow.pop %v2308
    %v2310 = vadd.f32 %v2309, 1.0
    %v2311 = vrcp.pop %v2310
    %v2312 = vmul.f32 1.0, %v2311
    %v2313 = vmul.f32 %v2312, 2.0
    %v2314 = vsub.f32 %v2313, 1.0
    %v2316 = vrot.slane %v2049, 7
    %v2318 = vmul.f32 %v2312, %v2316
    %2320 = vrot.lane.b32.xlu0 %v2314, 64
    %v2321 = vpop.permute.xlu0 %2320
    %v2323 = vmul.f32 %v2312, %v2321
    %2325 = vrot.lane.b32.xlu0 %v2323, 32
    %v2326 = vpop.permute.xlu0 %2325
    %v2328 = vadd.f32 %v2318, %v2326
    %v2329 = vtanh.pop %v2328
    %2331 = vrot.lane.b32.xlu0 %v2329, 64
    %v2332 = vpop.permute.xlu0 %2331
    %v2334 = vmul.f32 %v2312, %v2332
    %v2336 = vrot.slane %v2334, 7
    %2337 = vrot.lane.b32.xlu0 %v2336, 32
    %v2338 = vpop.permute.xlu0 %2337
    %v2339 = vsel %vm213, %v2338, 0
    %2341 = vmatprep.subr.mxu0 0.0
    %2342 = vmatpush1.msra.mxu0 %v117
    %2343 = vmatprep.subr.mxu0 0.0
    %2344 = vmatpush1.msra.mxu0 %v118
    %2345 = vmatprep.subr.mxu0 0.0
    %2346 = vmatpush1.msra.mxu0 %v119
    %2347 = vmatprep.subr.mxu0 0.0
    %2348 = vmatpush1.msra.mxu0 %v120
    %2349 = vmatprep.subr.mxu0 0.0
    %2350 = vmatpush1.msra.mxu0 0.0
    %2351 = vmatprep.subr.mxu0 0.0
    %2352 = vmatpush1.msra.mxu0 0.0
    %2353 = vmatprep.subr.mxu0 0.0
    %2354 = vmatpush1.msra.mxu0 0.0
    %2355 = vmatprep.subr.mxu0 0.0
    %2356 = vmatpush1.msra.mxu0 0.0
    %2357 = vmatprep.subr.mxu0 0.0
    %2358 = vmatpush1.msra.mxu0 0.0
    %2359 = vmatprep.subr.mxu0 0.0
    %2360 = vmatpush1.msra.mxu0 0.0
    %2361 = vmatprep.subr.mxu0 0.0
    %2362 = vmatpush1.msra.mxu0 0.0
    %2363 = vmatprep.subr.mxu0 0.0
    %2364 = vmatpush1.msra.mxu0 0.0
    %2365 = vmatprep.subr.mxu0 0.0
    %2366 = vmatpush1.msra.mxu0 0.0
    %2367 = vmatprep.subr.mxu0 0.0
    %2368 = vmatpush1.msra.mxu0 0.0
    %2369 = vmatprep.subr.mxu0 0.0
    %2370 = vmatpush1.msra.mxu0 0.0
    %2371 = vmatprep.subr.mxu0 0.0
    %2372 = vmatpush1.msra.mxu0 0.0
    %2373 = vmatprep.subr.mxu0 0.0
    %2374 = vmatpush1.msra.mxu0 0.0
    %2375 = vmatprep.subr.mxu0 0.0
    %2376 = vmatpush1.msra.mxu0 0.0
    %2377 = vmatprep.subr.mxu0 0.0
    %2378 = vmatpush1.msra.mxu0 0.0
    %2379 = vmatprep.subr.mxu0 0.0
    %2380 = vmatpush1.msra.mxu0 0.0
    %2381 = vmatprep.subr.mxu0 0.0
    %2382 = vmatpush1.msra.mxu0 0.0
    %2383 = vmatprep.subr.mxu0 0.0
    %2384 = vmatpush1.msra.mxu0 0.0
    %2385 = vmatprep.subr.mxu0 0.0
    %2386 = vmatpush1.msra.mxu0 0.0
    %2387 = vmatprep.subr.mxu0 0.0
    %2388 = vmatpush1.msra.mxu0 0.0
    %2389 = vmatprep.subr.mxu0 0.0
    %2390 = vmatpush1.msra.mxu0 0.0
    %2391 = vmatprep.subr.mxu0 0.0
    %2392 = vmatpush1.msra.mxu0 0.0
    %2393 = vmatprep.subr.mxu0 0.0
    %2394 = vmatpush1.msra.mxu0 0.0
    %2395 = vmatprep.subr.mxu0 0.0
    %2396 = vmatpush1.msra.mxu0 0.0
    %2397 = vmatprep.subr.mxu0 0.0
    %2398 = vmatpush1.msra.mxu0 0.0
    %2399 = vmatprep.subr.mxu0 0.0
    %2400 = vmatpush1.msra.mxu0 0.0
    %2401 = vmatprep.subr.mxu0 0.0
    %2402 = vmatpush1.msra.mxu0 0.0
    %2403 = vmatprep.subr.mxu0 0.0
    %2404 = vmatpush1.msra.mxu0 0.0
    %2405 = vmatprep.mubr.f32.mxu0 0.0
    %2406 = vmatmul.mubr.f32.gmra.mrb[0].mxu0 %v2339
    %v2407 = vpop.f32.mrb[0].mxu0
    %v2408 = vadd.f32 0.0, %v2407
    %v2409 = vpop.f32.mrb[0].mxu0
    %2410 = vdwg.mxu0
    %v2411 = vadd.f32 %v2230, %v2408
    %v2412 = vxor.u32 %v2411, 2147483648
    %v2413 = vmul.f32 %v2412, 1.442695
    %v2414 = vpow.pop %v2413
    %v2415 = vadd.f32 %v2414, 1.0
    %v2416 = vrcp.pop %v2415
    %v2417 = vmul.f32 1.0, %v2416
    %v2418 = vmul.f32 %v2417, 2.0
    %v2419 = vsub.f32 %v2418, 1.0
    %v2420 = vmul.f32 %v2417, %v2151
    %2422 = vrot.lane.b32.xlu0 %v2419, 64
    %v2423 = vpop.permute.xlu0 %2422
    %v2425 = vmul.f32 %v2417, %v2423
    %2427 = vrot.lane.b32.xlu0 %v2425, 32
    %v2428 = vpop.permute.xlu0 %2427
    %v2430 = vadd.f32 %v2420, %v2428
    %v2431 = vtanh.pop %v2430
    %2433 = vrot.lane.b32.xlu0 %v2431, 64
    %v2434 = vpop.permute.xlu0 %2433
    %v2436 = vmul.f32 %v2417, %v2434
    %v2437 = vld [vmem:[%s7] sm:$0xff]
    %v2438 = vld [vmem:[%s7 + $0x8] sm:$0xff]
    %v2439 = vld [vmem:[%s7 + $0x10] sm:$0xff]
    %v2440 = vld [vmem:[%s7 + $0x18] sm:$0xff]
    %v2441 = vld [vmem:[%s8] sm:$0x1]
    %2443 = vrot.lane.b32.xlu0 %v2436, 32
    %v2444 = vpop.permute.xlu0 %2443
    %v2445 = vsel %vm213, %v2444, 0
    %2447 = vmatprep.subr.mxu0 0.0
    %2448 = vmatpush1.msra.mxu0 %v2437
    %2449 = vmatprep.subr.mxu0 0.0
    %2450 = vmatpush1.msra.mxu0 %v2438
    %2451 = vmatprep.subr.mxu0 0.0
    %2452 = vmatpush1.msra.mxu0 %v2439
    %2453 = vmatprep.subr.mxu0 0.0
    %2454 = vmatpush1.msra.mxu0 %v2440
    %2455 = vmatprep.subr.mxu0 0.0
    %2456 = vmatpush1.msra.mxu0 0.0
    %2457 = vmatprep.subr.mxu0 0.0
    %2458 = vmatpush1.msra.mxu0 0.0
    %2459 = vmatprep.subr.mxu0 0.0
    %2460 = vmatpush1.msra.mxu0 0.0
    %2461 = vmatprep.subr.mxu0 0.0
    %2462 = vmatpush1.msra.mxu0 0.0
    %2463 = vmatprep.subr.mxu0 0.0
    %2464 = vmatpush1.msra.mxu0 0.0
    %2465 = vmatprep.subr.mxu0 0.0
    %2466 = vmatpush1.msra.mxu0 0.0
    %2467 = vmatprep.subr.mxu0 0.0
    %2468 = vmatpush1.msra.mxu0 0.0
    %2469 = vmatprep.subr.mxu0 0.0
    %2470 = vmatpush1.msra.mxu0 0.0
    %2471 = vmatprep.subr.mxu0 0.0
    %2472 = vmatpush1.msra.mxu0 0.0
    %2473 = vmatprep.subr.mxu0 0.0
    %2474 = vmatpush1.msra.mxu0 0.0
    %2475 = vmatprep.subr.mxu0 0.0
    %2476 = vmatpush1.msra.mxu0 0.0
    %2477 = vmatprep.subr.mxu0 0.0
    %2478 = vmatpush1.msra.mxu0 0.0
    %2479 = vmatprep.subr.mxu0 0.0
    %2480 = vmatpush1.msra.mxu0 0.0
    %2481 = vmatprep.subr.mxu0 0.0
    %2482 = vmatpush1.msra.mxu0 0.0
    %2483 = vmatprep.subr.mxu0 0.0
    %2484 = vmatpush1.msra.mxu0 0.0
    %2485 = vmatprep.subr.mxu0 0.0
    %2486 = vmatpush1.msra.mxu0 0.0
    %2487 = vmatprep.subr.mxu0 0.0
    %2488 = vmatpush1.msra.mxu0 0.0
    %2489 = vmatprep.subr.mxu0 0.0
    %2490 = vmatpush1.msra.mxu0 0.0
    %2491 = vmatprep.subr.mxu0 0.0
    %2492 = vmatpush1.msra.mxu0 0.0
    %2493 = vmatprep.subr.mxu0 0.0
    %2494 = vmatpush1.msra.mxu0 0.0
    %2495 = vmatprep.subr.mxu0 0.0
    %2496 = vmatpush1.msra.mxu0 0.0
    %2497 = vmatprep.subr.mxu0 0.0
    %2498 = vmatpush1.msra.mxu0 0.0
    %2499 = vmatprep.subr.mxu0 0.0
    %2500 = vmatpush1.msra.mxu0 0.0
    %2501 = vmatprep.subr.mxu0 0.0
    %2502 = vmatpush1.msra.mxu0 0.0
    %2503 = vmatprep.subr.mxu0 0.0
    %2504 = vmatpush1.msra.mxu0 0.0
    %2505 = vmatprep.subr.mxu0 0.0
    %2506 = vmatpush1.msra.mxu0 0.0
    %2507 = vmatprep.subr.mxu0 0.0
    %2508 = vmatpush1.msra.mxu0 0.0
    %2509 = vmatprep.subr.mxu0 0.0
    %2510 = vmatpush1.msra.mxu0 0.0
    %2511 = vmatprep.mubr.f32.mxu0 0.0
    %2512 = vmatmul.mubr.f32.gmra.mrb[0].mxu0 %v2445
    %v2513 = vpop.f32.mrb[0].mxu0
    %v2514 = vadd.f32 %v2441, %v2513
    %v2515 = vpop.f32.mrb[0].mxu0
    %2516 = vdwg.mxu0
    %vm2517 = vcmp.gt.f32.partialorder %v2514, 20.0
    %v2518 = vmin.f32 %v2514, 20.0
    %v2519 = vmul.f32 %v2518, 1.442695
    %v2520 = vpow.pop %v2519
    %v2521 = vadd.f32 %v2520, 1.0
    %v2522 = vlog2.pop %v2521
    %v2523 = vmul.f32 %v2522, 0.6931472
    %v2524 = vmul.f32 -0.5, %v2520
    %v2525 = vadd.f32 %v2524, 1.0
    %v2526 = vmul.f32 %v2525, %v2520
    %v2527 = vand.u32 2147483647, %v2520
    %vm2528 = vcmp.lt.f32.partialorder %v2527, 0.0004427343
    %v2529 = vsel %vm2528, %v2526, %v2523
    %v2530 = vsel %vm2517, %v2514, %v2529
    %v2531 = vld [vmem:[#allocation8] sm:$0xff]
    %v2532 = vld [vmem:[#allocation8 + $0x8] sm:$0xff]
    %v2533 = vld [vmem:[#allocation8 + $0x10] sm:$0xff]
    %v2534 = vld [vmem:[#allocation8 + $0x18] sm:$0xff]
    %v2535 = vld [vmem:[#allocation8 + $0x20] sm:$0xff]
    %v2536 = vld [vmem:[#allocation8 + $0x28] sm:$0xff]
    %v2537 = vld [vmem:[#allocation8 + $0x30] sm:$0xff]
    %v2538 = vld [vmem:[#allocation8 + $0x38] sm:$0xff]
    %v2539 = vld [vmem:[#allocation8 + $0x40] sm:$0xff]
    %v2540 = vld [vmem:[#allocation8 + $0x48] sm:$0xff]
    %v2541 = vld [vmem:[#allocation8 + $0x50] sm:$0xff]
    %v2542 = vld [vmem:[#allocation8 + $0x58] sm:$0xff]
    %v2543 = vld [vmem:[#allocation8 + $0x60] sm:$0xff]
    %v2544 = vld [vmem:[#allocation8 + $0x68] sm:$0xff]
    %v2545 = vld [vmem:[#allocation8 + $0x70] sm:$0xff]
    %v2546 = vld [vmem:[#allocation8 + $0x78] sm:$0xff]
    %v2547 = vld [vmem:[%s10] sm:$0x1]
    %2548 = vmatprep.subr.mxu0 0.0
    %2549 = vmatpush1.msra.mxu0 %v2531
    %2550 = vmatprep.subr.mxu0 0.0
    %2551 = vmatpush1.msra.mxu0 %v2532
    %2552 = vmatprep.subr.mxu0 0.0
    %2553 = vmatpush1.msra.mxu0 %v2533
    %2554 = vmatprep.subr.mxu0 0.0
    %2555 = vmatpush1.msra.mxu0 %v2534
    %2556 = vmatprep.subr.mxu0 0.0
    %2557 = vmatpush1.msra.mxu0 %v2535
    %2558 = vmatprep.subr.mxu0 0.0
    %2559 = vmatpush1.msra.mxu0 %v2536
    %2560 = vmatprep.subr.mxu0 0.0
    %2561 = vmatpush1.msra.mxu0 %v2537
    %2562 = vmatprep.subr.mxu0 0.0
    %2563 = vmatpush1.msra.mxu0 %v2538
    %2564 = vmatprep.subr.mxu0 0.0
    %2565 = vmatpush1.msra.mxu0 %v2539
    %2566 = vmatprep.subr.mxu0 0.0
    %2567 = vmatpush1.msra.mxu0 %v2540
    %2568 = vmatprep.subr.mxu0 0.0
    %2569 = vmatpush1.msra.mxu0 %v2541
    %2570 = vmatprep.subr.mxu0 0.0
    %2571 = vmatpush1.msra.mxu0 %v2542
    %2572 = vmatprep.subr.mxu0 0.0
    %2573 = vmatpush1.msra.mxu0 %v2543
    %2574 = vmatprep.subr.mxu0 0.0
    %2575 = vmatpush1.msra.mxu0 %v2544
    %2576 = vmatprep.subr.mxu0 0.0
    %2577 = vmatpush1.msra.mxu0 %v2545
    %2578 = vmatprep.subr.mxu0 0.0
    %2579 = vmatpush1.msra.mxu0 %v2546
    %2580 = vmatprep.subr.mxu0 0.0
    %2581 = vmatpush1.msra.mxu0 0.0
    %2582 = vmatprep.subr.mxu0 0.0
    %2583 = vmatpush1.msra.mxu0 0.0
    %2584 = vmatprep.subr.mxu0 0.0
    %2585 = vmatpush1.msra.mxu0 0.0
    %2586 = vmatprep.subr.mxu0 0.0
    %2587 = vmatpush1.msra.mxu0 0.0
    %2588 = vmatprep.subr.mxu0 0.0
    %2589 = vmatpush1.msra.mxu0 0.0
    %2590 = vmatprep.subr.mxu0 0.0
    %2591 = vmatpush1.msra.mxu0 0.0
    %2592 = vmatprep.subr.mxu0 0.0
    %2593 = vmatpush1.msra.mxu0 0.0
    %2594 = vmatprep.subr.mxu0 0.0
    %2595 = vmatpush1.msra.mxu0 0.0
    %2596 = vmatprep.subr.mxu0 0.0
    %2597 = vmatpush1.msra.mxu0 0.0
    %2598 = vmatprep.subr.mxu0 0.0
    %2599 = vmatpush1.msra.mxu0 0.0
    %2600 = vmatprep.subr.mxu0 0.0
    %2601 = vmatpush1.msra.mxu0 0.0
    %2602 = vmatprep.subr.mxu0 0.0
    %2603 = vmatpush1.msra.mxu0 0.0
    %2604 = vmatprep.subr.mxu0 0.0
    %2605 = vmatpush1.msra.mxu0 0.0
    %2606 = vmatprep.subr.mxu0 0.0
    %2607 = vmatpush1.msra.mxu0 0.0
    %2608 = vmatprep.subr.mxu0 0.0
    %2609 = vmatpush1.msra.mxu0 0.0
    %2610 = vmatprep.subr.mxu0 0.0
    %2611 = vmatpush1.msra.mxu0 0.0
    %2612 = vmatprep.mubr.f32.mxu0 0.0
    %2613 = vmatmul.mubr.f32.gmra.mrb[0].mxu0 %v2530
    %v2614 = vpop.f32.mrb[0].mxu0
    %v2615 = vadd.f32 %v2547, %v2614
    %v2616 = vpop.f32.mrb[0].mxu0
    %2617 = vdwg.mxu0
    %vm2618 = vcmp.gt.f32.partialorder %v2615, 20.0
    %v2619 = vmin.f32 %v2615, 20.0
    %v2620 = vmul.f32 %v2619, 1.442695
    %v2621 = vpow.pop %v2620
    %v2622 = vadd.f32 %v2621, 1.0
    %v2623 = vlog2.pop %v2622
    %v2624 = vmul.f32 %v2623, 0.6931472
    %v2625 = vmul.f32 -0.5, %v2621
    %v2626 = vadd.f32 %v2625, 1.0
    %v2627 = vmul.f32 %v2626, %v2621
    %v2628 = vand.u32 2147483647, %v2621
    %vm2629 = vcmp.lt.f32.partialorder %v2628, 0.0004427343
    %v2630 = vsel %vm2629, %v2627, %v2624
    %v2631 = vsel %vm2618, %v2615, %v2630
    %v2632 = vld [vmem:[#allocation10] sm:$0xff]
    %v2633 = vld [vmem:[#allocation10 + $0x8] sm:$0xff]
    %v2634 = vld [vmem:[#allocation10 + $0x10] sm:$0xff]
    %v2635 = vld [vmem:[#allocation10 + $0x18] sm:$0xff]
    %v2636 = vld [vmem:[#allocation10 + $0x20] sm:$0xff]
    %v2637 = vld [vmem:[#allocation10 + $0x28] sm:$0xff]
    %v2638 = vld [vmem:[#allocation10 + $0x30] sm:$0xff]
    %v2639 = vld [vmem:[#allocation10 + $0x38] sm:$0xff]
    %v2640 = vld [vmem:[#allocation10 + $0x40] sm:$0xff]
    %v2641 = vld [vmem:[#allocation10 + $0x48] sm:$0xff]
    %v2642 = vld [vmem:[#allocation10 + $0x50] sm:$0xff]
    %v2643 = vld [vmem:[#allocation10 + $0x58] sm:$0xff]
    %v2644 = vld [vmem:[#allocation10 + $0x60] sm:$0xff]
    %v2645 = vld [vmem:[#allocation10 + $0x68] sm:$0xff]
    %v2646 = vld [vmem:[#allocation10 + $0x70] sm:$0xff]
    %v2647 = vld [vmem:[#allocation10 + $0x78] sm:$0xff]
    %v2648 = vld [vmem:[%s12] sm:$0x1]
    %2649 = vmatprep.subr.mxu0 0.0
    %2650 = vmatpush1.msra.mxu0 %v2632
    %2651 = vmatprep.subr.mxu0 0.0
    %2652 = vmatpush1.msra.mxu0 %v2633
    %2653 = vmatprep.subr.mxu0 0.0
    %2654 = vmatpush1.msra.mxu0 %v2634
    %2655 = vmatprep.subr.mxu0 0.0
    %2656 = vmatpush1.msra.mxu0 %v2635
    %2657 = vmatprep.subr.mxu0 0.0
    %2658 = vmatpush1.msra.mxu0 %v2636
    %2659 = vmatprep.subr.mxu0 0.0
    %2660 = vmatpush1.msra.mxu0 %v2637
    %2661 = vmatprep.subr.mxu0 0.0
    %2662 = vmatpush1.msra.mxu0 %v2638
    %2663 = vmatprep.subr.mxu0 0.0
    %2664 = vmatpush1.msra.mxu0 %v2639
    %2665 = vmatprep.subr.mxu0 0.0
    %2666 = vmatpush1.msra.mxu0 %v2640
    %2667 = vmatprep.subr.mxu0 0.0
    %2668 = vmatpush1.msra.mxu0 %v2641
    %2669 = vmatprep.subr.mxu0 0.0
    %2670 = vmatpush1.msra.mxu0 %v2642
    %2671 = vmatprep.subr.mxu0 0.0
    %2672 = vmatpush1.msra.mxu0 %v2643
    %2673 = vmatprep.subr.mxu0 0.0
    %2674 = vmatpush1.msra.mxu0 %v2644
    %2675 = vmatprep.subr.mxu0 0.0
    %2676 = vmatpush1.msra.mxu0 %v2645
    %2677 = vmatprep.subr.mxu0 0.0
    %2678 = vmatpush1.msra.mxu0 %v2646
    %2679 = vmatprep.subr.mxu0 0.0
    %2680 = vmatpush1.msra.mxu0 %v2647
    %2681 = vmatprep.subr.mxu0 0.0
    %2682 = vmatpush1.msra.mxu0 0.0
    %2683 = vmatprep.subr.mxu0 0.0
    %2684 = vmatpush1.msra.mxu0 0.0
    %2685 = vmatprep.subr.mxu0 0.0
    %2686 = vmatpush1.msra.mxu0 0.0
    %2687 = vmatprep.subr.mxu0 0.0
    %2688 = vmatpush1.msra.mxu0 0.0
    %2689 = vmatprep.subr.mxu0 0.0
    %2690 = vmatpush1.msra.mxu0 0.0
    %2691 = vmatprep.subr.mxu0 0.0
    %2692 = vmatpush1.msra.mxu0 0.0
    %2693 = vmatprep.subr.mxu0 0.0
    %2694 = vmatpush1.msra.mxu0 0.0
    %2695 = vmatprep.subr.mxu0 0.0
    %2696 = vmatpush1.msra.mxu0 0.0
    %2697 = vmatprep.subr.mxu0 0.0
    %2698 = vmatpush1.msra.mxu0 0.0
    %2699 = vmatprep.subr.mxu0 0.0
    %2700 = vmatpush1.msra.mxu0 0.0
    %2701 = vmatprep.subr.mxu0 0.0
    %2702 = vmatpush1.msra.mxu0 0.0
    %2703 = vmatprep.subr.mxu0 0.0
    %2704 = vmatpush1.msra.mxu0 0.0
    %2705 = vmatprep.subr.mxu0 0.0
    %2706 = vmatpush1.msra.mxu0 0.0
    %2707 = vmatprep.subr.mxu0 0.0
    %2708 = vmatpush1.msra.mxu0 0.0
    %2709 = vmatprep.subr.mxu0 0.0
    %2710 = vmatpush1.msra.mxu0 0.0
    %2711 = vmatprep.subr.mxu0 0.0
    %2712 = vmatpush1.msra.mxu0 0.0
    %2713 = vmatprep.mubr.f32.mxu0 0.0
    %2714 = vmatmul.mubr.f32.gmra.mrb[0].mxu0 %v2631
    %v2715 = vpop.f32.mrb[0].mxu0
    %v2716 = vadd.f32 %v2648, %v2715
    %v2717 = vpop.f32.mrb[0].mxu0
    %2718 = vdwg.mxu0
    %2719 = vst [vmem:[#allocation11] sm:$0x1] %v2716
    // Predicated region
    $region74: #{tpu_custom_call.1} parent=1 // pred_check
      _
    $region75: #{tpu_custom_call.1} parent=1 // pred_check_branch
      %2721 = sbr.rel (0) target = $region77
    $region76: #{tpu_custom_call.1} parent=1 // pred_region
      %s2723 = ssub.s32 16, 16
      %2724 = vsyncadd [#allocation4], %s2723
      %s2726 = sshll.u32 [#allocation11], 4
      %s2727 = int_to_ptr.vmem [resolvable:$true] %s2726
      %2729 = dma.vmem_to_hbm [thread:$0]  %s2727, 16, %s13, [#allocation4]
    $region77: #{tpu_custom_call.1} parent=1 // pred_fallthru
      _
    // Predicated region
    $region78: #{tpu_custom_call.1} parent=1 // pred_check
      _
    $region79: #{tpu_custom_call.1} parent=1 // pred_check_branch
      %2731 = sbr.rel (0) target = $region81
    $region80: #{tpu_custom_call.1} parent=1 // pred_region
      %2732 = dma.done [#allocation4], 16
    $region81: #{tpu_custom_call.1} parent=1 // pred_fallthru
      _
    %2733 = vsyncpa [#allocation3], 1
    %2734 = vsyncpa [#allocation6], 1
    %2735 = vsyncpa [#allocation9], 1
    %2736 = vsyncpa [#allocation4], 1

</llo_original>
